<compile_context>
chip_gen: v7x
topology: tpu7x:2x2x1
jax: 0.10.0
libtpu: 0.0.40
codegen_flags: <defaults>
</compile_context>

<pallas_src>
import jax
import jax.numpy as jnp
from jax import lax
from jax.experimental import pallas as pl
from jax.experimental.pallas import tpu as pltpu


def _round_up(x, m):
    return ((x + m - 1) // m) * m


def trade_decoder_kernel(
        slot_emb_ref, enc_h_ref, enc_out_ref, ctx_idx_ref, addmask_ref, vmask_ref,
        emb_ref, w_ih_ref, w_hh_ref, b_ih_ref, b_hh_ref, wr_ref, br_ref, wg_ref, bg_ref,
        preds_ref, gates_ref,
        hidden_sc, hbf_sc, emb_sc):
    """One greedy decoding step for one batch block; grid = (batch_blocks, T)."""
    t = pl.program_id(1)

    rows, Hp = hidden_sc.shape               # rows = bb * ns
    bb, Sp, _ = enc_out_ref.shape
    ns = rows // bb                          # padded slots per batch element
    Vp = preds_ref.shape[-1]

    @pl.when(t == 0)
    def _init():
        h0 = enc_h_ref[...]
        hidden_sc[...] = h0
        hbf_sc[...] = h0.astype(jnp.bfloat16)
        emb_sc[...] = slot_emb_ref[...]

    x_b = emb_sc[...]                        # (rows, Hp) bf16; dropout == identity (eval)
    h = hidden_sc[...]                       # (rows, Hp) f32
    h_b = hbf_sc[...]                        # (rows, Hp) bf16

    # ---- GRUCell split into x- and h-path matmuls (no concat, no zero blocks) ----
    gi = jnp.dot(x_b, w_ih_ref[...], preferred_element_type=jnp.float32) + b_ih_ref[...]
    gh = jnp.dot(h_b, w_hh_ref[...], preferred_element_type=jnp.float32) + b_hh_ref[...]
    r = jax.nn.sigmoid(gi[:, 0:Hp] + gh[:, 0:Hp])
    z = jax.nn.sigmoid(gi[:, Hp:2 * Hp] + gh[:, Hp:2 * Hp])
    n = jnp.tanh(gi[:, 2 * Hp:3 * Hp] + r * gh[:, 2 * Hp:3 * Hp])
    h_new = (1.0 - z) * n + z * h                                       # (rows, Hp) f32
    h_bf = h_new.astype(jnp.bfloat16)

    # ---- p_vocab = softmax(h_new @ E^T): single shared (Vp,Hp) table, transposed dot ----
    logits_v = lax.dot_general(h_bf, emb_ref[...], (((1,), (1,)), ((), ())),
                               preferred_element_type=jnp.float32)      # (rows, Vp)
    logits_v = logits_v + vmask_ref[...]             # mask padded vocab columns
    logits_v = logits_v - jnp.max(logits_v, axis=-1, keepdims=True)
    ev = jnp.exp(logits_v)
    p_vocab = ev * (1.0 / jnp.sum(ev, axis=-1, keepdims=True))

    # ---- attention over per-batch encoder outputs (slots = matmul M axis) ----
    enc = enc_out_ref[...]                                              # (bb, Sp, Hp) bf16
    h3 = h_bf.reshape(bb, ns, Hp)
    scores = jnp.einsum('bnh,bsh->bns', h3, enc,
                        preferred_element_type=jnp.float32)             # (bb, ns, Sp)
    scores = scores + addmask_ref[...]               # 0 valid / -1e30 masked
    scores = scores - jnp.max(scores, axis=-1, keepdims=True)
    es = jnp.exp(scores)
    probs = es * (1.0 / jnp.sum(es, axis=-1, keepdims=True))            # (bb, ns, Sp) f32
    probs_bf = probs.astype(jnp.bfloat16)

    ctx3 = jnp.einsum('bns,bsh->bnh', probs_bf, enc,
                      preferred_element_type=jnp.float32)               # (bb, ns, Hp)
    context_vec = ctx3.reshape(rows, Hp)                                # f32

    # ---- pointer distribution: one-hot built in kernel from int32 context indices ----
    ids3 = ctx_idx_ref[...]                                             # (bb, Sp, 1) int32
    v_iota = lax.broadcasted_iota(jnp.int32, (bb, Sp, Vp), 2)
    onehot = (ids3 == v_iota).astype(jnp.bfloat16)                      # (bb, Sp, Vp) bf16
    pctx3 = jnp.einsum('bns,bsv->bnv', probs_bf, onehot,
                       preferred_element_type=jnp.float32)              # (bb, ns, Vp)
    p_context = pctx3.reshape(rows, Vp)

    # ---- p_gen = sigmoid(w_ratio . [h_new; context; x] + b): no concat, one reduce ----
    wr = wr_ref[...]                                                    # (8, Hp) f32
    pre_gen = jnp.sum(h_new * wr[0:1, :] + context_vec * wr[1:2, :] + x_b * wr[2:3, :],
                      axis=-1, keepdims=True) + br_ref[...]
    p_gen = jax.nn.sigmoid(pre_gen)                                     # (rows, 1)

    @pl.when(t == 0)
    def _gates():
        gates_ref[...] = (jnp.dot(context_vec.astype(jnp.bfloat16), wg_ref[...],
                                  preferred_element_type=jnp.float32) + bg_ref[...])

    p_final = (1.0 - p_gen) * p_context + p_gen * p_vocab               # (rows, Vp) f32
    preds_ref[0] = p_final.astype(preds_ref.dtype)

    # ---- greedy argmax -> next input embedding ----
    vidx = lax.broadcasted_iota(jnp.int32, (rows, Vp), 1)
    max_v = jnp.max(p_final, axis=-1, keepdims=True)
    amax = jnp.min(jnp.where(p_final == max_v, vidx, Vp), axis=-1, keepdims=True)
    onehot_next = (vidx == amax).astype(jnp.bfloat16)
    # TODO(synk): at production vocab sizes replace this one-hot matmul with a row gather
    #             of the embedding table (vocab-tiled, see module-level TODO).
    emb_next = jnp.dot(onehot_next, emb_ref[...], preferred_element_type=jnp.float32)
    emb_sc[...] = emb_next.astype(jnp.bfloat16)
    hidden_sc[...] = h_new
    hbf_sc[...] = h_bf


class TradeDecoderPallas:
    """Eval-mode forward of src/models/trade.py::Decoder with a Pallas hot loop."""

    def __init__(self, hidden_size, vocab_size, slots, gate_size, key,
                 max_value_len=10, batch_block=None):
        self.hidden_size = hidden_size
        self.vocab_size = vocab_size
        self.slots = slots
        self.slots_size = len(slots)
        self.gate_size = gate_size
        self.max_value_len = max_value_len
        self.batch_block = batch_block

        # slot_token2idx exactly as in the PyTorch module
        self.slot_token2idx = {}
        for s in slots:
            domain, slot = s.split('-')
            if domain not in self.slot_token2idx:
                self.slot_token2idx[domain] = len(self.slot_token2idx)
            if slot not in self.slot_token2idx:
                self.slot_token2idx[slot] = len(self.slot_token2idx)

        ks = jax.random.split(key, 10)
        s_ = 1.0 / float(jnp.sqrt(hidden_size))
        H = hidden_size
        self.embedding = jax.random.normal(ks[0], (vocab_size, H), jnp.float32)
        self.slot_embedding = 0.1 * jax.random.normal(
            ks[1], (len(self.slot_token2idx), H), jnp.float32)
        self.w_ih = jax.random.uniform(ks[2], (3 * H, H), jnp.float32, -s_, s_)
        self.w_hh = jax.random.uniform(ks[3], (3 * H, H), jnp.float32, -s_, s_)
        self.b_ih = jax.random.uniform(ks[4], (3 * H,), jnp.float32, -s_, s_)
        self.b_hh = jax.random.uniform(ks[5], (3 * H,), jnp.float32, -s_, s_)
        self.w_ratio = jax.random.uniform(ks[6], (1, 3 * H), jnp.float32, -s_, s_)
        self.b_ratio = jax.random.uniform(ks[7], (1,), jnp.float32, -s_, s_)
        self.w_gate = jax.random.uniform(ks[8], (gate_size, H), jnp.float32, -s_, s_)
        self.b_gate = jax.random.uniform(ks[9], (gate_size,), jnp.float32, -s_, s_)

    def __call__(self, encoder_hidden, encoder_outputs, context_idx, context_mask,
                 target_values=None):
        # target_values unused in eval mode (no teacher forcing; dropout == identity).
        H, V, G = self.hidden_size, self.vocab_size, self.gate_size
        T = self.max_value_len
        batch, seq = context_idx.shape
        S_n = self.slots_size
        f32, bf16 = jnp.float32, jnp.bfloat16

        # lane dims -> multiples of 128, sublane dims -> multiples of 8
        Hp = _round_up(H, 128)
        Vp = _round_up(V, 128)
        Gp = _round_up(G, 128)
        Sp = _round_up(seq, 128)      # attention K dim / lane dim of scores: 128-aligned
        ns = _round_up(S_n, 8)        # padded slot count

        # ---- batch block: fill the MXU M dimension, stay inside the VMEM budget ----
        def resident_bytes(bb_):
            blk = bb_ * ns
            b = blk * Hp * (2 + 4)                       # slot-emb rows (bf16) + enc-h rows (f32)
            b += bb_ * Sp * (Hp * 2 + 4 + 4)             # enc_out (bf16) + ctx_idx + addmask
            b += Vp * 4 + Vp * Hp * 2                    # vocab mask + embedding table (bf16)
            b += 2 * Hp * 3 * Hp * 2 + 2 * 3 * Hp * 4    # GRU weights + biases
            b += 8 * Hp * 4 + 4 + Hp * Gp * 2 + Gp * 4   # w_ratio / b_ratio / w_gate / b_gate
            b += 2 * blk * Vp * 2 + 2 * blk * Gp * 4     # double-buffered output blocks
            b += blk * Hp * (4 + 2 + 2)                  # scratch: hidden f32 + 2 bf16 shadows
            # live per-step temporaries (logits/p_vocab/p_context/p_final/argmax iotas,
            # the in-kernel one-hot and the attention scores/probs)
            b += 6 * blk * Vp * 4 + bb_ * Sp * Vp * 2 + 3 * blk * Sp * 4
            return b

        try:
            vmem_cap = int(pltpu.get_tpu_info().vmem_capacity_bytes)
        except Exception:
            vmem_cap = 64 * 1024 * 1024                  # smallest per-core VMEM (v7x)
        budget = int(0.85 * vmem_cap)

        if self.batch_block is not None:
            bb = max(1, min(self.batch_block, batch))    # caller override (e.g. >=2 blocks on v7x)
        else:
            bb = max(1, min(batch, -(-256 // ns)))       # fill ~256 MXU rows (whole batch if small)
            while bb > 1 and resident_bytes(bb) > budget:
                bb = (bb + 1) // 2
        bp = _round_up(batch, bb)
        n_bb = bp // bb
        rows = bp * ns                                   # total GRU rows (row = b*ns + n)
        blk_rows = bb * ns
        vmem_limit = int(min(max(2 * resident_bytes(bb), 32 * 1024 * 1024), budget))

        # ---- slot embeddings -> per-row initial GRU input / hidden state ----
        dom_idx = jnp.array([self.slot_token2idx[s.split('-')[0]] for s in self.slots],
                            dtype=jnp.int32)
        slt_idx = jnp.array([self.slot_token2idx[s.split('-')[1]] for s in self.slots],
                            dtype=jnp.int32)
        slot_embeddings = self.slot_embedding[dom_idx] + self.slot_embedding[slt_idx]  # (S_n, H)

        slot_emb_p = jnp.zeros((ns, Hp), f32).at[:S_n, :H].set(slot_embeddings)
        slot_emb_rows = jnp.broadcast_to(slot_emb_p[None], (bp, ns, Hp)
                                         ).reshape(rows, Hp).astype(bf16)
        enc_h_p = jnp.zeros((bp, Hp), f32).at[:batch, :H].set(encoder_hidden.astype(f32))
        enc_h_rows = jnp.broadcast_to(enc_h_p[:, None, :], (bp, ns, Hp)).reshape(rows, Hp)

        # ---- per-batch encoder tensors (no slot replication, no host one-hot) ----
        enc_out_p = jnp.zeros((bp, Sp, Hp), bf16).at[:batch, :seq, :H].set(
            encoder_outputs.astype(bf16))
        ctx_idx_p = jnp.zeros((bp, Sp, 1), jnp.int32).at[:batch, :seq, 0].set(
            context_idx.astype(jnp.int32))
        ctx_mask_p = jnp.zeros((bp, Sp), f32).at[:batch, :seq].set(context_mask.astype(f32))
        addmask = ((ctx_mask_p - 1.0) * 1e30).reshape(bp, 1, Sp)
        vmask = jnp.where(jnp.arange(Vp) < V, 0.0, -1e30).astype(f32).reshape(1, Vp)

        # ---- weights: zero-padded bf16 matmul operands ----
        emb_p = jnp.zeros((Vp, Hp), f32).at[:V, :H].set(self.embedding).astype(bf16)

        wih_t, whh_t = self.w_ih.T, self.w_hh.T          # (H, 3H), gate order [r, z, n]

        def pack_gru_w(wt):
            w = jnp.zeros((Hp, 3 * Hp), f32)
            w = w.at[:H, 0:H].set(wt[:, 0:H])
            w = w.at[:H, Hp:Hp + H].set(wt[:, H:2 * H])
            w = w.at[:H, 2 * Hp:2 * Hp + H].set(wt[:, 2 * H:3 * H])
            return w.astype(bf16)

        def pack_gru_b(bvec):
            b = jnp.zeros((1, 3 * Hp), f32)
            b = b.at[0, 0:H].set(bvec[0:H])
            b = b.at[0, Hp:Hp + H].set(bvec[H:2 * H])
            b = b.at[0, 2 * Hp:2 * Hp + H].set(bvec[2 * H:3 * H])
            return b

        w_ih_f, w_hh_f = pack_gru_w(wih_t), pack_gru_w(whh_t)
        b_ih_f, b_hh_f = pack_gru_b(self.b_ih), pack_gru_b(self.b_hh)

        wr3 = jnp.zeros((8, Hp), f32)
        wr3 = wr3.at[0, :H].set(self.w_ratio[0, 0:H])            # . h_new
        wr3 = wr3.at[1, :H].set(self.w_ratio[0, H:2 * H])        # . context_vec
        wr3 = wr3.at[2, :H].set(self.w_ratio[0, 2 * H:3 * H])    # . x
        br = self.b_ratio.reshape(1, 1).astype(f32)

        wg = jnp.zeros((Hp, Gp), f32).at[:H, :G].set(self.w_gate.T).astype(bf16)
        bg = jnp.zeros((1, Gp), f32).at[0, :G].set(self.b_gate)

        in_arrays = [slot_emb_rows, enc_h_rows, enc_out_p, ctx_idx_p, addmask, vmask,
                     emb_p, w_ih_f, w_hh_f, b_ih_f, b_hh_f, wr3, br, wg, bg]

        def build_in_specs(single_buffer):
            kw = {}
            if single_buffer:
                # every input is constant across the inner T axis -> no double buffering
                kw = dict(pipeline_mode=pl.Buffered(buffer_count=1))
            return [
                pl.BlockSpec((blk_rows, Hp), lambda i, t: (i, 0), **kw),     # slot emb rows
                pl.BlockSpec((blk_rows, Hp), lambda i, t: (i, 0), **kw),     # enc hidden rows
                pl.BlockSpec((bb, Sp, Hp), lambda i, t: (i, 0, 0), **kw),    # encoder outputs
                pl.BlockSpec((bb, Sp, 1), lambda i, t: (i, 0, 0), **kw),     # context idx (i32)
                pl.BlockSpec((bb, 1, Sp), lambda i, t: (i, 0, 0), **kw),     # additive attn mask
                pl.BlockSpec((1, Vp), lambda i, t: (0, 0), **kw),            # vocab pad mask
                pl.BlockSpec((Vp, Hp), lambda i, t: (0, 0), **kw),           # embedding table
                pl.BlockSpec((Hp, 3 * Hp), lambda i, t: (0, 0), **kw),       # W_ih (fused gates)
                pl.BlockSpec((Hp, 3 * Hp), lambda i, t: (0, 0), **kw),       # W_hh (fused gates)
                pl.BlockSpec((1, 3 * Hp), lambda i, t: (0, 0), **kw),        # b_ih
                pl.BlockSpec((1, 3 * Hp), lambda i, t: (0, 0), **kw),        # b_hh
                pl.BlockSpec((8, Hp), lambda i, t: (0, 0), **kw),            # w_ratio rows
                pl.BlockSpec((1, 1), lambda i, t: (0, 0), **kw),             # b_ratio
                pl.BlockSpec((Hp, Gp), lambda i, t: (0, 0), **kw),           # w_gate
                pl.BlockSpec((1, Gp), lambda i, t: (0, 0), **kw),            # b_gate
            ]

        out_shape = (
            jax.ShapeDtypeStruct((T, rows, Vp), bf16),    # per-step p_final (bf16 writeback)
            jax.ShapeDtypeStruct((rows, Gp), f32),        # gate logits (step 0, VMEM resident)
        )
        out_specs = (
            pl.BlockSpec((1, blk_rows, Vp), lambda i, t: (t, i, 0)),
            pl.BlockSpec((blk_rows, Gp), lambda i, t: (i, 0)),
        )

        def run(single_buffer):
            return pl.pallas_call(
                trade_decoder_kernel,
                out_shape=out_shape,
                grid_spec=pltpu.PrefetchScalarGridSpec(
                    num_scalar_prefetch=0,
                    grid=(n_bb, T),
                    in_specs=build_in_specs(single_buffer),
                    out_specs=out_specs,
                    scratch_shapes=[
                        pltpu.VMEM((blk_rows, Hp), f32),     # GRU hidden carry (f32)
                        pltpu.VMEM((blk_rows, Hp), bf16),    # bf16 shadow of the hidden
                        pltpu.VMEM((blk_rows, Hp), bf16),    # current input embedding (bf16)
                    ]),
                compiler_params=pltpu.CompilerParams(
                    dimension_semantics=("parallel", "arbitrary"),
                    vmem_limit_bytes=vmem_limit),
            )(*in_arrays)

        try:
            preds, gates = run(single_buffer=True)
        except Exception:
            # Fallback for runtimes without pl.Buffered(1) support: default double
            # buffering (identical results, ~2x input VMEM footprint).
            preds, gates = run(single_buffer=False)

        # ---- glue: strip padding, match the PyTorch output convention ----
        # TODO(synk): consumers that accept the kernel-native (T, batch, slot, vocab)
        #             layout should skip this transpose (it is an extra HBM round trip).
        preds_probs = jnp.transpose(
            preds.reshape(T, bp, ns, Vp)[:, :batch, :S_n, :V], (1, 2, 0, 3)).astype(f32)
        gates_logits = gates.reshape(bp, ns, Gp)[:batch, :S_n, :G]
        return preds_probs, gates_logits


if __name__ == "__main__":
    key = jax.random.PRNGKey(0)
    batch, hidden, vocab, seq, gate = 2, 32, 32, 8, 3
    slots = ["hotel-pricerange", "hotel-area", "train-day", "restaurant-area"]

    k_param, k_h, k_out, k_idx, k_len = jax.random.split(key, 5)
    dec = TradeDecoderPallas(hidden, vocab, slots, gate, k_param, max_value_len=10)

    encoder_hidden = jax.random.normal(k_h, (batch, hidden), jnp.float32)
    encoder_outputs = jax.random.normal(k_out, (batch, seq, hidden), jnp.float32)
    context_idx = jax.random.randint(k_idx, (batch, seq), 0, vocab)
    lengths = jax.random.randint(k_len, (batch,), 3, seq + 1)
    context_mask = (jnp.arange(seq)[None, :] < lengths[:, None]).astype(jnp.float32)

    preds_probs, gates_logits = dec(encoder_hidden, encoder_outputs,
                                    context_idx, context_mask)
    jax.block_until_ready((preds_probs, gates_logits))

    assert preds_probs.shape == (batch, len(slots), 10, vocab)
    assert gates_logits.shape == (batch, len(slots), gate)
    assert bool(jnp.all(jnp.isfinite(preds_probs)))
    assert bool(jnp.all(jnp.isfinite(gates_logits)))
    # each p_final row is a convex mix of two distributions -> sums to ~1
    row_sums = jnp.sum(preds_probs, axis=-1)
    assert bool(jnp.all(jnp.abs(row_sums - 1.0) < 0.1))
    print("KERNEL_OK")
</pallas_src>

<mosaic_0001>
module attributes {stable_mosaic.version = 11 : i64} {
  func.func @trade_decoder_kernel(%arg0: i32, %arg1: i32, %arg2: memref<16x128xbf16, #tpu.memory_space<vmem>>, %arg3: memref<16x128xf32, #tpu.memory_space<vmem>>, %arg4: memref<2x128x128xbf16, #tpu.memory_space<vmem>>, %arg5: memref<2x128x1xi32, #tpu.memory_space<vmem>>, %arg6: memref<2x1x128xf32, #tpu.memory_space<vmem>>, %arg7: memref<1x128xf32, #tpu.memory_space<vmem>>, %arg8: memref<128x128xbf16, #tpu.memory_space<vmem>>, %arg9: memref<128x384xbf16, #tpu.memory_space<vmem>>, %arg10: memref<128x384xbf16, #tpu.memory_space<vmem>>, %arg11: memref<1x384xf32, #tpu.memory_space<vmem>>, %arg12: memref<1x384xf32, #tpu.memory_space<vmem>>, %arg13: memref<8x128xf32, #tpu.memory_space<vmem>>, %arg14: memref<1x1xf32, #tpu.memory_space<vmem>>, %arg15: memref<128x128xbf16, #tpu.memory_space<vmem>>, %arg16: memref<1x128xf32, #tpu.memory_space<vmem>>, %arg17: memref<1x16x128xbf16, #tpu.memory_space<vmem>>, %arg18: memref<16x128xf32, #tpu.memory_space<vmem>>, %arg19: memref<16x128xf32, #tpu.memory_space<vmem>>, %arg20: memref<16x128xbf16, #tpu.memory_space<vmem>>, %arg21: memref<16x128xbf16, #tpu.memory_space<vmem>>) attributes {dimension_semantics = [#tpu.dimension_semantics<parallel>, #tpu.dimension_semantics<arbitrary>], iteration_bounds = array<i64: 1, 10>, scalar_prefetch = 0 : i64, scratch_operands = 3 : i64, tpu.core_type = #tpu.core_type<tc>, window_params = [{pipeline_mode = #tpu.pipeline_mode<synchronous>, transform_indices = @transform_0, window_bounds = array<i64: 16, 128>}, {pipeline_mode = #tpu.pipeline_mode<synchronous>, transform_indices = @transform_1, window_bounds = array<i64: 16, 128>}, {pipeline_mode = #tpu.pipeline_mode<synchronous>, transform_indices = @transform_2, window_bounds = array<i64: 2, 128, 128>}, {pipeline_mode = #tpu.pipeline_mode<synchronous>, transform_indices = @transform_3, window_bounds = array<i64: 2, 128, 1>}, {pipeline_mode = #tpu.pipeline_mode<synchronous>, transform_indices = @transform_4, window_bounds = array<i64: 2, 1, 128>}, {pipeline_mode = #tpu.pipeline_mode<synchronous>, transform_indices = @transform_5, window_bounds = array<i64: 1, 128>}, {pipeline_mode = #tpu.pipeline_mode<synchronous>, transform_indices = @transform_6, window_bounds = array<i64: 128, 128>}, {pipeline_mode = #tpu.pipeline_mode<synchronous>, transform_indices = @transform_7, window_bounds = array<i64: 128, 384>}, {pipeline_mode = #tpu.pipeline_mode<synchronous>, transform_indices = @transform_8, window_bounds = array<i64: 128, 384>}, {pipeline_mode = #tpu.pipeline_mode<synchronous>, transform_indices = @transform_9, window_bounds = array<i64: 1, 384>}, {pipeline_mode = #tpu.pipeline_mode<synchronous>, transform_indices = @transform_10, window_bounds = array<i64: 1, 384>}, {pipeline_mode = #tpu.pipeline_mode<synchronous>, transform_indices = @transform_11, window_bounds = array<i64: 8, 128>}, {pipeline_mode = #tpu.pipeline_mode<synchronous>, transform_indices = @transform_12, window_bounds = array<i64: 1, 1>}, {pipeline_mode = #tpu.pipeline_mode<synchronous>, transform_indices = @transform_13, window_bounds = array<i64: 128, 128>}, {pipeline_mode = #tpu.pipeline_mode<synchronous>, transform_indices = @transform_14, window_bounds = array<i64: 1, 128>}, {transform_indices = @transform_15, window_bounds = array<i64: 1, 16, 128>}, {transform_indices = @transform_16, window_bounds = array<i64: 16, 128>}]} {
    %c0_i32 = arith.constant 0 : i32
    %0 = arith.cmpi eq, %arg1, %c0_i32 : i32
    %1 = arith.extui %0 : i1 to i32
    %c0_i32_0 = arith.constant 0 : i32
    %2 = arith.cmpi ne, %1, %c0_i32_0 : i32
    scf.if %2 {
      %c0_64 = arith.constant 0 : index
      %c0_65 = arith.constant 0 : index
      %145 = vector.load %arg3[%c0_64, %c0_65] : memref<16x128xf32, #tpu.memory_space<vmem>>, vector<16x128xf32>
      %c0_66 = arith.constant 0 : index
      %c0_67 = arith.constant 0 : index
      %146 = vector.load %arg19[%c0_66, %c0_67] : memref<16x128xf32, #tpu.memory_space<vmem>>, vector<16x128xf32>
      tpu.vector_store %arg19[%c0_66, %c0_67], %145 {strides = array<i32>} : memref<16x128xf32, #tpu.memory_space<vmem>>, vector<16x128xf32>,
      %147 = arith.truncf %145 : vector<16x128xf32> to vector<16x128xbf16>
      %c0_68 = arith.constant 0 : index
      %c0_69 = arith.constant 0 : index
      %148 = vector.load %arg20[%c0_68, %c0_69] : memref<16x128xbf16, #tpu.memory_space<vmem>>, vector<16x128xbf16>
      tpu.vector_store %arg20[%c0_68, %c0_69], %147 {strides = array<i32>} : memref<16x128xbf16, #tpu.memory_space<vmem>>, vector<16x128xbf16>,
      %c0_70 = arith.constant 0 : index
      %c0_71 = arith.constant 0 : index
      %149 = vector.load %arg2[%c0_70, %c0_71] : memref<16x128xbf16, #tpu.memory_space<vmem>>, vector<16x128xbf16>
      %c0_72 = arith.constant 0 : index
      %c0_73 = arith.constant 0 : index
      %150 = vector.load %arg21[%c0_72, %c0_73] : memref<16x128xbf16, #tpu.memory_space<vmem>>, vector<16x128xbf16>
      tpu.vector_store %arg21[%c0_72, %c0_73], %149 {strides = array<i32>} : memref<16x128xbf16, #tpu.memory_space<vmem>>, vector<16x128xbf16>,
    } else {
    }
    %c0 = arith.constant 0 : index
    %c0_1 = arith.constant 0 : index
    %3 = vector.load %arg21[%c0, %c0_1] : memref<16x128xbf16, #tpu.memory_space<vmem>>, vector<16x128xbf16>
    %c0_2 = arith.constant 0 : index
    %c0_3 = arith.constant 0 : index
    %4 = vector.load %arg19[%c0_2, %c0_3] : memref<16x128xf32, #tpu.memory_space<vmem>>, vector<16x128xf32>
    %c0_4 = arith.constant 0 : index
    %c0_5 = arith.constant 0 : index
    %5 = vector.load %arg20[%c0_4, %c0_5] : memref<16x128xbf16, #tpu.memory_space<vmem>>, vector<16x128xbf16>
    %c0_6 = arith.constant 0 : index
    %c0_7 = arith.constant 0 : index
    %6 = vector.load %arg9[%c0_6, %c0_7] : memref<128x384xbf16, #tpu.memory_space<vmem>>, vector<128x384xbf16>
    %cst = arith.constant dense<0.000000e+00> : vector<16x384xf32>
    %7 = tpu.matmul %3, %6, %cst {dimension_numbers = #tpu.dot_dimension_numbers<[1], [0], [0], [1], [0, 0, 1, 1], [], []>} : vector<16x128xbf16>, vector<128x384xbf16>, vector<16x384xf32> -> vector<16x384xf32>
    %c0_8 = arith.constant 0 : index
    %c0_9 = arith.constant 0 : index
    %8 = vector.load %arg11[%c0_8, %c0_9] : memref<1x384xf32, #tpu.memory_space<vmem>>, vector<1x384xf32>
    %9 = vector.broadcast %8 : vector<1x384xf32> to vector<16x384xf32>
    %10 = arith.addf %7, %9 : vector<16x384xf32>
    %c0_10 = arith.constant 0 : index
    %c0_11 = arith.constant 0 : index
    %11 = vector.load %arg10[%c0_10, %c0_11] : memref<128x384xbf16, #tpu.memory_space<vmem>>, vector<128x384xbf16>
    %cst_12 = arith.constant dense<0.000000e+00> : vector<16x384xf32>
    %12 = tpu.matmul %5, %11, %cst_12 {dimension_numbers = #tpu.dot_dimension_numbers<[1], [0], [0], [1], [0, 0, 1, 1], [], []>} : vector<16x128xbf16>, vector<128x384xbf16>, vector<16x384xf32> -> vector<16x384xf32>
    %c0_13 = arith.constant 0 : index
    %c0_14 = arith.constant 0 : index
    %13 = vector.load %arg12[%c0_13, %c0_14] : memref<1x384xf32, #tpu.memory_space<vmem>>, vector<1x384xf32>
    %14 = vector.broadcast %13 : vector<1x384xf32> to vector<16x384xf32>
    %15 = arith.addf %12, %14 : vector<16x384xf32>
    %16 = vector.extract_strided_slice %10 {offsets = [0, 0], sizes = [16, 128], strides = [1, 1]} : vector<16x384xf32> to vector<16x128xf32>
    %17 = vector.extract_strided_slice %15 {offsets = [0, 0], sizes = [16, 128], strides = [1, 1]} : vector<16x384xf32> to vector<16x128xf32>
    %18 = arith.addf %16, %17 : vector<16x128xf32>
    %19 = arith.negf %18 : vector<16x128xf32>
    %20 = math.exp %19 : vector<16x128xf32>
    %cst_15 = arith.constant 1.000000e+00 : f32
    %21 = vector.broadcast %cst_15 : f32 to vector<16x128xf32>
    %22 = arith.addf %21, %20 : vector<16x128xf32>
    %23 = arith.divf %21, %22 : vector<16x128xf32>
    %24 = vector.extract_strided_slice %10 {offsets = [0, 128], sizes = [16, 128], strides = [1, 1]} : vector<16x384xf32> to vector<16x128xf32>
    %25 = vector.extract_strided_slice %15 {offsets = [0, 128], sizes = [16, 128], strides = [1, 1]} : vector<16x384xf32> to vector<16x128xf32>
    %26 = arith.addf %24, %25 : vector<16x128xf32>
    %27 = arith.negf %26 : vector<16x128xf32>
    %28 = math.exp %27 : vector<16x128xf32>
    %cst_16 = arith.constant 1.000000e+00 : f32
    %29 = vector.broadcast %cst_16 : f32 to vector<16x128xf32>
    %30 = arith.addf %29, %28 : vector<16x128xf32>
    %31 = arith.divf %29, %30 : vector<16x128xf32>
    %32 = vector.extract_strided_slice %10 {offsets = [0, 256], sizes = [16, 128], strides = [1, 1]} : vector<16x384xf32> to vector<16x128xf32>
    %33 = vector.extract_strided_slice %15 {offsets = [0, 256], sizes = [16, 128], strides = [1, 1]} : vector<16x384xf32> to vector<16x128xf32>
    %34 = arith.mulf %23, %33 : vector<16x128xf32>
    %35 = arith.addf %32, %34 : vector<16x128xf32>
    %36 = math.tanh %35 : vector<16x128xf32>
    %cst_17 = arith.constant 1.000000e+00 : f32
    %37 = vector.broadcast %cst_17 : f32 to vector<16x128xf32>
    %38 = arith.subf %37, %31 : vector<16x128xf32>
    %39 = arith.mulf %38, %36 : vector<16x128xf32>
    %40 = arith.mulf %31, %4 : vector<16x128xf32>
    %41 = arith.addf %39, %40 : vector<16x128xf32>
    %42 = arith.truncf %41 : vector<16x128xf32> to vector<16x128xbf16>
    %c0_18 = arith.constant 0 : index
    %c0_19 = arith.constant 0 : index
    %43 = vector.load %arg8[%c0_18, %c0_19] : memref<128x128xbf16, #tpu.memory_space<vmem>>, vector<128x128xbf16>
    %cst_20 = arith.constant dense<0.000000e+00> : vector<16x128xf32>
    %44 = tpu.matmul %42, %43, %cst_20 {dimension_numbers = #tpu.dot_dimension_numbers<[1], [1], [0], [0], [0, 0, 1, 0], [], []>} : vector<16x128xbf16>, vector<128x128xbf16>, vector<16x128xf32> -> vector<16x128xf32>
    %c0_21 = arith.constant 0 : index
    %c0_22 = arith.constant 0 : index
    %45 = vector.load %arg7[%c0_21, %c0_22] : memref<1x128xf32, #tpu.memory_space<vmem>>, vector<1x128xf32>
    %46 = vector.broadcast %45 : vector<1x128xf32> to vector<16x128xf32>
    %47 = arith.addf %44, %46 : vector<16x128xf32>
    %cst_23 = arith.constant dense<0xFF800000> : vector<16xf32>
    %48 = vector.multi_reduction <maximumf>, %47, %cst_23 [1] : vector<16x128xf32> to vector<16xf32>
    %49 = vector.shape_cast %48 : vector<16xf32> to vector<16x1xf32>
    %50 = vector.broadcast %49 : vector<16x1xf32> to vector<16x128xf32>
    %51 = arith.subf %47, %50 : vector<16x128xf32>
    %52 = math.exp %51 : vector<16x128xf32>
    %cst_24 = arith.constant dense<0.000000e+00> : vector<16xf32>
    %53 = vector.multi_reduction <add>, %52, %cst_24 [1] : vector<16x128xf32> to vector<16xf32>
    %54 = vector.shape_cast %53 : vector<16xf32> to vector<16x1xf32>
    %cst_25 = arith.constant 1.000000e+00 : f32
    %55 = vector.broadcast %cst_25 : f32 to vector<16x1xf32>
    %56 = arith.divf %55, %54 : vector<16x1xf32>
    %57 = vector.broadcast %56 : vector<16x1xf32> to vector<16x128xf32>
    %58 = arith.mulf %52, %57 : vector<16x128xf32>
    %c0_26 = arith.constant 0 : index
    %c0_27 = arith.constant 0 : index
    %c0_28 = arith.constant 0 : index
    %59 = vector.load %arg4[%c0_26, %c0_27, %c0_28] : memref<2x128x128xbf16, #tpu.memory_space<vmem>>, vector<2x128x128xbf16>
    %60 = vector.shape_cast %42 : vector<16x128xbf16> to vector<2x8x128xbf16>
    "tpu.trace_start"() <{level = 10 : i32, message = "bnh,bsh->bns"}> : () -> ()
    %cst_29 = arith.constant dense<0.000000e+00> : vector<2x8x128xf32>
    %61 = tpu.matmul %60, %59, %cst_29 {dimension_numbers = #tpu.dot_dimension_numbers<[2], [2], [1], [1], [0, 0, 0, 1, 1, 1], [0], [0]>} : vector<2x8x128xbf16>, vector<2x128x128xbf16>, vector<2x8x128xf32> -> vector<2x8x128xf32>
    "tpu.trace_stop"() : () -> ()
    %c0_30 = arith.constant 0 : index
    %c0_31 = arith.constant 0 : index
    %c0_32 = arith.constant 0 : index
    %62 = vector.load %arg6[%c0_30, %c0_31, %c0_32] : memref<2x1x128xf32, #tpu.memory_space<vmem>>, vector<2x1x128xf32>
    %63 = vector.broadcast %62 : vector<2x1x128xf32> to vector<2x8x128xf32>
    %64 = arith.addf %61, %63 : vector<2x8x128xf32>
    %cst_33 = arith.constant dense<0xFF800000> : vector<2x8xf32>
    %65 = vector.multi_reduction <maximumf>, %64, %cst_33 [2] : vector<2x8x128xf32> to vector<2x8xf32>
    %66 = vector.shape_cast %65 : vector<2x8xf32> to vector<2x8x1xf32>
    %67 = vector.broadcast %66 : vector<2x8x1xf32> to vector<2x8x128xf32>
    %68 = arith.subf %64, %67 : vector<2x8x128xf32>
    %69 = math.exp %68 : vector<2x8x128xf32>
    %cst_34 = arith.constant dense<0.000000e+00> : vector<2x8xf32>
    %70 = vector.multi_reduction <add>, %69, %cst_34 [2] : vector<2x8x128xf32> to vector<2x8xf32>
    %71 = vector.shape_cast %70 : vector<2x8xf32> to vector<2x8x1xf32>
    %cst_35 = arith.constant 1.000000e+00 : f32
    %72 = vector.broadcast %cst_35 : f32 to vector<2x8x1xf32>
    %73 = arith.divf %72, %71 : vector<2x8x1xf32>
    %74 = vector.broadcast %73 : vector<2x8x1xf32> to vector<2x8x128xf32>
    %75 = arith.mulf %69, %74 : vector<2x8x128xf32>
    %76 = arith.truncf %75 : vector<2x8x128xf32> to vector<2x8x128xbf16>
    "tpu.trace_start"() <{level = 10 : i32, message = "bns,bsh->bnh"}> : () -> ()
    %cst_36 = arith.constant dense<0.000000e+00> : vector<2x8x128xf32>
    %77 = tpu.matmul %76, %59, %cst_36 {dimension_numbers = #tpu.dot_dimension_numbers<[2], [1], [1], [2], [0, 0, 0, 1, 1, 2], [0], [0]>} : vector<2x8x128xbf16>, vector<2x128x128xbf16>, vector<2x8x128xf32> -> vector<2x8x128xf32>
    "tpu.trace_stop"() : () -> ()
    %78 = vector.shape_cast %77 : vector<2x8x128xf32> to vector<16x128xf32>
    %c0_37 = arith.constant 0 : index
    %c0_38 = arith.constant 0 : index
    %c0_39 = arith.constant 0 : index
    %79 = vector.load %arg5[%c0_37, %c0_38, %c0_39] : memref<2x128x1xi32, #tpu.memory_space<vmem>>, vector<2x128x1xi32>
    %80 = tpu.iota {dimensions = array<i32: 2>} : vector<2x128x128xi32>
    %81 = vector.broadcast %79 : vector<2x128x1xi32> to vector<2x128x128xi32>
    %82 = arith.cmpi eq, %81, %80 : vector<2x128x128xi32>
    %83 = arith.extui %82 : vector<2x128x128xi1> to vector<2x128x128xi32>
    %84 = arith.sitofp %83 : vector<2x128x128xi32> to vector<2x128x128xf32>
    %85 = arith.truncf %84 : vector<2x128x128xf32> to vector<2x128x128xbf16>
    "tpu.trace_start"() <{level = 10 : i32, message = "bns,bsv->bnv"}> : () -> ()
    %cst_40 = arith.constant dense<0.000000e+00> : vector<2x8x128xf32>
    %86 = tpu.matmul %76, %85, %cst_40 {dimension_numbers = #tpu.dot_dimension_numbers<[2], [1], [1], [2], [0, 0, 0, 1, 1, 2], [0], [0]>} : vector<2x8x128xbf16>, vector<2x128x128xbf16>, vector<2x8x128xf32> -> vector<2x8x128xf32>
    "tpu.trace_stop"() : () -> ()
    %87 = vector.shape_cast %86 : vector<2x8x128xf32> to vector<16x128xf32>
    %c0_41 = arith.constant 0 : index
    %c0_42 = arith.constant 0 : index
    %88 = vector.load %arg13[%c0_41, %c0_42] : memref<8x128xf32, #tpu.memory_space<vmem>>, vector<8x128xf32>
    %89 = vector.extract_strided_slice %88 {offsets = [0, 0], sizes = [1, 128], strides = [1, 1]} : vector<8x128xf32> to vector<1x128xf32>
    %90 = vector.broadcast %89 : vector<1x128xf32> to vector<16x128xf32>
    %91 = arith.mulf %41, %90 : vector<16x128xf32>
    %92 = vector.extract_strided_slice %88 {offsets = [1, 0], sizes = [1, 128], strides = [1, 1]} : vector<8x128xf32> to vector<1x128xf32>
    %93 = vector.broadcast %92 : vector<1x128xf32> to vector<16x128xf32>
    %94 = arith.mulf %78, %93 : vector<16x128xf32>
    %95 = arith.addf %91, %94 : vector<16x128xf32>
    %96 = vector.extract_strided_slice %88 {offsets = [2, 0], sizes = [1, 128], strides = [1, 1]} : vector<8x128xf32> to vector<1x128xf32>
    %97 = arith.extf %3 : vector<16x128xbf16> to vector<16x128xf32>
    %98 = vector.broadcast %96 : vector<1x128xf32> to vector<16x128xf32>
    %99 = arith.mulf %97, %98 : vector<16x128xf32>
    %100 = arith.addf %95, %99 : vector<16x128xf32>
    %cst_43 = arith.constant dense<0.000000e+00> : vector<16xf32>
    %101 = vector.multi_reduction <add>, %100, %cst_43 [1] : vector<16x128xf32> to vector<16xf32>
    %102 = vector.shape_cast %101 : vector<16xf32> to vector<16x1xf32>
    %c0_44 = arith.constant 0 : index
    %c0_45 = arith.constant 0 : index
    %103 = vector.load %arg14[%c0_44, %c0_45] : memref<1x1xf32, #tpu.memory_space<vmem>>, vector<1x1xf32>
    %104 = vector.broadcast %103 : vector<1x1xf32> to vector<16x1xf32>
    %105 = arith.addf %102, %104 : vector<16x1xf32>
    %106 = arith.negf %105 : vector<16x1xf32>
    %107 = math.exp %106 : vector<16x1xf32>
    %cst_46 = arith.constant 1.000000e+00 : f32
    %108 = vector.broadcast %cst_46 : f32 to vector<16x1xf32>
    %109 = arith.addf %108, %107 : vector<16x1xf32>
    %110 = arith.divf %108, %109 : vector<16x1xf32>
    %c0_i32_47 = arith.constant 0 : i32
    %111 = arith.cmpi eq, %arg1, %c0_i32_47 : i32
    %112 = arith.extui %111 : i1 to i32
    %c0_i32_48 = arith.constant 0 : i32
    %113 = arith.cmpi ne, %112, %c0_i32_48 : i32
    scf.if %113 {
      %145 = arith.truncf %78 : vector<16x128xf32> to vector<16x128xbf16>
      %c0_64 = arith.constant 0 : index
      %c0_65 = arith.constant 0 : index
      %146 = vector.load %arg15[%c0_64, %c0_65] : memref<128x128xbf16, #tpu.memory_space<vmem>>, vector<128x128xbf16>
      %cst_66 = arith.constant dense<0.000000e+00> : vector<16x128xf32>
      %147 = tpu.matmul %145, %146, %cst_66 {dimension_numbers = #tpu.dot_dimension_numbers<[1], [0], [0], [1], [0, 0, 1, 1], [], []>} : vector<16x128xbf16>, vector<128x128xbf16>, vector<16x128xf32> -> vector<16x128xf32>
      %c0_67 = arith.constant 0 : index
      %c0_68 = arith.constant 0 : index
      %148 = vector.load %arg16[%c0_67, %c0_68] : memref<1x128xf32, #tpu.memory_space<vmem>>, vector<1x128xf32>
      %149 = vector.broadcast %148 : vector<1x128xf32> to vector<16x128xf32>
      %150 = arith.addf %147, %149 : vector<16x128xf32>
      %c0_69 = arith.constant 0 : index
      %c0_70 = arith.constant 0 : index
      %151 = vector.load %arg18[%c0_69, %c0_70] : memref<16x128xf32, #tpu.memory_space<vmem>>, vector<16x128xf32>
      tpu.vector_store %arg18[%c0_69, %c0_70], %150 {strides = array<i32>} : memref<16x128xf32, #tpu.memory_space<vmem>>, vector<16x128xf32>,
    } else {
    }
    %cst_49 = arith.constant 1.000000e+00 : f32
    %114 = vector.broadcast %cst_49 : f32 to vector<16x1xf32>
    %115 = arith.subf %114, %110 : vector<16x1xf32>
    %116 = vector.broadcast %115 : vector<16x1xf32> to vector<16x128xf32>
    %117 = arith.mulf %116, %87 : vector<16x128xf32>
    %118 = vector.broadcast %110 : vector<16x1xf32> to vector<16x128xf32>
    %119 = arith.mulf %118, %58 : vector<16x128xf32>
    %120 = arith.addf %117, %119 : vector<16x128xf32>
    %121 = arith.truncf %120 : vector<16x128xf32> to vector<16x128xbf16>
    %c0_50 = arith.constant 0 : index
    %c0_51 = arith.constant 0 : index
    %c0_52 = arith.constant 0 : index
    %122 = vector.load %arg17[%c0_50, %c0_51, %c0_52] : memref<1x16x128xbf16, #tpu.memory_space<vmem>>, vector<1x16x128xbf16>
    %123 = vector.shape_cast %122 : vector<1x16x128xbf16> to vector<16x128xbf16>
    %124 = vector.shape_cast %121 : vector<16x128xbf16> to vector<1x16x128xbf16>
    tpu.vector_store %arg17[%c0_50, %c0_51, %c0_52], %124 {strides = array<i32>} : memref<1x16x128xbf16, #tpu.memory_space<vmem>>, vector<1x16x128xbf16>,
    %125 = tpu.iota {dimensions = array<i32: 1>} : vector<16x128xi32>
    %cst_53 = arith.constant dense<0xFF800000> : vector<16xf32>
    %126 = vector.multi_reduction <maximumf>, %120, %cst_53 [1] : vector<16x128xf32> to vector<16xf32>
    %127 = vector.shape_cast %126 : vector<16xf32> to vector<16x1xf32>
    %128 = vector.broadcast %127 : vector<16x1xf32> to vector<16x128xf32>
    %129 = arith.cmpf oeq, %120, %128 : vector<16x128xf32>
    %c128_i32 = arith.constant 128 : i32
    %130 = vector.broadcast %c128_i32 : i32 to vector<16x128xi32>
    %131 = arith.select %129, %125, %130 : vector<16x128xi1>, vector<16x128xi32>
    %cst_54 = arith.constant dense<2147483647> : vector<16xi32>
    %132 = vector.multi_reduction <minsi>, %131, %cst_54 [1] : vector<16x128xi32> to vector<16xi32>
    %133 = vector.shape_cast %132 : vector<16xi32> to vector<16x1xi32>
    %134 = vector.broadcast %133 : vector<16x1xi32> to vector<16x128xi32>
    %135 = arith.cmpi eq, %125, %134 : vector<16x128xi32>
    %136 = arith.extui %135 : vector<16x128xi1> to vector<16x128xi32>
    %137 = arith.sitofp %136 : vector<16x128xi32> to vector<16x128xf32>
    %138 = arith.truncf %137 : vector<16x128xf32> to vector<16x128xbf16>
    %c0_55 = arith.constant 0 : index
    %c0_56 = arith.constant 0 : index
    %139 = vector.load %arg8[%c0_55, %c0_56] : memref<128x128xbf16, #tpu.memory_space<vmem>>, vector<128x128xbf16>
    %cst_57 = arith.constant dense<0.000000e+00> : vector<16x128xf32>
    %140 = tpu.matmul %138, %139, %cst_57 {dimension_numbers = #tpu.dot_dimension_numbers<[1], [0], [0], [1], [0, 0, 1, 1], [], []>} : vector<16x128xbf16>, vector<128x128xbf16>, vector<16x128xf32> -> vector<16x128xf32>
    %141 = arith.truncf %140 : vector<16x128xf32> to vector<16x128xbf16>
    %c0_58 = arith.constant 0 : index
    %c0_59 = arith.constant 0 : index
    %142 = vector.load %arg21[%c0_58, %c0_59] : memref<16x128xbf16, #tpu.memory_space<vmem>>, vector<16x128xbf16>
    tpu.vector_store %arg21[%c0_58, %c0_59], %141 {strides = array<i32>} : memref<16x128xbf16, #tpu.memory_space<vmem>>, vector<16x128xbf16>,
    %c0_60 = arith.constant 0 : index
    %c0_61 = arith.constant 0 : index
    %143 = vector.load %arg19[%c0_60, %c0_61] : memref<16x128xf32, #tpu.memory_space<vmem>>, vector<16x128xf32>
    tpu.vector_store %arg19[%c0_60, %c0_61], %41 {strides = array<i32>} : memref<16x128xf32, #tpu.memory_space<vmem>>, vector<16x128xf32>,
    %c0_62 = arith.constant 0 : index
    %c0_63 = arith.constant 0 : index
    %144 = vector.load %arg20[%c0_62, %c0_63] : memref<16x128xbf16, #tpu.memory_space<vmem>>, vector<16x128xbf16>
    tpu.vector_store %arg20[%c0_62, %c0_63], %42 {strides = array<i32>} : memref<16x128xbf16, #tpu.memory_space<vmem>>, vector<16x128xbf16>,
    return
  }
  func.func @transform_0(%arg0: i32, %arg1: i32) -> (i32, i32) {
    %c0_i32 = arith.constant 0 : i32
    %c0_i32_0 = arith.constant 0 : i32
    return %arg0, %c0_i32 : i32, i32
  }
  func.func @transform_1(%arg0: i32, %arg1: i32) -> (i32, i32) {
    %c0_i32 = arith.constant 0 : i32
    %c0_i32_0 = arith.constant 0 : i32
    return %arg0, %c0_i32 : i32, i32
  }
  func.func @transform_2(%arg0: i32, %arg1: i32) -> (i32, i32, i32) {
    %c0_i32 = arith.constant 0 : i32
    %c0_i32_0 = arith.constant 0 : i32
    %c0_i32_1 = arith.constant 0 : i32
    return %arg0, %c0_i32, %c0_i32_0 : i32, i32, i32
  }
  func.func @transform_3(%arg0: i32, %arg1: i32) -> (i32, i32, i32) {
    %c0_i32 = arith.constant 0 : i32
    %c0_i32_0 = arith.constant 0 : i32
    %c0_i32_1 = arith.constant 0 : i32
    return %arg0, %c0_i32, %c0_i32_0 : i32, i32, i32
  }
  func.func @transform_4(%arg0: i32, %arg1: i32) -> (i32, i32, i32) {
    %c0_i32 = arith.constant 0 : i32
    %c0_i32_0 = arith.constant 0 : i32
    %c0_i32_1 = arith.constant 0 : i32
    return %arg0, %c0_i32, %c0_i32_0 : i32, i32, i32
  }
  func.func @transform_5(%arg0: i32, %arg1: i32) -> (i32, i32) {
    %c0_i32 = arith.constant 0 : i32
    %c0_i32_0 = arith.constant 0 : i32
    %c0_i32_1 = arith.constant 0 : i32
    return %c0_i32, %c0_i32_0 : i32, i32
  }
  func.func @transform_6(%arg0: i32, %arg1: i32) -> (i32, i32) {
    %c0_i32 = arith.constant 0 : i32
    %c0_i32_0 = arith.constant 0 : i32
    %c0_i32_1 = arith.constant 0 : i32
    return %c0_i32, %c0_i32_0 : i32, i32
  }
  func.func @transform_7(%arg0: i32, %arg1: i32) -> (i32, i32) {
    %c0_i32 = arith.constant 0 : i32
    %c0_i32_0 = arith.constant 0 : i32
    %c0_i32_1 = arith.constant 0 : i32
    return %c0_i32, %c0_i32_0 : i32, i32
  }
  func.func @transform_8(%arg0: i32, %arg1: i32) -> (i32, i32) {
    %c0_i32 = arith.constant 0 : i32
    %c0_i32_0 = arith.constant 0 : i32
    %c0_i32_1 = arith.constant 0 : i32
    return %c0_i32, %c0_i32_0 : i32, i32
  }
  func.func @transform_9(%arg0: i32, %arg1: i32) -> (i32, i32) {
    %c0_i32 = arith.constant 0 : i32
    %c0_i32_0 = arith.constant 0 : i32
    %c0_i32_1 = arith.constant 0 : i32
    return %c0_i32, %c0_i32_0 : i32, i32
  }
  func.func @transform_10(%arg0: i32, %arg1: i32) -> (i32, i32) {
    %c0_i32 = arith.constant 0 : i32
    %c0_i32_0 = arith.constant 0 : i32
    %c0_i32_1 = arith.constant 0 : i32
    return %c0_i32, %c0_i32_0 : i32, i32
  }
  func.func @transform_11(%arg0: i32, %arg1: i32) -> (i32, i32) {
    %c0_i32 = arith.constant 0 : i32
    %c0_i32_0 = arith.constant 0 : i32
    %c0_i32_1 = arith.constant 0 : i32
    return %c0_i32, %c0_i32_0 : i32, i32
  }
  func.func @transform_12(%arg0: i32, %arg1: i32) -> (i32, i32) {
    %c0_i32 = arith.constant 0 : i32
    %c0_i32_0 = arith.constant 0 : i32
    %c0_i32_1 = arith.constant 0 : i32
    return %c0_i32, %c0_i32_0 : i32, i32
  }
  func.func @transform_13(%arg0: i32, %arg1: i32) -> (i32, i32) {
    %c0_i32 = arith.constant 0 : i32
    %c0_i32_0 = arith.constant 0 : i32
    %c0_i32_1 = arith.constant 0 : i32
    return %c0_i32, %c0_i32_0 : i32, i32
  }
  func.func @transform_14(%arg0: i32, %arg1: i32) -> (i32, i32) {
    %c0_i32 = arith.constant 0 : i32
    %c0_i32_0 = arith.constant 0 : i32
    %c0_i32_1 = arith.constant 0 : i32
    return %c0_i32, %c0_i32_0 : i32, i32
  }
  func.func @transform_15(%arg0: i32, %arg1: i32) -> (i32, i32, i32) {
    %c0_i32 = arith.constant 0 : i32
    %c0_i32_0 = arith.constant 0 : i32
    return %arg1, %arg0, %c0_i32 : i32, i32, i32
  }
  func.func @transform_16(%arg0: i32, %arg1: i32) -> (i32, i32) {
    %c0_i32 = arith.constant 0 : i32
    %c0_i32_0 = arith.constant 0 : i32
    return %arg0, %c0_i32 : i32, i32
  }
}

module attributes {stable_mosaic.version = 11 : i64} {
  func.func @trade_decoder_kernel(%arg0: i32, %arg1: i32, %arg2: memref<16x128xbf16, #tpu.memory_space<vmem>>, %arg3: memref<16x128xf32, #tpu.memory_space<vmem>>, %arg4: memref<2x128x128xbf16, #tpu.memory_space<vmem>>, %arg5: memref<2x128x1xi32, #tpu.memory_space<vmem>>, %arg6: memref<2x1x128xf32, #tpu.memory_space<vmem>>, %arg7: memref<1x128xf32, #tpu.memory_space<vmem>>, %arg8: memref<128x128xbf16, #tpu.memory_space<vmem>>, %arg9: memref<128x384xbf16, #tpu.memory_space<vmem>>, %arg10: memref<128x384xbf16, #tpu.memory_space<vmem>>, %arg11: memref<1x384xf32, #tpu.memory_space<vmem>>, %arg12: memref<1x384xf32, #tpu.memory_space<vmem>>, %arg13: memref<8x128xf32, #tpu.memory_space<vmem>>, %arg14: memref<1x1xf32, #tpu.memory_space<vmem>>, %arg15: memref<128x128xbf16, #tpu.memory_space<vmem>>, %arg16: memref<1x128xf32, #tpu.memory_space<vmem>>, %arg17: memref<1x16x128xbf16, #tpu.memory_space<vmem>>, %arg18: memref<16x128xf32, #tpu.memory_space<vmem>>, %arg19: memref<16x128xf32, #tpu.memory_space<vmem>>, %arg20: memref<16x128xbf16, #tpu.memory_space<vmem>>, %arg21: memref<16x128xbf16, #tpu.memory_space<vmem>>) attributes {dimension_semantics = [#tpu.dimension_semantics<parallel>, #tpu.dimension_semantics<arbitrary>], iteration_bounds = array<i64: 1, 10>, scalar_prefetch = 0 : i64, scratch_operands = 3 : i64, tpu.core_type = #tpu.core_type<tc>, window_params = [{transform_indices = @transform_0, window_bounds = array<i64: 16, 128>}, {transform_indices = @transform_1, window_bounds = array<i64: 16, 128>}, {transform_indices = @transform_2, window_bounds = array<i64: 2, 128, 128>}, {transform_indices = @transform_3, window_bounds = array<i64: 2, 128, 1>}, {transform_indices = @transform_4, window_bounds = array<i64: 2, 1, 128>}, {pipeline_mode = #tpu.pipeline_mode<synchronous>, transform_indices = @transform_5, window_bounds = array<i64: 1, 128>}, {pipeline_mode = #tpu.pipeline_mode<synchronous>, transform_indices = @transform_6, window_bounds = array<i64: 128, 128>}, {pipeline_mode = #tpu.pipeline_mode<synchronous>, transform_indices = @transform_7, window_bounds = array<i64: 128, 384>}, {pipeline_mode = #tpu.pipeline_mode<synchronous>, transform_indices = @transform_8, window_bounds = array<i64: 128, 384>}, {pipeline_mode = #tpu.pipeline_mode<synchronous>, transform_indices = @transform_9, window_bounds = array<i64: 1, 384>}, {pipeline_mode = #tpu.pipeline_mode<synchronous>, transform_indices = @transform_10, window_bounds = array<i64: 1, 384>}, {pipeline_mode = #tpu.pipeline_mode<synchronous>, transform_indices = @transform_11, window_bounds = array<i64: 8, 128>}, {pipeline_mode = #tpu.pipeline_mode<synchronous>, transform_indices = @transform_12, window_bounds = array<i64: 1, 1>}, {pipeline_mode = #tpu.pipeline_mode<synchronous>, transform_indices = @transform_13, window_bounds = array<i64: 128, 128>}, {pipeline_mode = #tpu.pipeline_mode<synchronous>, transform_indices = @transform_14, window_bounds = array<i64: 1, 128>}, {transform_indices = @transform_15, window_bounds = array<i64: 1, 16, 128>}, {transform_indices = @transform_16, window_bounds = array<i64: 16, 128>}]} {
    %c0_i32 = arith.constant 0 : i32
    %0 = arith.cmpi eq, %arg1, %c0_i32 : i32
    %1 = arith.extui %0 : i1 to i32
    %c0_i32_0 = arith.constant 0 : i32
    %2 = arith.cmpi ne, %1, %c0_i32_0 : i32
    scf.if %2 {
      %c0_64 = arith.constant 0 : index
      %c0_65 = arith.constant 0 : index
      %145 = vector.load %arg3[%c0_64, %c0_65] : memref<16x128xf32, #tpu.memory_space<vmem>>, vector<16x128xf32>
      %c0_66 = arith.constant 0 : index
      %c0_67 = arith.constant 0 : index
      %146 = vector.load %arg19[%c0_66, %c0_67] : memref<16x128xf32, #tpu.memory_space<vmem>>, vector<16x128xf32>
      tpu.vector_store %arg19[%c0_66, %c0_67], %145 {strides = array<i32>} : memref<16x128xf32, #tpu.memory_space<vmem>>, vector<16x128xf32>,
      %147 = arith.truncf %145 : vector<16x128xf32> to vector<16x128xbf16>
      %c0_68 = arith.constant 0 : index
      %c0_69 = arith.constant 0 : index
      %148 = vector.load %arg20[%c0_68, %c0_69] : memref<16x128xbf16, #tpu.memory_space<vmem>>, vector<16x128xbf16>
      tpu.vector_store %arg20[%c0_68, %c0_69], %147 {strides = array<i32>} : memref<16x128xbf16, #tpu.memory_space<vmem>>, vector<16x128xbf16>,
      %c0_70 = arith.constant 0 : index
      %c0_71 = arith.constant 0 : index
      %149 = vector.load %arg2[%c0_70, %c0_71] : memref<16x128xbf16, #tpu.memory_space<vmem>>, vector<16x128xbf16>
      %c0_72 = arith.constant 0 : index
      %c0_73 = arith.constant 0 : index
      %150 = vector.load %arg21[%c0_72, %c0_73] : memref<16x128xbf16, #tpu.memory_space<vmem>>, vector<16x128xbf16>
      tpu.vector_store %arg21[%c0_72, %c0_73], %149 {strides = array<i32>} : memref<16x128xbf16, #tpu.memory_space<vmem>>, vector<16x128xbf16>,
    } else {
    }
    %c0 = arith.constant 0 : index
    %c0_1 = arith.constant 0 : index
    %3 = vector.load %arg21[%c0, %c0_1] : memref<16x128xbf16, #tpu.memory_space<vmem>>, vector<16x128xbf16>
    %c0_2 = arith.constant 0 : index
    %c0_3 = arith.constant 0 : index
    %4 = vector.load %arg19[%c0_2, %c0_3] : memref<16x128xf32, #tpu.memory_space<vmem>>, vector<16x128xf32>
    %c0_4 = arith.constant 0 : index
    %c0_5 = arith.constant 0 : index
    %5 = vector.load %arg20[%c0_4, %c0_5] : memref<16x128xbf16, #tpu.memory_space<vmem>>, vector<16x128xbf16>
    %c0_6 = arith.constant 0 : index
    %c0_7 = arith.constant 0 : index
    %6 = vector.load %arg9[%c0_6, %c0_7] : memref<128x384xbf16, #tpu.memory_space<vmem>>, vector<128x384xbf16>
    %cst = arith.constant dense<0.000000e+00> : vector<16x384xf32>
    %7 = tpu.matmul %3, %6, %cst {dimension_numbers = #tpu.dot_dimension_numbers<[1], [0], [0], [1], [0, 0, 1, 1], [], []>} : vector<16x128xbf16>, vector<128x384xbf16>, vector<16x384xf32> -> vector<16x384xf32>
    %c0_8 = arith.constant 0 : index
    %c0_9 = arith.constant 0 : index
    %8 = vector.load %arg11[%c0_8, %c0_9] : memref<1x384xf32, #tpu.memory_space<vmem>>, vector<1x384xf32>
    %9 = vector.broadcast %8 : vector<1x384xf32> to vector<16x384xf32>
    %10 = arith.addf %7, %9 : vector<16x384xf32>
    %c0_10 = arith.constant 0 : index
    %c0_11 = arith.constant 0 : index
    %11 = vector.load %arg10[%c0_10, %c0_11] : memref<128x384xbf16, #tpu.memory_space<vmem>>, vector<128x384xbf16>
    %cst_12 = arith.constant dense<0.000000e+00> : vector<16x384xf32>
    %12 = tpu.matmul %5, %11, %cst_12 {dimension_numbers = #tpu.dot_dimension_numbers<[1], [0], [0], [1], [0, 0, 1, 1], [], []>} : vector<16x128xbf16>, vector<128x384xbf16>, vector<16x384xf32> -> vector<16x384xf32>
    %c0_13 = arith.constant 0 : index
    %c0_14 = arith.constant 0 : index
    %13 = vector.load %arg12[%c0_13, %c0_14] : memref<1x384xf32, #tpu.memory_space<vmem>>, vector<1x384xf32>
    %14 = vector.broadcast %13 : vector<1x384xf32> to vector<16x384xf32>
    %15 = arith.addf %12, %14 : vector<16x384xf32>
    %16 = vector.extract_strided_slice %10 {offsets = [0, 0], sizes = [16, 128], strides = [1, 1]} : vector<16x384xf32> to vector<16x128xf32>
    %17 = vector.extract_strided_slice %15 {offsets = [0, 0], sizes = [16, 128], strides = [1, 1]} : vector<16x384xf32> to vector<16x128xf32>
    %18 = arith.addf %16, %17 : vector<16x128xf32>
    %19 = arith.negf %18 : vector<16x128xf32>
    %20 = math.exp %19 : vector<16x128xf32>
    %cst_15 = arith.constant 1.000000e+00 : f32
    %21 = vector.broadcast %cst_15 : f32 to vector<16x128xf32>
    %22 = arith.addf %21, %20 : vector<16x128xf32>
    %23 = arith.divf %21, %22 : vector<16x128xf32>
    %24 = vector.extract_strided_slice %10 {offsets = [0, 128], sizes = [16, 128], strides = [1, 1]} : vector<16x384xf32> to vector<16x128xf32>
    %25 = vector.extract_strided_slice %15 {offsets = [0, 128], sizes = [16, 128], strides = [1, 1]} : vector<16x384xf32> to vector<16x128xf32>
    %26 = arith.addf %24, %25 : vector<16x128xf32>
    %27 = arith.negf %26 : vector<16x128xf32>
    %28 = math.exp %27 : vector<16x128xf32>
    %cst_16 = arith.constant 1.000000e+00 : f32
    %29 = vector.broadcast %cst_16 : f32 to vector<16x128xf32>
    %30 = arith.addf %29, %28 : vector<16x128xf32>
    %31 = arith.divf %29, %30 : vector<16x128xf32>
    %32 = vector.extract_strided_slice %10 {offsets = [0, 256], sizes = [16, 128], strides = [1, 1]} : vector<16x384xf32> to vector<16x128xf32>
    %33 = vector.extract_strided_slice %15 {offsets = [0, 256], sizes = [16, 128], strides = [1, 1]} : vector<16x384xf32> to vector<16x128xf32>
    %34 = arith.mulf %23, %33 : vector<16x128xf32>
    %35 = arith.addf %32, %34 : vector<16x128xf32>
    %36 = math.tanh %35 : vector<16x128xf32>
    %cst_17 = arith.constant 1.000000e+00 : f32
    %37 = vector.broadcast %cst_17 : f32 to vector<16x128xf32>
    %38 = arith.subf %37, %31 : vector<16x128xf32>
    %39 = arith.mulf %38, %36 : vector<16x128xf32>
    %40 = arith.mulf %31, %4 : vector<16x128xf32>
    %41 = arith.addf %39, %40 : vector<16x128xf32>
    %42 = arith.truncf %41 : vector<16x128xf32> to vector<16x128xbf16>
    %c0_18 = arith.constant 0 : index
    %c0_19 = arith.constant 0 : index
    %43 = vector.load %arg8[%c0_18, %c0_19] : memref<128x128xbf16, #tpu.memory_space<vmem>>, vector<128x128xbf16>
    %cst_20 = arith.constant dense<0.000000e+00> : vector<16x128xf32>
    %44 = tpu.matmul %42, %43, %cst_20 {dimension_numbers = #tpu.dot_dimension_numbers<[1], [1], [0], [0], [0, 0, 1, 0], [], []>} : vector<16x128xbf16>, vector<128x128xbf16>, vector<16x128xf32> -> vector<16x128xf32>
    %c0_21 = arith.constant 0 : index
    %c0_22 = arith.constant 0 : index
    %45 = vector.load %arg7[%c0_21, %c0_22] : memref<1x128xf32, #tpu.memory_space<vmem>>, vector<1x128xf32>
    %46 = vector.broadcast %45 : vector<1x128xf32> to vector<16x128xf32>
    %47 = arith.addf %44, %46 : vector<16x128xf32>
    %cst_23 = arith.constant dense<0xFF800000> : vector<16xf32>
    %48 = vector.multi_reduction <maximumf>, %47, %cst_23 [1] : vector<16x128xf32> to vector<16xf32>
    %49 = vector.shape_cast %48 : vector<16xf32> to vector<16x1xf32>
    %50 = vector.broadcast %49 : vector<16x1xf32> to vector<16x128xf32>
    %51 = arith.subf %47, %50 : vector<16x128xf32>
    %52 = math.exp %51 : vector<16x128xf32>
    %cst_24 = arith.constant dense<0.000000e+00> : vector<16xf32>
    %53 = vector.multi_reduction <add>, %52, %cst_24 [1] : vector<16x128xf32> to vector<16xf32>
    %54 = vector.shape_cast %53 : vector<16xf32> to vector<16x1xf32>
    %cst_25 = arith.constant 1.000000e+00 : f32
    %55 = vector.broadcast %cst_25 : f32 to vector<16x1xf32>
    %56 = arith.divf %55, %54 : vector<16x1xf32>
    %57 = vector.broadcast %56 : vector<16x1xf32> to vector<16x128xf32>
    %58 = arith.mulf %52, %57 : vector<16x128xf32>
    %c0_26 = arith.constant 0 : index
    %c0_27 = arith.constant 0 : index
    %c0_28 = arith.constant 0 : index
    %59 = vector.load %arg4[%c0_26, %c0_27, %c0_28] : memref<2x128x128xbf16, #tpu.memory_space<vmem>>, vector<2x128x128xbf16>
    %60 = vector.shape_cast %42 : vector<16x128xbf16> to vector<2x8x128xbf16>
    "tpu.trace_start"() <{level = 10 : i32, message = "bnh,bsh->bns"}> : () -> ()
    %cst_29 = arith.constant dense<0.000000e+00> : vector<2x8x128xf32>
    %61 = tpu.matmul %60, %59, %cst_29 {dimension_numbers = #tpu.dot_dimension_numbers<[2], [2], [1], [1], [0, 0, 0, 1, 1, 1], [0], [0]>} : vector<2x8x128xbf16>, vector<2x128x128xbf16>, vector<2x8x128xf32> -> vector<2x8x128xf32>
    "tpu.trace_stop"() : () -> ()
    %c0_30 = arith.constant 0 : index
    %c0_31 = arith.constant 0 : index
    %c0_32 = arith.constant 0 : index
    %62 = vector.load %arg6[%c0_30, %c0_31, %c0_32] : memref<2x1x128xf32, #tpu.memory_space<vmem>>, vector<2x1x128xf32>
    %63 = vector.broadcast %62 : vector<2x1x128xf32> to vector<2x8x128xf32>
    %64 = arith.addf %61, %63 : vector<2x8x128xf32>
    %cst_33 = arith.constant dense<0xFF800000> : vector<2x8xf32>
    %65 = vector.multi_reduction <maximumf>, %64, %cst_33 [2] : vector<2x8x128xf32> to vector<2x8xf32>
    %66 = vector.shape_cast %65 : vector<2x8xf32> to vector<2x8x1xf32>
    %67 = vector.broadcast %66 : vector<2x8x1xf32> to vector<2x8x128xf32>
    %68 = arith.subf %64, %67 : vector<2x8x128xf32>
    %69 = math.exp %68 : vector<2x8x128xf32>
    %cst_34 = arith.constant dense<0.000000e+00> : vector<2x8xf32>
    %70 = vector.multi_reduction <add>, %69, %cst_34 [2] : vector<2x8x128xf32> to vector<2x8xf32>
    %71 = vector.shape_cast %70 : vector<2x8xf32> to vector<2x8x1xf32>
    %cst_35 = arith.constant 1.000000e+00 : f32
    %72 = vector.broadcast %cst_35 : f32 to vector<2x8x1xf32>
    %73 = arith.divf %72, %71 : vector<2x8x1xf32>
    %74 = vector.broadcast %73 : vector<2x8x1xf32> to vector<2x8x128xf32>
    %75 = arith.mulf %69, %74 : vector<2x8x128xf32>
    %76 = arith.truncf %75 : vector<2x8x128xf32> to vector<2x8x128xbf16>
    "tpu.trace_start"() <{level = 10 : i32, message = "bns,bsh->bnh"}> : () -> ()
    %cst_36 = arith.constant dense<0.000000e+00> : vector<2x8x128xf32>
    %77 = tpu.matmul %76, %59, %cst_36 {dimension_numbers = #tpu.dot_dimension_numbers<[2], [1], [1], [2], [0, 0, 0, 1, 1, 2], [0], [0]>} : vector<2x8x128xbf16>, vector<2x128x128xbf16>, vector<2x8x128xf32> -> vector<2x8x128xf32>
    "tpu.trace_stop"() : () -> ()
    %78 = vector.shape_cast %77 : vector<2x8x128xf32> to vector<16x128xf32>
    %c0_37 = arith.constant 0 : index
    %c0_38 = arith.constant 0 : index
    %c0_39 = arith.constant 0 : index
    %79 = vector.load %arg5[%c0_37, %c0_38, %c0_39] : memref<2x128x1xi32, #tpu.memory_space<vmem>>, vector<2x128x1xi32>
    %80 = tpu.iota {dimensions = array<i32: 2>} : vector<2x128x128xi32>
    %81 = vector.broadcast %79 : vector<2x128x1xi32> to vector<2x128x128xi32>
    %82 = arith.cmpi eq, %81, %80 : vector<2x128x128xi32>
    %83 = arith.extui %82 : vector<2x128x128xi1> to vector<2x128x128xi32>
    %84 = arith.sitofp %83 : vector<2x128x128xi32> to vector<2x128x128xf32>
    %85 = arith.truncf %84 : vector<2x128x128xf32> to vector<2x128x128xbf16>
    "tpu.trace_start"() <{level = 10 : i32, message = "bns,bsv->bnv"}> : () -> ()
    %cst_40 = arith.constant dense<0.000000e+00> : vector<2x8x128xf32>
    %86 = tpu.matmul %76, %85, %cst_40 {dimension_numbers = #tpu.dot_dimension_numbers<[2], [1], [1], [2], [0, 0, 0, 1, 1, 2], [0], [0]>} : vector<2x8x128xbf16>, vector<2x128x128xbf16>, vector<2x8x128xf32> -> vector<2x8x128xf32>
    "tpu.trace_stop"() : () -> ()
    %87 = vector.shape_cast %86 : vector<2x8x128xf32> to vector<16x128xf32>
    %c0_41 = arith.constant 0 : index
    %c0_42 = arith.constant 0 : index
    %88 = vector.load %arg13[%c0_41, %c0_42] : memref<8x128xf32, #tpu.memory_space<vmem>>, vector<8x128xf32>
    %89 = vector.extract_strided_slice %88 {offsets = [0, 0], sizes = [1, 128], strides = [1, 1]} : vector<8x128xf32> to vector<1x128xf32>
    %90 = vector.broadcast %89 : vector<1x128xf32> to vector<16x128xf32>
    %91 = arith.mulf %41, %90 : vector<16x128xf32>
    %92 = vector.extract_strided_slice %88 {offsets = [1, 0], sizes = [1, 128], strides = [1, 1]} : vector<8x128xf32> to vector<1x128xf32>
    %93 = vector.broadcast %92 : vector<1x128xf32> to vector<16x128xf32>
    %94 = arith.mulf %78, %93 : vector<16x128xf32>
    %95 = arith.addf %91, %94 : vector<16x128xf32>
    %96 = vector.extract_strided_slice %88 {offsets = [2, 0], sizes = [1, 128], strides = [1, 1]} : vector<8x128xf32> to vector<1x128xf32>
    %97 = arith.extf %3 : vector<16x128xbf16> to vector<16x128xf32>
    %98 = vector.broadcast %96 : vector<1x128xf32> to vector<16x128xf32>
    %99 = arith.mulf %97, %98 : vector<16x128xf32>
    %100 = arith.addf %95, %99 : vector<16x128xf32>
    %cst_43 = arith.constant dense<0.000000e+00> : vector<16xf32>
    %101 = vector.multi_reduction <add>, %100, %cst_43 [1] : vector<16x128xf32> to vector<16xf32>
    %102 = vector.shape_cast %101 : vector<16xf32> to vector<16x1xf32>
    %c0_44 = arith.constant 0 : index
    %c0_45 = arith.constant 0 : index
    %103 = vector.load %arg14[%c0_44, %c0_45] : memref<1x1xf32, #tpu.memory_space<vmem>>, vector<1x1xf32>
    %104 = vector.broadcast %103 : vector<1x1xf32> to vector<16x1xf32>
    %105 = arith.addf %102, %104 : vector<16x1xf32>
    %106 = arith.negf %105 : vector<16x1xf32>
    %107 = math.exp %106 : vector<16x1xf32>
    %cst_46 = arith.constant 1.000000e+00 : f32
    %108 = vector.broadcast %cst_46 : f32 to vector<16x1xf32>
    %109 = arith.addf %108, %107 : vector<16x1xf32>
    %110 = arith.divf %108, %109 : vector<16x1xf32>
    %c0_i32_47 = arith.constant 0 : i32
    %111 = arith.cmpi eq, %arg1, %c0_i32_47 : i32
    %112 = arith.extui %111 : i1 to i32
    %c0_i32_48 = arith.constant 0 : i32
    %113 = arith.cmpi ne, %112, %c0_i32_48 : i32
    scf.if %113 {
      %145 = arith.truncf %78 : vector<16x128xf32> to vector<16x128xbf16>
      %c0_64 = arith.constant 0 : index
      %c0_65 = arith.constant 0 : index
      %146 = vector.load %arg15[%c0_64, %c0_65] : memref<128x128xbf16, #tpu.memory_space<vmem>>, vector<128x128xbf16>
      %cst_66 = arith.constant dense<0.000000e+00> : vector<16x128xf32>
      %147 = tpu.matmul %145, %146, %cst_66 {dimension_numbers = #tpu.dot_dimension_numbers<[1], [0], [0], [1], [0, 0, 1, 1], [], []>} : vector<16x128xbf16>, vector<128x128xbf16>, vector<16x128xf32> -> vector<16x128xf32>
      %c0_67 = arith.constant 0 : index
      %c0_68 = arith.constant 0 : index
      %148 = vector.load %arg16[%c0_67, %c0_68] : memref<1x128xf32, #tpu.memory_space<vmem>>, vector<1x128xf32>
      %149 = vector.broadcast %148 : vector<1x128xf32> to vector<16x128xf32>
      %150 = arith.addf %147, %149 : vector<16x128xf32>
      %c0_69 = arith.constant 0 : index
      %c0_70 = arith.constant 0 : index
      %151 = vector.load %arg18[%c0_69, %c0_70] : memref<16x128xf32, #tpu.memory_space<vmem>>, vector<16x128xf32>
      tpu.vector_store %arg18[%c0_69, %c0_70], %150 {strides = array<i32>} : memref<16x128xf32, #tpu.memory_space<vmem>>, vector<16x128xf32>,
    } else {
    }
    %cst_49 = arith.constant 1.000000e+00 : f32
    %114 = vector.broadcast %cst_49 : f32 to vector<16x1xf32>
    %115 = arith.subf %114, %110 : vector<16x1xf32>
    %116 = vector.broadcast %115 : vector<16x1xf32> to vector<16x128xf32>
    %117 = arith.mulf %116, %87 : vector<16x128xf32>
    %118 = vector.broadcast %110 : vector<16x1xf32> to vector<16x128xf32>
    %119 = arith.mulf %118, %58 : vector<16x128xf32>
    %120 = arith.addf %117, %119 : vector<16x128xf32>
    %121 = arith.truncf %120 : vector<16x128xf32> to vector<16x128xbf16>
    %c0_50 = arith.constant 0 : index
    %c0_51 = arith.constant 0 : index
    %c0_52 = arith.constant 0 : index
    %122 = vector.load %arg17[%c0_50, %c0_51, %c0_52] : memref<1x16x128xbf16, #tpu.memory_space<vmem>>, vector<1x16x128xbf16>
    %123 = vector.shape_cast %122 : vector<1x16x128xbf16> to vector<16x128xbf16>
    %124 = vector.shape_cast %121 : vector<16x128xbf16> to vector<1x16x128xbf16>
    tpu.vector_store %arg17[%c0_50, %c0_51, %c0_52], %124 {strides = array<i32>} : memref<1x16x128xbf16, #tpu.memory_space<vmem>>, vector<1x16x128xbf16>,
    %125 = tpu.iota {dimensions = array<i32: 1>} : vector<16x128xi32>
    %cst_53 = arith.constant dense<0xFF800000> : vector<16xf32>
    %126 = vector.multi_reduction <maximumf>, %120, %cst_53 [1] : vector<16x128xf32> to vector<16xf32>
    %127 = vector.shape_cast %126 : vector<16xf32> to vector<16x1xf32>
    %128 = vector.broadcast %127 : vector<16x1xf32> to vector<16x128xf32>
    %129 = arith.cmpf oeq, %120, %128 : vector<16x128xf32>
    %c128_i32 = arith.constant 128 : i32
    %130 = vector.broadcast %c128_i32 : i32 to vector<16x128xi32>
    %131 = arith.select %129, %125, %130 : vector<16x128xi1>, vector<16x128xi32>
    %cst_54 = arith.constant dense<2147483647> : vector<16xi32>
    %132 = vector.multi_reduction <minsi>, %131, %cst_54 [1] : vector<16x128xi32> to vector<16xi32>
    %133 = vector.shape_cast %132 : vector<16xi32> to vector<16x1xi32>
    %134 = vector.broadcast %133 : vector<16x1xi32> to vector<16x128xi32>
    %135 = arith.cmpi eq, %125, %134 : vector<16x128xi32>
    %136 = arith.extui %135 : vector<16x128xi1> to vector<16x128xi32>
    %137 = arith.sitofp %136 : vector<16x128xi32> to vector<16x128xf32>
    %138 = arith.truncf %137 : vector<16x128xf32> to vector<16x128xbf16>
    %c0_55 = arith.constant 0 : index
    %c0_56 = arith.constant 0 : index
    %139 = vector.load %arg8[%c0_55, %c0_56] : memref<128x128xbf16, #tpu.memory_space<vmem>>, vector<128x128xbf16>
    %cst_57 = arith.constant dense<0.000000e+00> : vector<16x128xf32>
    %140 = tpu.matmul %138, %139, %cst_57 {dimension_numbers = #tpu.dot_dimension_numbers<[1], [0], [0], [1], [0, 0, 1, 1], [], []>} : vector<16x128xbf16>, vector<128x128xbf16>, vector<16x128xf32> -> vector<16x128xf32>
    %141 = arith.truncf %140 : vector<16x128xf32> to vector<16x128xbf16>
    %c0_58 = arith.constant 0 : index
    %c0_59 = arith.constant 0 : index
    %142 = vector.load %arg21[%c0_58, %c0_59] : memref<16x128xbf16, #tpu.memory_space<vmem>>, vector<16x128xbf16>
    tpu.vector_store %arg21[%c0_58, %c0_59], %141 {strides = array<i32>} : memref<16x128xbf16, #tpu.memory_space<vmem>>, vector<16x128xbf16>,
    %c0_60 = arith.constant 0 : index
    %c0_61 = arith.constant 0 : index
    %143 = vector.load %arg19[%c0_60, %c0_61] : memref<16x128xf32, #tpu.memory_space<vmem>>, vector<16x128xf32>
    tpu.vector_store %arg19[%c0_60, %c0_61], %41 {strides = array<i32>} : memref<16x128xf32, #tpu.memory_space<vmem>>, vector<16x128xf32>,
    %c0_62 = arith.constant 0 : index
    %c0_63 = arith.constant 0 : index
    %144 = vector.load %arg20[%c0_62, %c0_63] : memref<16x128xbf16, #tpu.memory_space<vmem>>, vector<16x128xbf16>
    tpu.vector_store %arg20[%c0_62, %c0_63], %42 {strides = array<i32>} : memref<16x128xbf16, #tpu.memory_space<vmem>>, vector<16x128xbf16>,
    return
  }
  func.func @transform_0(%arg0: i32, %arg1: i32) -> (i32, i32) {
    %c0_i32 = arith.constant 0 : i32
    %c0_i32_0 = arith.constant 0 : i32
    return %arg0, %c0_i32 : i32, i32
  }
  func.func @transform_1(%arg0: i32, %arg1: i32) -> (i32, i32) {
    %c0_i32 = arith.constant 0 : i32
    %c0_i32_0 = arith.constant 0 : i32
    return %arg0, %c0_i32 : i32, i32
  }
  func.func @transform_2(%arg0: i32, %arg1: i32) -> (i32, i32, i32) {
    %c0_i32 = arith.constant 0 : i32
    %c0_i32_0 = arith.constant 0 : i32
    %c0_i32_1 = arith.constant 0 : i32
    return %arg0, %c0_i32, %c0_i32_0 : i32, i32, i32
  }
  func.func @transform_3(%arg0: i32, %arg1: i32) -> (i32, i32, i32) {
    %c0_i32 = arith.constant 0 : i32
    %c0_i32_0 = arith.constant 0 : i32
    %c0_i32_1 = arith.constant 0 : i32
    return %arg0, %c0_i32, %c0_i32_0 : i32, i32, i32
  }
  func.func @transform_4(%arg0: i32, %arg1: i32) -> (i32, i32, i32) {
    %c0_i32 = arith.constant 0 : i32
    %c0_i32_0 = arith.constant 0 : i32
    %c0_i32_1 = arith.constant 0 : i32
    return %arg0, %c0_i32, %c0_i32_0 : i32, i32, i32
  }
  func.func @transform_5(%arg0: i32, %arg1: i32) -> (i32, i32) {
    %c0_i32 = arith.constant 0 : i32
    %c0_i32_0 = arith.constant 0 : i32
    %c0_i32_1 = arith.constant 0 : i32
    return %c0_i32, %c0_i32_0 : i32, i32
  }
  func.func @transform_6(%arg0: i32, %arg1: i32) -> (i32, i32) {
    %c0_i32 = arith.constant 0 : i32
    %c0_i32_0 = arith.constant 0 : i32
    %c0_i32_1 = arith.constant 0 : i32
    return %c0_i32, %c0_i32_0 : i32, i32
  }
  func.func @transform_7(%arg0: i32, %arg1: i32) -> (i32, i32) {
    %c0_i32 = arith.constant 0 : i32
    %c0_i32_0 = arith.constant 0 : i32
    %c0_i32_1 = arith.constant 0 : i32
    return %c0_i32, %c0_i32_0 : i32, i32
  }
  func.func @transform_8(%arg0: i32, %arg1: i32) -> (i32, i32) {
    %c0_i32 = arith.constant 0 : i32
    %c0_i32_0 = arith.constant 0 : i32
    %c0_i32_1 = arith.constant 0 : i32
    return %c0_i32, %c0_i32_0 : i32, i32
  }
  func.func @transform_9(%arg0: i32, %arg1: i32) -> (i32, i32) {
    %c0_i32 = arith.constant 0 : i32
    %c0_i32_0 = arith.constant 0 : i32
    %c0_i32_1 = arith.constant 0 : i32
    return %c0_i32, %c0_i32_0 : i32, i32
  }
  func.func @transform_10(%arg0: i32, %arg1: i32) -> (i32, i32) {
    %c0_i32 = arith.constant 0 : i32
    %c0_i32_0 = arith.constant 0 : i32
    %c0_i32_1 = arith.constant 0 : i32
    return %c0_i32, %c0_i32_0 : i32, i32
  }
  func.func @transform_11(%arg0: i32, %arg1: i32) -> (i32, i32) {
    %c0_i32 = arith.constant 0 : i32
    %c0_i32_0 = arith.constant 0 : i32
    %c0_i32_1 = arith.constant 0 : i32
    return %c0_i32, %c0_i32_0 : i32, i32
  }
  func.func @transform_12(%arg0: i32, %arg1: i32) -> (i32, i32) {
    %c0_i32 = arith.constant 0 : i32
    %c0_i32_0 = arith.constant 0 : i32
    %c0_i32_1 = arith.constant 0 : i32
    return %c0_i32, %c0_i32_0 : i32, i32
  }
  func.func @transform_13(%arg0: i32, %arg1: i32) -> (i32, i32) {
    %c0_i32 = arith.constant 0 : i32
    %c0_i32_0 = arith.constant 0 : i32
    %c0_i32_1 = arith.constant 0 : i32
    return %c0_i32, %c0_i32_0 : i32, i32
  }
  func.func @transform_14(%arg0: i32, %arg1: i32) -> (i32, i32) {
    %c0_i32 = arith.constant 0 : i32
    %c0_i32_0 = arith.constant 0 : i32
    %c0_i32_1 = arith.constant 0 : i32
    return %c0_i32, %c0_i32_0 : i32, i32
  }
  func.func @transform_15(%arg0: i32, %arg1: i32) -> (i32, i32, i32) {
    %c0_i32 = arith.constant 0 : i32
    %c0_i32_0 = arith.constant 0 : i32
    return %arg1, %arg0, %c0_i32 : i32, i32, i32
  }
  func.func @transform_16(%arg0: i32, %arg1: i32) -> (i32, i32) {
    %c0_i32 = arith.constant 0 : i32
    %c0_i32_0 = arith.constant 0 : i32
    return %arg0, %c0_i32 : i32, i32
  }
}

</mosaic_0001>

<llo_original>
// kernel: tpu_custom_call.1
$region0: #{tpu_custom_call.1}
  #allocation0 [shape = 'u32[]', space=smem, size = 0x4, offset = 0x4, fixed_abs, tag = 'smem constant byte address 0x4 - core index']
  #allocation1 [shape = 'u32[144,128]{1,0:T(1,128)}', space=vmem, size = 0x12000, scoped, tag = 'internal scratch']
  #allocation2 [shape = 'f32[16,128]{1,0:T(8,128)}', space=vmem, size = 0x2000, scoped, tag = 'scratch operand']
  #allocation3 [shape = 'bf16[16,128]{1,0:T(16,128)(2,1)}', space=vmem, size = 0x1000, scoped, tag = 'scratch operand']
  #allocation4 [shape = 'bf16[16,128]{1,0:T(16,128)(2,1)}', space=vmem, size = 0x1000, scoped, tag = 'scratch operand']
  #allocation5 [shape = 'f32[1,1]{1,0:T(1,128)S(1)}', space=vmem, size = 0x200, scoped, tag = 'scoped memory for tpu_custom_call.1']
  %s0 = inlined_call_operand.vmem [shape: bf16[16,128], index: 0, kind: input, shape index: {}]
  %s1 = inlined_call_operand.vmem [shape: f32[16,128], index: 1, kind: input, shape index: {}]
  %s2 = inlined_call_operand.hbm [shape: bf16[2,128,128], index: 2, kind: input, shape index: {}]
  %s3 = inlined_call_operand.vmem [shape: s32[2,128,1], index: 3, kind: input, shape index: {}]
  %s4 = inlined_call_operand.hbm [shape: f32[2,1,128], index: 4, kind: input, shape index: {}]
  %s5 = inlined_call_operand.hbm [shape: f32[1,128], index: 5, kind: input, shape index: {}]
  %s6 = inlined_call_operand.vmem [shape: bf16[128,128], index: 6, kind: input, shape index: {}]
  %s7 = inlined_call_operand.vmem [shape: bf16[128,384], index: 7, kind: input, shape index: {}]
  %s8 = inlined_call_operand.hbm [shape: bf16[128,384], index: 8, kind: input, shape index: {}]
  %s9 = inlined_call_operand.vmem [shape: f32[1,384], index: 9, kind: input, shape index: {}]
  %s10 = inlined_call_operand.vmem [shape: f32[1,384], index: 10, kind: input, shape index: {}]
  %s11 = inlined_call_operand.vmem [shape: f32[8,128], index: 11, kind: input, shape index: {}]
  %s12 = inlined_call_operand.<no memory space> [shape: f32[1,1], index: 12, kind: input, shape index: {}]
  %s13 = inlined_call_operand.hbm [shape: bf16[128,128], index: 13, kind: input, shape index: {}]
  %s14 = inlined_call_operand.vmem [shape: f32[1,128], index: 14, kind: input, shape index: {}]
  %s15 = inlined_call_operand.hbm [shape: bf16[10,16,128], index: 15, kind: output, shape index: {0}]
  %s16 = inlined_call_operand.hbm [shape: f32[16,128], index: 16, kind: output, shape index: {1}]
  %17 = xla_tuple %s15, %s16
  %s18 = sld [smem:[#allocation0]]
  $region129: #{tpu_custom_call.1} parent=0
    _
  %s20 = ssub.s32 1, %s18
  %s21 = scalar_select 0, %s20, %s18
  %v22 = vstv %s12
  %23 = vst [vmem:[#allocation5] sm:$0x1] %v22
  $region1: #{tpu_custom_call.1} parent=0
    #allocation6 [shape = 'u8[65536]{0}', space=vmem, size = 0x10000, scoped, tag = 'input window, operand 2, single buffered']
    #allocation7 [shape = 's32[2]{0}', space=sflag, size = 0x8, scoped, tag = 'scoped memory for tpu_custom_call.1']
    #allocation8 [shape = 's32[2]{0}', space=sflag, size = 0x8, scoped, tag = 'scoped memory for tpu_custom_call.1']
    #allocation9 [shape = 'u8[1024]{0}', space=vmem, size = 0x400, scoped, tag = 'input window, operand 4, single buffered']
    #allocation10 [shape = 's32[1]{0}', space=sflag, size = 0x4, scoped, tag = 'scoped memory for tpu_custom_call.1']
    #allocation11 [shape = 'u8[512]{0}', space=vmem, size = 0x400, scoped, tag = 'input window, operand 5, single buffered']
    #allocation12 [shape = 'u8[98304]{0}', space=vmem, size = 0x18000, scoped, tag = 'input window, operand 8, single buffered']
    #allocation13 [shape = 's32[1]{0}', space=sflag, size = 0x4, scoped, tag = 'scoped memory for tpu_custom_call.1']
    #allocation14 [shape = 'u8[32768]{0}', space=vmem, size = 0x8000, scoped, tag = 'input window, operand 13, single buffered']
    #allocation15 [shape = 'u8[8192]{0}', space=vmem, size = 0x2000, scoped, tag = 'output window, operand 0']
    #allocation16 [shape = 'u8[8192]{0}', space=vmem, size = 0x2000, scoped, tag = 'output window, operand 1, single buffered']
    #allocation17 [shape = 's32[1]{0}', space=sflag, size = 0x4, scoped, tag = 'scoped memory for tpu_custom_call.1']
    %24 = vsyncpa [#allocation7], 0
    %25 = vsyncpa [#allocation10], 0
    %26 = vsyncpa [#allocation13], 0
    %27 = vsyncpa [#allocation8], 0
    %s28 = scalar_lea.sflag [#allocation8], 1
    %29 = vsyncpa %s28, 0
    %30 = vsyncpa [#allocation17], 0
    loop: start=0, step=1, limit=12
    $region2: #{tpu_custom_call.1} parent=1 // loop_pre_header
      _
    $region3: #{tpu_custom_call.1} parent=1 // loop_header
      %s32 = sphi 0, %s36
      %p33 = scmp.ge.s32.totalorder %s32, 12
      %s39 = sphi 0, %s51
      %s40 = sphi 0, %s47
      %s41 = sphi 0, %s39
      %s42 = sphi 0, %s40
      %s43 = sphi 0, %s41
      %s44 = sphi 0, %s42
      %s54 = sphi 0, %s56
      %s57 = sphi 0, %s54
      %s58 = sphi 0, %s57
      %s74 = sphi 0, %s58
      %s80 = sphi 0, %s82
      %s83 = sphi 0, %s80
      %s84 = sphi 0, %s83
      %s100 = sphi 0, %s84
      %s106 = sphi 0, %s108
      %s109 = sphi 0, %s106
      %s110 = sphi 0, %s109
      %s126 = sphi 0, %s110
      %s132 = sphi 0, %s134
      %s135 = sphi 0, %s132
      %s136 = sphi 0, %s135
      %s152 = sphi 0, %s136
      %s158 = sphi 0, %s160
      %s161 = sphi 0, %s158
      %s162 = sphi 0, %s161
      %s178 = sphi 0, %s162
      %s182 = sphi 0, %s182
      %s184 = sphi 0, %s182
      %s185 = sphi 0, %s184
      %s199 = sphi 0, %s185
      %s203 = sphi 0, %s203
      %s205 = sphi 0, %s203
      %s206 = sphi 0, %s205
      %s220 = sphi 0, %s206
      %s224 = sphi 0, %s224
      %s226 = sphi 0, %s224
      %s227 = sphi 0, %s226
      %s241 = sphi 0, %s227
      %s245 = sphi 0, %s245
      %s247 = sphi 0, %s245
      %s248 = sphi 0, %s247
      %s262 = sphi 0, %s248
      %s266 = sphi 0, %s266
      %s268 = sphi 0, %s266
      %s269 = sphi 0, %s268
      %s283 = sphi 0, %s269
      %s287 = sphi 0, %s287
      %s289 = sphi 0, %s287
      %s290 = sphi 0, %s289
      %s304 = sphi 0, %s290
      %s308 = sphi 0, %s308
      %s310 = sphi 0, %s308
      %s311 = sphi 0, %s310
      %s325 = sphi 0, %s311
      %s329 = sphi 0, %s329
      %s331 = sphi 0, %s329
      %s332 = sphi 0, %s331
      %s346 = sphi 0, %s332
      %s350 = sphi 0, %s350
      %s352 = sphi 0, %s350
      %s353 = sphi 0, %s352
      %s367 = sphi 0, %s353
      %s371 = sphi 0, %s371
      %s373 = sphi 0, %s371
      %s374 = sphi 0, %s373
      %s388 = sphi 0, %s374
      %s396 = sphi 0, %s398
      %s399 = sphi 0, %s396
      %s400 = sphi 0, %s399
      %s416 = sphi 0, %s400
      %s422 = sphi 0, %s424
      %s425 = sphi 0, %s422
      %s426 = sphi 0, %s425
      %s442 = sphi 0, %s426
    $region4: #{tpu_custom_call.1} parent=1 // loop_header_branch
      %35 = sbr.rel (%p33) target = $region8
    $region5: #{tpu_custom_call.1} parent=1 // loop_body
      %s37 = ssub.s32 %s32, 1
      %s38 = ssub.s32 %s32, 2
      %s45 = sadd.s32 1, %s40
      %p46 = scmp.ge.s32.totalorder %s45, 10
      %s47 = scalar_select %p46, 0, %s45
      %s48 = sadd.s32 1, %s39
      %s49 = scalar_select %p46, %s48, %s39
      %p50 = scmp.ge.s32.totalorder %s49, 1
      %s51 = scalar_select %p50, 0, %s49
      %s52 = ssub.s32 %s39, %s51
      %p53 = scmp.eq.s32.totalorder %s52, 0
      %s55 = sadd.s32 %s54, 1
      %s56 = scalar_select %p53, %s54, %s55
      %p59 = pneg %p53
      %p60 = scmp.eq.s32.totalorder %s32, 9
      %p61 = por %p59, %p60
      %p62 = scmp.ne.s32.totalorder %s54, %s57
      %p63 = scmp.eq.s32.totalorder %s32, 0
      %p64 = por %p62, %p63
      %p65 = scmp.ne.s32.totalorder %s54, %s57
      %p66 = scmp.eq.s32.totalorder %s37, 9
      %p67 = por %p65, %p66
      %p68 = scmp.ne.s32.totalorder %s57, %s58
      %p69 = scmp.eq.s32.totalorder %s37, 0
      %p70 = por %p68, %p69
      %p71 = scmp.ne.s32.totalorder %s57, %s58
      %p72 = scmp.eq.s32.totalorder %s38, 9
      %p73 = por %p71, %p72
      %p75 = scmp.ne.s32.totalorder %s58, %s74
      %p76 = scmp.eq.s32.totalorder %s38, 0
      %p77 = por %p75, %p76
      %s78 = ssub.s32 %s39, %s51
      %p79 = scmp.eq.s32.totalorder %s78, 0
      %s81 = sadd.s32 %s80, 1
      %s82 = scalar_select %p79, %s80, %s81
      %p85 = pneg %p79
      %p86 = scmp.eq.s32.totalorder %s32, 9
      %p87 = por %p85, %p86
      %p88 = scmp.ne.s32.totalorder %s80, %s83
      %p89 = scmp.eq.s32.totalorder %s32, 0
      %p90 = por %p88, %p89
      %p91 = scmp.ne.s32.totalorder %s80, %s83
      %p92 = scmp.eq.s32.totalorder %s37, 9
      %p93 = por %p91, %p92
      %p94 = scmp.ne.s32.totalorder %s83, %s84
      %p95 = scmp.eq.s32.totalorder %s37, 0
      %p96 = por %p94, %p95
      %p97 = scmp.ne.s32.totalorder %s83, %s84
      %p98 = scmp.eq.s32.totalorder %s38, 9
      %p99 = por %p97, %p98
      %p101 = scmp.ne.s32.totalorder %s84, %s100
      %p102 = scmp.eq.s32.totalorder %s38, 0
      %p103 = por %p101, %p102
      %s104 = ssub.s32 %s39, %s51
      %p105 = scmp.eq.s32.totalorder %s104, 0
      %s107 = sadd.s32 %s106, 1
      %s108 = scalar_select %p105, %s106, %s107
      %p111 = pneg %p105
      %p112 = scmp.eq.s32.totalorder %s32, 9
      %p113 = por %p111, %p112
      %p114 = scmp.ne.s32.totalorder %s106, %s109
      %p115 = scmp.eq.s32.totalorder %s32, 0
      %p116 = por %p114, %p115
      %p117 = scmp.ne.s32.totalorder %s106, %s109
      %p118 = scmp.eq.s32.totalorder %s37, 9
      %p119 = por %p117, %p118
      %p120 = scmp.ne.s32.totalorder %s109, %s110
      %p121 = scmp.eq.s32.totalorder %s37, 0
      %p122 = por %p120, %p121
      %p123 = scmp.ne.s32.totalorder %s109, %s110
      %p124 = scmp.eq.s32.totalorder %s38, 9
      %p125 = por %p123, %p124
      %p127 = scmp.ne.s32.totalorder %s110, %s126
      %p128 = scmp.eq.s32.totalorder %s38, 0
      %p129 = por %p127, %p128
      %s130 = ssub.s32 %s39, %s51
      %p131 = scmp.eq.s32.totalorder %s130, 0
      %s133 = sadd.s32 %s132, 1
      %s134 = scalar_select %p131, %s132, %s133
      %p137 = pneg %p131
      %p138 = scmp.eq.s32.totalorder %s32, 9
      %p139 = por %p137, %p138
      %p140 = scmp.ne.s32.totalorder %s132, %s135
      %p141 = scmp.eq.s32.totalorder %s32, 0
      %p142 = por %p140, %p141
      %p143 = scmp.ne.s32.totalorder %s132, %s135
      %p144 = scmp.eq.s32.totalorder %s37, 9
      %p145 = por %p143, %p144
      %p146 = scmp.ne.s32.totalorder %s135, %s136
      %p147 = scmp.eq.s32.totalorder %s37, 0
      %p148 = por %p146, %p147
      %p149 = scmp.ne.s32.totalorder %s135, %s136
      %p150 = scmp.eq.s32.totalorder %s38, 9
      %p151 = por %p149, %p150
      %p153 = scmp.ne.s32.totalorder %s136, %s152
      %p154 = scmp.eq.s32.totalorder %s38, 0
      %p155 = por %p153, %p154
      %s156 = ssub.s32 %s39, %s51
      %p157 = scmp.eq.s32.totalorder %s156, 0
      %s159 = sadd.s32 %s158, 1
      %s160 = scalar_select %p157, %s158, %s159
      %p163 = pneg %p157
      %p164 = scmp.eq.s32.totalorder %s32, 9
      %p165 = por %p163, %p164
      %p166 = scmp.ne.s32.totalorder %s158, %s161
      %p167 = scmp.eq.s32.totalorder %s32, 0
      %p168 = por %p166, %p167
      %p169 = scmp.ne.s32.totalorder %s158, %s161
      %p170 = scmp.eq.s32.totalorder %s37, 9
      %p171 = por %p169, %p170
      %p172 = scmp.ne.s32.totalorder %s161, %s162
      %p173 = scmp.eq.s32.totalorder %s37, 0
      %p174 = por %p172, %p173
      %p175 = scmp.ne.s32.totalorder %s161, %s162
      %p176 = scmp.eq.s32.totalorder %s38, 9
      %p177 = por %p175, %p176
      %p179 = scmp.ne.s32.totalorder %s162, %s178
      %p180 = scmp.eq.s32.totalorder %s38, 0
      %p181 = por %p179, %p180
      %s183 = sadd.s32 %s182, 1
      %p186 = scmp.eq.s32.totalorder %s32, 9
      %p187 = scmp.ne.s32.totalorder %s182, %s184
      %p188 = scmp.eq.s32.totalorder %s32, 0
      %p189 = por %p187, %p188
      %p190 = scmp.ne.s32.totalorder %s182, %s184
      %p191 = scmp.eq.s32.totalorder %s37, 9
      %p192 = por %p190, %p191
      %p193 = scmp.ne.s32.totalorder %s184, %s185
      %p194 = scmp.eq.s32.totalorder %s37, 0
      %p195 = por %p193, %p194
      %p196 = scmp.ne.s32.totalorder %s184, %s185
      %p197 = scmp.eq.s32.totalorder %s38, 9
      %p198 = por %p196, %p197
      %p200 = scmp.ne.s32.totalorder %s185, %s199
      %p201 = scmp.eq.s32.totalorder %s38, 0
      %p202 = por %p200, %p201
      %s204 = sadd.s32 %s203, 1
      %p207 = scmp.eq.s32.totalorder %s32, 9
      %p208 = scmp.ne.s32.totalorder %s203, %s205
      %p209 = scmp.eq.s32.totalorder %s32, 0
      %p210 = por %p208, %p209
      %p211 = scmp.ne.s32.totalorder %s203, %s205
      %p212 = scmp.eq.s32.totalorder %s37, 9
      %p213 = por %p211, %p212
      %p214 = scmp.ne.s32.totalorder %s205, %s206
      %p215 = scmp.eq.s32.totalorder %s37, 0
      %p216 = por %p214, %p215
      %p217 = scmp.ne.s32.totalorder %s205, %s206
      %p218 = scmp.eq.s32.totalorder %s38, 9
      %p219 = por %p217, %p218
      %p221 = scmp.ne.s32.totalorder %s206, %s220
      %p222 = scmp.eq.s32.totalorder %s38, 0
      %p223 = por %p221, %p222
      %s225 = sadd.s32 %s224, 1
      %p228 = scmp.eq.s32.totalorder %s32, 9
      %p229 = scmp.ne.s32.totalorder %s224, %s226
      %p230 = scmp.eq.s32.totalorder %s32, 0
      %p231 = por %p229, %p230
      %p232 = scmp.ne.s32.totalorder %s224, %s226
      %p233 = scmp.eq.s32.totalorder %s37, 9
      %p234 = por %p232, %p233
      %p235 = scmp.ne.s32.totalorder %s226, %s227
      %p236 = scmp.eq.s32.totalorder %s37, 0
      %p237 = por %p235, %p236
      %p238 = scmp.ne.s32.totalorder %s226, %s227
      %p239 = scmp.eq.s32.totalorder %s38, 9
      %p240 = por %p238, %p239
      %p242 = scmp.ne.s32.totalorder %s227, %s241
      %p243 = scmp.eq.s32.totalorder %s38, 0
      %p244 = por %p242, %p243
      %s246 = sadd.s32 %s245, 1
      %p249 = scmp.eq.s32.totalorder %s32, 9
      %p250 = scmp.ne.s32.totalorder %s245, %s247
      %p251 = scmp.eq.s32.totalorder %s32, 0
      %p252 = por %p250, %p251
      %p253 = scmp.ne.s32.totalorder %s245, %s247
      %p254 = scmp.eq.s32.totalorder %s37, 9
      %p255 = por %p253, %p254
      %p256 = scmp.ne.s32.totalorder %s247, %s248
      %p257 = scmp.eq.s32.totalorder %s37, 0
      %p258 = por %p256, %p257
      %p259 = scmp.ne.s32.totalorder %s247, %s248
      %p260 = scmp.eq.s32.totalorder %s38, 9
      %p261 = por %p259, %p260
      %p263 = scmp.ne.s32.totalorder %s248, %s262
      %p264 = scmp.eq.s32.totalorder %s38, 0
      %p265 = por %p263, %p264
      %s267 = sadd.s32 %s266, 1
      %p270 = scmp.eq.s32.totalorder %s32, 9
      %p271 = scmp.ne.s32.totalorder %s266, %s268
      %p272 = scmp.eq.s32.totalorder %s32, 0
      %p273 = por %p271, %p272
      %p274 = scmp.ne.s32.totalorder %s266, %s268
      %p275 = scmp.eq.s32.totalorder %s37, 9
      %p276 = por %p274, %p275
      %p277 = scmp.ne.s32.totalorder %s268, %s269
      %p278 = scmp.eq.s32.totalorder %s37, 0
      %p279 = por %p277, %p278
      %p280 = scmp.ne.s32.totalorder %s268, %s269
      %p281 = scmp.eq.s32.totalorder %s38, 9
      %p282 = por %p280, %p281
      %p284 = scmp.ne.s32.totalorder %s269, %s283
      %p285 = scmp.eq.s32.totalorder %s38, 0
      %p286 = por %p284, %p285
      %s288 = sadd.s32 %s287, 1
      %p291 = scmp.eq.s32.totalorder %s32, 9
      %p292 = scmp.ne.s32.totalorder %s287, %s289
      %p293 = scmp.eq.s32.totalorder %s32, 0
      %p294 = por %p292, %p293
      %p295 = scmp.ne.s32.totalorder %s287, %s289
      %p296 = scmp.eq.s32.totalorder %s37, 9
      %p297 = por %p295, %p296
      %p298 = scmp.ne.s32.totalorder %s289, %s290
      %p299 = scmp.eq.s32.totalorder %s37, 0
      %p300 = por %p298, %p299
      %p301 = scmp.ne.s32.totalorder %s289, %s290
      %p302 = scmp.eq.s32.totalorder %s38, 9
      %p303 = por %p301, %p302
      %p305 = scmp.ne.s32.totalorder %s290, %s304
      %p306 = scmp.eq.s32.totalorder %s38, 0
      %p307 = por %p305, %p306
      %s309 = sadd.s32 %s308, 1
      %p312 = scmp.eq.s32.totalorder %s32, 9
      %p313 = scmp.ne.s32.totalorder %s308, %s310
      %p314 = scmp.eq.s32.totalorder %s32, 0
      %p315 = por %p313, %p314
      %p316 = scmp.ne.s32.totalorder %s308, %s310
      %p317 = scmp.eq.s32.totalorder %s37, 9
      %p318 = por %p316, %p317
      %p319 = scmp.ne.s32.totalorder %s310, %s311
      %p320 = scmp.eq.s32.totalorder %s37, 0
      %p321 = por %p319, %p320
      %p322 = scmp.ne.s32.totalorder %s310, %s311
      %p323 = scmp.eq.s32.totalorder %s38, 9
      %p324 = por %p322, %p323
      %p326 = scmp.ne.s32.totalorder %s311, %s325
      %p327 = scmp.eq.s32.totalorder %s38, 0
      %p328 = por %p326, %p327
      %s330 = sadd.s32 %s329, 1
      %p333 = scmp.eq.s32.totalorder %s32, 9
      %p334 = scmp.ne.s32.totalorder %s329, %s331
      %p335 = scmp.eq.s32.totalorder %s32, 0
      %p336 = por %p334, %p335
      %p337 = scmp.ne.s32.totalorder %s329, %s331
      %p338 = scmp.eq.s32.totalorder %s37, 9
      %p339 = por %p337, %p338
      %p340 = scmp.ne.s32.totalorder %s331, %s332
      %p341 = scmp.eq.s32.totalorder %s37, 0
      %p342 = por %p340, %p341
      %p343 = scmp.ne.s32.totalorder %s331, %s332
      %p344 = scmp.eq.s32.totalorder %s38, 9
      %p345 = por %p343, %p344
      %p347 = scmp.ne.s32.totalorder %s332, %s346
      %p348 = scmp.eq.s32.totalorder %s38, 0
      %p349 = por %p347, %p348
      %s351 = sadd.s32 %s350, 1
      %p354 = scmp.eq.s32.totalorder %s32, 9
      %p355 = scmp.ne.s32.totalorder %s350, %s352
      %p356 = scmp.eq.s32.totalorder %s32, 0
      %p357 = por %p355, %p356
      %p358 = scmp.ne.s32.totalorder %s350, %s352
      %p359 = scmp.eq.s32.totalorder %s37, 9
      %p360 = por %p358, %p359
      %p361 = scmp.ne.s32.totalorder %s352, %s353
      %p362 = scmp.eq.s32.totalorder %s37, 0
      %p363 = por %p361, %p362
      %p364 = scmp.ne.s32.totalorder %s352, %s353
      %p365 = scmp.eq.s32.totalorder %s38, 9
      %p366 = por %p364, %p365
      %p368 = scmp.ne.s32.totalorder %s353, %s367
      %p369 = scmp.eq.s32.totalorder %s38, 0
      %p370 = por %p368, %p369
      %s372 = sadd.s32 %s371, 1
      %p375 = scmp.eq.s32.totalorder %s32, 9
      %p376 = scmp.ne.s32.totalorder %s371, %s373
      %p377 = scmp.eq.s32.totalorder %s32, 0
      %p378 = por %p376, %p377
      %p379 = scmp.ne.s32.totalorder %s371, %s373
      %p380 = scmp.eq.s32.totalorder %s37, 9
      %p381 = por %p379, %p380
      %p382 = scmp.ne.s32.totalorder %s373, %s374
      %p383 = scmp.eq.s32.totalorder %s37, 0
      %p384 = por %p382, %p383
      %p385 = scmp.ne.s32.totalorder %s373, %s374
      %p386 = scmp.eq.s32.totalorder %s38, 9
      %p387 = por %p385, %p386
      %p389 = scmp.ne.s32.totalorder %s374, %s388
      %p390 = scmp.eq.s32.totalorder %s38, 0
      %p391 = por %p389, %p390
      %s392 = ssub.s32 %s40, %s47
      %s393 = ssub.s32 %s39, %s51
      %s394 = sor.u32 %s392, %s393
      %p395 = scmp.eq.s32.totalorder %s394, 0
      %s397 = sadd.s32 %s396, 1
      %s398 = scalar_select %p395, %s396, %s397
      %p401 = pneg %p395
      %p402 = scmp.eq.s32.totalorder %s32, 9
      %p403 = por %p401, %p402
      %p404 = scmp.ne.s32.totalorder %s396, %s399
      %p405 = scmp.eq.s32.totalorder %s32, 0
      %p406 = por %p404, %p405
      %p407 = scmp.ne.s32.totalorder %s396, %s399
      %p408 = scmp.eq.s32.totalorder %s37, 9
      %p409 = por %p407, %p408
      %p410 = scmp.ne.s32.totalorder %s399, %s400
      %p411 = scmp.eq.s32.totalorder %s37, 0
      %p412 = por %p410, %p411
      %p413 = scmp.ne.s32.totalorder %s399, %s400
      %p414 = scmp.eq.s32.totalorder %s38, 9
      %p415 = por %p413, %p414
      %p417 = scmp.ne.s32.totalorder %s400, %s416
      %p418 = scmp.eq.s32.totalorder %s38, 0
      %p419 = por %p417, %p418
      %s420 = ssub.s32 %s39, %s51
      %p421 = scmp.eq.s32.totalorder %s420, 0
      %s423 = sadd.s32 %s422, 1
      %s424 = scalar_select %p421, %s422, %s423
      %p427 = pneg %p421
      %p428 = scmp.eq.s32.totalorder %s32, 9
      %p429 = por %p427, %p428
      %p430 = scmp.ne.s32.totalorder %s422, %s425
      %p431 = scmp.eq.s32.totalorder %s32, 0
      %p432 = por %p430, %p431
      %p433 = scmp.ne.s32.totalorder %s422, %s425
      %p434 = scmp.eq.s32.totalorder %s37, 9
      %p435 = por %p433, %p434
      %p436 = scmp.ne.s32.totalorder %s425, %s426
      %p437 = scmp.eq.s32.totalorder %s37, 0
      %p438 = por %p436, %p437
      %p439 = scmp.ne.s32.totalorder %s425, %s426
      %p440 = scmp.eq.s32.totalorder %s38, 9
      %p441 = por %p439, %p440
      %p443 = scmp.ne.s32.totalorder %s426, %s442
      %p444 = scmp.eq.s32.totalorder %s38, 0
      %p445 = por %p443, %p444
      %p446 = scmp.le.s32.totalorder 1, %s32
      %p447 = scmp.lt.s32.totalorder %s32, 11
      %p448 = pnand %p446, %p447
      %p449 = pneg %p448
      // Predicated region
      $region9: #{tpu_custom_call.1} parent=5 // pred_check
        _
      $region10: #{tpu_custom_call.1} parent=5 // pred_check_branch
        %451 = sbr.rel (%p448) target = $region12
      $region11: #{tpu_custom_call.1} parent=5 // pred_region
        %s452 = ssub.s32 %s32, 1
        // Predicated region
        $region13: #{tpu_custom_call.1} parent=11 // pred_check
          %p453 = pneg %p70
        $region14: #{tpu_custom_call.1} parent=11 // pred_check_branch
          %455 = sbr.rel (%p453) target = $region16
        $region15: #{tpu_custom_call.1} parent=11 // pred_region
          %s456 = smul.u32 2, %s41
          %p457 = scmp.lt.s32.totalorder %s456, 1
          %s458 = scalar_select %p457, %s456, 1
          %s459 = smul.addr %s458, 4
          %s460 = scalar_lea.vmem %s0, %s459
          %s461 = smul.u32 2, %s41
        $region16: #{tpu_custom_call.1} parent=11 // pred_fallthru
          _
        // Predicated region
        $region17: #{tpu_custom_call.1} parent=11 // pred_check
          %p462 = pneg %p96
        $region18: #{tpu_custom_call.1} parent=11 // pred_check_branch
          %464 = sbr.rel (%p462) target = $region20
        $region19: #{tpu_custom_call.1} parent=11 // pred_region
          %s465 = smul.u32 2, %s41
          %p466 = scmp.lt.s32.totalorder %s465, 1
          %s467 = scalar_select %p466, %s465, 1
          %s468 = smul.addr %s467, 8
          %s469 = scalar_lea.vmem %s1, %s468
          %s470 = smul.u32 2, %s41
        $region20: #{tpu_custom_call.1} parent=11 // pred_fallthru
          _
        // Predicated region
        $region21: #{tpu_custom_call.1} parent=11 // pred_check
          %p471 = pneg %p122
        $region22: #{tpu_custom_call.1} parent=11 // pred_check_branch
          %473 = sbr.rel (%p471) target = $region24
        $region23: #{tpu_custom_call.1} parent=11 // pred_region
          %s474 = smul.u32 2, %s41
          %s476 = ssub.s32 2048, 2048
          %477 = vsyncadd [#allocation7], %s476
          %s478 = smul.addr %s474, 16
          %s479 = smul.addr %s478, 64
          %s480 = scalar_lea.hbm %s2, %s479
          %s481 = sshll.u32 [#allocation6], 4
          %s482 = int_to_ptr.vmem [resolvable:$true] %s481
          %487 = dma.hbm_to_vmem [thread:$0]  %s480, 2048, %s482, [#allocation7], 64, 64, 4
        $region24: #{tpu_custom_call.1} parent=11 // pred_fallthru
          _
        // Predicated region
        $region25: #{tpu_custom_call.1} parent=11 // pred_check
          %p488 = pneg %p148
        $region26: #{tpu_custom_call.1} parent=11 // pred_check_branch
          %490 = sbr.rel (%p488) target = $region28
        $region27: #{tpu_custom_call.1} parent=11 // pred_region
          %s491 = smul.u32 2, %s41
          %p492 = scmp.lt.s32.totalorder %s491, 1
          %s493 = scalar_select %p492, %s491, 1
          %s494 = smul.addr %s493, 16
          %s495 = smul.addr %s494, 8
          %s496 = scalar_lea.vmem %s3, %s495
          %s497 = smul.u32 2, %s41
        $region28: #{tpu_custom_call.1} parent=11 // pred_fallthru
          _
        // Predicated region
        $region29: #{tpu_custom_call.1} parent=11 // pred_check
          %p498 = pneg %p174
        $region30: #{tpu_custom_call.1} parent=11 // pred_check_branch
          %500 = sbr.rel (%p498) target = $region32
        $region31: #{tpu_custom_call.1} parent=11 // pred_region
          %s501 = smul.u32 2, %s41
          %s503 = ssub.s32 32, 32
          %504 = vsyncadd [#allocation10], %s503
          %s505 = smul.addr %s501, 16
          %s506 = scalar_lea.hbm %s4, %s505
          %s507 = sshll.u32 [#allocation9], 4
          %s508 = int_to_ptr.vmem [resolvable:$true] %s507
          %513 = dma.hbm_to_vmem [thread:$0]  %s506, 32, %s508, [#allocation10], 16, 16, 1
        $region32: #{tpu_custom_call.1} parent=11 // pred_fallthru
          _
        // Predicated region
        $region33: #{tpu_custom_call.1} parent=11 // pred_check
          %p514 = pneg %p195
        $region34: #{tpu_custom_call.1} parent=11 // pred_check_branch
          %516 = sbr.rel (%p514) target = $region36
        $region35: #{tpu_custom_call.1} parent=11 // pred_region
          %s518 = ssub.s32 16, 16
          %519 = vsyncadd [#allocation10], %s518
          %s521 = sshll.u32 [#allocation11], 4
          %s522 = int_to_ptr.vmem [resolvable:$true] %s521
          %524 = dma.hbm_to_vmem [thread:$0]  %s5, 16, %s522, [#allocation10]
        $region36: #{tpu_custom_call.1} parent=11 // pred_fallthru
          _
        // Predicated region
        $region37: #{tpu_custom_call.1} parent=11 // pred_check
          %p525 = pneg %p216
        $region38: #{tpu_custom_call.1} parent=11 // pred_check_branch
          %527 = sbr.rel (%p525) target = $region40
        $region39: #{tpu_custom_call.1} parent=11 // pred_region
          _
        $region40: #{tpu_custom_call.1} parent=11 // pred_fallthru
          _
        // Predicated region
        $region41: #{tpu_custom_call.1} parent=11 // pred_check
          %p528 = pneg %p237
        $region42: #{tpu_custom_call.1} parent=11 // pred_check_branch
          %530 = sbr.rel (%p528) target = $region44
        $region43: #{tpu_custom_call.1} parent=11 // pred_region
          _
        $region44: #{tpu_custom_call.1} parent=11 // pred_fallthru
          _
        // Predicated region
        $region45: #{tpu_custom_call.1} parent=11 // pred_check
          %p531 = pneg %p258
        $region46: #{tpu_custom_call.1} parent=11 // pred_check_branch
          %533 = sbr.rel (%p531) target = $region48
        $region47: #{tpu_custom_call.1} parent=11 // pred_region
          %s535 = ssub.s32 3072, 3072
          %536 = vsyncadd [#allocation13], %s535
          %s537 = sshll.u32 [#allocation12], 4
          %s538 = int_to_ptr.vmem [resolvable:$true] %s537
          %543 = dma.hbm_to_vmem [thread:$0]  %s8, 3072, %s538, [#allocation13], 192, 192, 12
        $region48: #{tpu_custom_call.1} parent=11 // pred_fallthru
          _
        // Predicated region
        $region49: #{tpu_custom_call.1} parent=11 // pred_check
          %p544 = pneg %p279
        $region50: #{tpu_custom_call.1} parent=11 // pred_check_branch
          %546 = sbr.rel (%p544) target = $region52
        $region51: #{tpu_custom_call.1} parent=11 // pred_region
          _
        $region52: #{tpu_custom_call.1} parent=11 // pred_fallthru
          _
        // Predicated region
        $region53: #{tpu_custom_call.1} parent=11 // pred_check
          %p547 = pneg %p300
        $region54: #{tpu_custom_call.1} parent=11 // pred_check_branch
          %549 = sbr.rel (%p547) target = $region56
        $region55: #{tpu_custom_call.1} parent=11 // pred_region
          _
        $region56: #{tpu_custom_call.1} parent=11 // pred_fallthru
          _
        // Predicated region
        $region57: #{tpu_custom_call.1} parent=11 // pred_check
          %p550 = pneg %p321
        $region58: #{tpu_custom_call.1} parent=11 // pred_check_branch
          %552 = sbr.rel (%p550) target = $region60
        $region59: #{tpu_custom_call.1} parent=11 // pred_region
          _
        $region60: #{tpu_custom_call.1} parent=11 // pred_fallthru
          _
        // Predicated region
        $region61: #{tpu_custom_call.1} parent=11 // pred_check
          %p553 = pneg %p342
        $region62: #{tpu_custom_call.1} parent=11 // pred_check_branch
          %555 = sbr.rel (%p553) target = $region64
        $region63: #{tpu_custom_call.1} parent=11 // pred_region
          _
        $region64: #{tpu_custom_call.1} parent=11 // pred_fallthru
          _
        // Predicated region
        $region65: #{tpu_custom_call.1} parent=11 // pred_check
          %p556 = pneg %p363
        $region66: #{tpu_custom_call.1} parent=11 // pred_check_branch
          %558 = sbr.rel (%p556) target = $region68
        $region67: #{tpu_custom_call.1} parent=11 // pred_region
          %s560 = ssub.s32 1024, 1024
          %561 = vsyncadd [#allocation13], %s560
          %s562 = sshll.u32 [#allocation14], 4
          %s563 = int_to_ptr.vmem [resolvable:$true] %s562
          %568 = dma.hbm_to_vmem [thread:$0]  %s13, 1024, %s563, [#allocation13], 64, 64, 4
        $region68: #{tpu_custom_call.1} parent=11 // pred_fallthru
          _
        // Predicated region
        $region69: #{tpu_custom_call.1} parent=11 // pred_check
          %p569 = pneg %p384
        $region70: #{tpu_custom_call.1} parent=11 // pred_check_branch
          %571 = sbr.rel (%p569) target = $region72
        $region71: #{tpu_custom_call.1} parent=11 // pred_region
          _
        $region72: #{tpu_custom_call.1} parent=11 // pred_fallthru
          _
      $region12: #{tpu_custom_call.1} parent=5 // pred_fallthru
        _
      %p572 = scmp.lt.s32.totalorder %s32, 10
      // Predicated region
      $region73: #{tpu_custom_call.1} parent=5 // pred_check
        %p573 = pneg %p572
      $region74: #{tpu_custom_call.1} parent=5 // pred_check_branch
        %575 = sbr.rel (%p573) target = $region76
      $region75: #{tpu_custom_call.1} parent=5 // pred_region
        _
      $region76: #{tpu_custom_call.1} parent=5 // pred_fallthru
        _
      %p576 = scmp.le.s32.totalorder 1, %s32
      %p577 = scmp.lt.s32.totalorder %s32, 11
      %p578 = pnand %p576, %p577
      %p579 = pneg %p578
      // Predicated region
      $region77: #{tpu_custom_call.1} parent=5 // pred_check
        _
      $region78: #{tpu_custom_call.1} parent=5 // pred_check_branch
        %581 = sbr.rel (%p578) target = $region80
      $region79: #{tpu_custom_call.1} parent=5 // pred_region
        %s582 = ssub.s32 %s32, 1
        // Predicated region
        $region81: #{tpu_custom_call.1} parent=79 // pred_check
          %p583 = pneg %p122
        $region82: #{tpu_custom_call.1} parent=79 // pred_check_branch
          %585 = sbr.rel (%p583) target = $region84
        $region83: #{tpu_custom_call.1} parent=79 // pred_region
          %586 = dma.done [#allocation7], 2048
        $region84: #{tpu_custom_call.1} parent=79 // pred_fallthru
          _
        // Predicated region
        $region85: #{tpu_custom_call.1} parent=79 // pred_check
          %p587 = pneg %p174
        $region86: #{tpu_custom_call.1} parent=79 // pred_check_branch
          %589 = sbr.rel (%p587) target = $region88
        $region87: #{tpu_custom_call.1} parent=79 // pred_region
          %590 = dma.done [#allocation10], 32
        $region88: #{tpu_custom_call.1} parent=79 // pred_fallthru
          _
        // Predicated region
        $region89: #{tpu_custom_call.1} parent=79 // pred_check
          %p591 = pneg %p195
        $region90: #{tpu_custom_call.1} parent=79 // pred_check_branch
          %593 = sbr.rel (%p591) target = $region92
        $region91: #{tpu_custom_call.1} parent=79 // pred_region
          %594 = dma.done [#allocation10], 16
        $region92: #{tpu_custom_call.1} parent=79 // pred_fallthru
          _
        // Predicated region
        $region93: #{tpu_custom_call.1} parent=79 // pred_check
          %p595 = pneg %p258
        $region94: #{tpu_custom_call.1} parent=79 // pred_check_branch
          %597 = sbr.rel (%p595) target = $region96
        $region95: #{tpu_custom_call.1} parent=79 // pred_region
          %598 = dma.done [#allocation13], 3072
        $region96: #{tpu_custom_call.1} parent=79 // pred_fallthru
          _
        // Predicated region
        $region97: #{tpu_custom_call.1} parent=79 // pred_check
          %p599 = pneg %p363
        $region98: #{tpu_custom_call.1} parent=79 // pred_check_branch
          %601 = sbr.rel (%p599) target = $region100
        $region99: #{tpu_custom_call.1} parent=79 // pred_region
          %602 = dma.done [#allocation13], 1024
        $region100: #{tpu_custom_call.1} parent=79 // pred_fallthru
          _
        %s603 = smul.u32 2, %s41
        %p604 = scmp.lt.s32.totalorder %s603, 1
        %s605 = scalar_select %p604, %s603, 1
        %s606 = smul.addr %s605, 4
        %s607 = scalar_lea.vmem %s0, %s606
        %p608 = pneg %p70
        %p609 = pneg %p67
        %s610 = smul.u32 2, %s41
        %p611 = scmp.lt.s32.totalorder %s610, 1
        %s612 = scalar_select %p611, %s610, 1
        %s613 = smul.addr %s612, 8
        %s614 = scalar_lea.vmem %s1, %s613
        %p615 = pneg %p96
        %p616 = pneg %p93
        %p617 = pneg %p122
        %p618 = pneg %p119
        %s619 = smul.u32 2, %s41
        %p620 = scmp.lt.s32.totalorder %s619, 1
        %s621 = scalar_select %p620, %s619, 1
        %s622 = smul.addr %s621, 16
        %s623 = smul.addr %s622, 8
        %s624 = scalar_lea.vmem %s3, %s623
        %p625 = pneg %p148
        %p626 = pneg %p145
        %p627 = pneg %p174
        %p628 = pneg %p171
        %p629 = pneg %p195
        %p630 = pneg %p192
        %p631 = pneg %p216
        %p632 = pneg %p213
        %p633 = pneg %p237
        %p634 = pneg %p234
        %p635 = pneg %p258
        %p636 = pneg %p255
        %p637 = pneg %p279
        %p638 = pneg %p276
        %p639 = pneg %p300
        %p640 = pneg %p297
        %p641 = pneg %p321
        %p642 = pneg %p318
        %p643 = pneg %p342
        %p644 = pneg %p339
        %p645 = pneg %p363
        %p646 = pneg %p360
        %p647 = pneg %p384
        %p648 = pneg %p381
        %p649 = pneg %p412
        %p650 = pneg %p409
        %s651 = sand.u32 %s399, 1
        %s652 = scalar_lea.sflag [#allocation8], %s651
        %s653 = sand.u32 %s399, 1
        %s654 = smul.addr %s653, 8
        %s655 = scalar_lea.vmem [#allocation15], %s654
        %p656 = pneg %p438
        %p657 = pneg %p435
        %s658 = smul.u32 2, %s41
        %p659 = scmp.lt.s32.totalorder %s658, 1
        %s660 = scalar_select %p659, %s658, 1
        %s661 = smul.addr %s660, 4
        %s662 = scalar_lea.vmem %s0, %s661
        %s663 = smul.u32 2, %s41
        %s664 = smul.u32 2, %s41
        %p665 = scmp.lt.s32.totalorder %s664, 1
        %s666 = scalar_select %p665, %s664, 1
        %s667 = smul.addr %s666, 8
        %s668 = scalar_lea.vmem %s1, %s667
        %s669 = smul.u32 2, %s41
        %s670 = smul.u32 2, %s41
        %s671 = smul.u32 2, %s41
        %p672 = scmp.lt.s32.totalorder %s671, 1
        %s673 = scalar_select %p672, %s671, 1
        %s674 = smul.addr %s673, 16
        %s675 = smul.addr %s674, 8
        %s676 = scalar_lea.vmem %s3, %s675
        %s677 = smul.u32 2, %s41
        %s678 = smul.u32 2, %s41
        %s679 = smul.u32 2, %s41
        %s680 = smul.u32 2, %s41
        %p682 = scmp.eq.s32.totalorder %s42, 0
        // Predicated region
        $region101: #{tpu_custom_call.1} parent=79 // pred_check
          %p683 = pneg %p682
        $region102: #{tpu_custom_call.1} parent=79 // pred_check_branch
          %685 = sbr.rel (%p683) target = $region104
        $region103: #{tpu_custom_call.1} parent=79 // pred_region
          %v686 = vld [vmem:[%s668] sm:$0xff]
          %v687 = vld [vmem:[%s668 + $0x8] sm:$0xff]
          %688 = vst [vmem:[#allocation2] sm:$0xff] %v686
          %689 = vst [vmem:[#allocation2 + $0x8] sm:$0xff] %v687
          %v690 = vpack.c.bf16 %v687, %v686
          %691 = vst [vmem:[#allocation3] sm:$0xff] %v690
          %v692 = vld [vmem:[%s662] sm:$0xf]
          %v693 = vld [vmem:[%s662 + $0x4] sm:$0xf]
          %v696 = vunpack.c.l.b16 %v692
          %v697 = vunpack.c.l.b16 %v693
          %v698 = vpack.c.b16 %v697, %v696
          %700 = vst [vmem:[#allocation4] sm:$0xff] %v698
        $region104: #{tpu_custom_call.1} parent=79 // pred_fallthru
          _
        %v701 = vld [vmem:[#allocation4] sm:$0xff]
        %v702 = vld [vmem:[#allocation2] sm:$0xff]
        %v703 = vld [vmem:[#allocation2 + $0x8] sm:$0xff]
        %v704 = vld [vmem:[#allocation3] sm:$0xff]
        %v705 = vld [vmem:[%s7] sm:$0xff]
        %v706 = vld [vmem:[%s7 + $0x8] sm:$0xf]
        %v707 = vld [vmem:[%s7 + $0xc] sm:$0xff]
        %v708 = vld [vmem:[%s7 + $0x14] sm:$0xf]
        %v709 = vld [vmem:[%s7 + $0x18] sm:$0xff]
        %v710 = vld [vmem:[%s7 + $0x20] sm:$0xf]
        %v711 = vld [vmem:[%s7 + $0x24] sm:$0xff]
        %v712 = vld [vmem:[%s7 + $0x2c] sm:$0xf]
        %v713 = vld [vmem:[%s7 + $0x30] sm:$0xff]
        %v714 = vld [vmem:[%s7 + $0x38] sm:$0xf]
        %v715 = vld [vmem:[%s7 + $0x3c] sm:$0xff]
        %v716 = vld [vmem:[%s7 + $0x44] sm:$0xf]
        %v717 = vld [vmem:[%s7 + $0x48] sm:$0xff]
        %v718 = vld [vmem:[%s7 + $0x50] sm:$0xf]
        %v719 = vld [vmem:[%s7 + $0x54] sm:$0xff]
        %v720 = vld [vmem:[%s7 + $0x5c] sm:$0xf]
        %v721 = vld [vmem:[%s7 + $0x60] sm:$0xff]
        %v722 = vld [vmem:[%s7 + $0x68] sm:$0xf]
        %v723 = vld [vmem:[%s7 + $0x6c] sm:$0xff]
        %v724 = vld [vmem:[%s7 + $0x74] sm:$0xf]
        %v725 = vld [vmem:[%s7 + $0x78] sm:$0xff]
        %v726 = vld [vmem:[%s7 + $0x80] sm:$0xf]
        %v727 = vld [vmem:[%s7 + $0x84] sm:$0xff]
        %v728 = vld [vmem:[%s7 + $0x8c] sm:$0xf]
        %v729 = vld [vmem:[%s7 + $0x90] sm:$0xff]
        %v730 = vld [vmem:[%s7 + $0x98] sm:$0xf]
        %v731 = vld [vmem:[%s7 + $0x9c] sm:$0xff]
        %v732 = vld [vmem:[%s7 + $0xa4] sm:$0xf]
        %v733 = vld [vmem:[%s7 + $0xa8] sm:$0xff]
        %v734 = vld [vmem:[%s7 + $0xb0] sm:$0xf]
        %v735 = vld [vmem:[%s7 + $0xb4] sm:$0xff]
        %v736 = vld [vmem:[%s7 + $0xbc] sm:$0xf]
        %v737 = vld [vmem:[%s9] sm:$0x7]
        %v739 = vlaneseq
        %v740 = vshrl.u32 %v739, 7
        %v741 = vsub.s32 0, %v740
        %v742 = vrot.slane %v737, %v741
        %v743 = vlaneseq
        %v744 = vshrl.u32 %v743, 7
        %v745 = vsub.s32 1, %v744
        %v746 = vrot.slane %v737, %v745
        %v747 = vlaneseq
        %v748 = vshrl.u32 %v747, 7
        %v749 = vsub.s32 2, %v748
        %v750 = vrot.slane %v737, %v749
        %v786 = vunpack.c.l.b16 %v705
        %v787 = vunpack.c.h.b16 %v705
        %v788 = vunpack.c.l.b16 %v706
        %v789 = vunpack.c.l.b16 %v707
        %v790 = vunpack.c.h.b16 %v707
        %v791 = vunpack.c.l.b16 %v708
        %v792 = vunpack.c.l.b16 %v709
        %v793 = vunpack.c.h.b16 %v709
        %v794 = vunpack.c.l.b16 %v710
        %v795 = vunpack.c.l.b16 %v711
        %v796 = vunpack.c.h.b16 %v711
        %v797 = vunpack.c.l.b16 %v712
        %v798 = vunpack.c.l.b16 %v713
        %v799 = vunpack.c.h.b16 %v713
        %v800 = vunpack.c.l.b16 %v714
        %v801 = vunpack.c.l.b16 %v715
        %v802 = vunpack.c.h.b16 %v715
        %v803 = vunpack.c.l.b16 %v716
        %v804 = vunpack.c.l.b16 %v717
        %v805 = vunpack.c.h.b16 %v717
        %v806 = vunpack.c.l.b16 %v718
        %v807 = vunpack.c.l.b16 %v719
        %v808 = vunpack.c.h.b16 %v719
        %v809 = vunpack.c.l.b16 %v720
        %v810 = vunpack.c.l.b16 %v721
        %v811 = vunpack.c.h.b16 %v721
        %v812 = vunpack.c.l.b16 %v722
        %v813 = vunpack.c.l.b16 %v723
        %v814 = vunpack.c.h.b16 %v723
        %v815 = vunpack.c.l.b16 %v724
        %v816 = vunpack.c.l.b16 %v725
        %v817 = vunpack.c.h.b16 %v725
        %v818 = vunpack.c.l.b16 %v726
        %v819 = vunpack.c.l.b16 %v727
        %v820 = vunpack.c.h.b16 %v727
        %v821 = vunpack.c.l.b16 %v728
        %v822 = vunpack.c.l.b16 %v729
        %v823 = vunpack.c.h.b16 %v729
        %v824 = vunpack.c.l.b16 %v730
        %v825 = vunpack.c.l.b16 %v731
        %v826 = vunpack.c.h.b16 %v731
        %v827 = vunpack.c.l.b16 %v732
        %v828 = vunpack.c.l.b16 %v733
        %v829 = vunpack.c.h.b16 %v733
        %v830 = vunpack.c.l.b16 %v734
        %v831 = vunpack.c.l.b16 %v735
        %v832 = vunpack.c.h.b16 %v735
        %v833 = vunpack.c.l.b16 %v736
        %v834 = vpack.c.b16 %v789, %v786
        %v835 = vpack.c.b16 %v790, %v787
        %v836 = vpack.c.b16 %v791, %v788
        %v837 = vpack.c.b16 %v795, %v792
        %v838 = vpack.c.b16 %v796, %v793
        %v839 = vpack.c.b16 %v797, %v794
        %v840 = vpack.c.b16 %v801, %v798
        %v841 = vpack.c.b16 %v802, %v799
        %v842 = vpack.c.b16 %v803, %v800
        %v843 = vpack.c.b16 %v807, %v804
        %v844 = vpack.c.b16 %v808, %v805
        %v845 = vpack.c.b16 %v809, %v806
        %v846 = vpack.c.b16 %v813, %v810
        %v847 = vpack.c.b16 %v814, %v811
        %v848 = vpack.c.b16 %v815, %v812
        %v849 = vpack.c.b16 %v819, %v816
        %v850 = vpack.c.b16 %v820, %v817
        %v851 = vpack.c.b16 %v821, %v818
        %v852 = vpack.c.b16 %v825, %v822
        %v853 = vpack.c.b16 %v826, %v823
        %v854 = vpack.c.b16 %v827, %v824
        %v855 = vpack.c.b16 %v831, %v828
        %v856 = vpack.c.b16 %v832, %v829
        %v857 = vpack.c.b16 %v833, %v830
        %882 = vmatprep.subr.bf16.mxu0 %v835
        %883 = vmatpush1.bf16.msra.mxu0 %v834
        %884 = vmatprep.subr.bf16.mxu0 %v838
        %885 = vmatpush1.bf16.msra.mxu0 %v837
        %886 = vmatprep.subr.bf16.mxu0 %v841
        %887 = vmatpush1.bf16.msra.mxu0 %v840
        %888 = vmatprep.subr.bf16.mxu0 %v844
        %889 = vmatpush1.bf16.msra.mxu0 %v843
        %890 = vmatprep.subr.bf16.mxu0 %v847
        %891 = vmatpush1.bf16.msra.mxu0 %v846
        %892 = vmatprep.subr.bf16.mxu0 %v850
        %893 = vmatpush1.bf16.msra.mxu0 %v849
        %894 = vmatprep.subr.bf16.mxu0 %v853
        %895 = vmatpush1.bf16.msra.mxu0 %v852
        %896 = vmatprep.subr.bf16.mxu0 %v856
        %897 = vmatpush1.bf16.msra.mxu0 %v855
        %898 = vmatprep.subr.bf16.mxu0 0
        %899 = vmatpush1.bf16.msra.mxu0 0
        %900 = vmatprep.subr.bf16.mxu0 0
        %901 = vmatpush1.bf16.msra.mxu0 0
        %902 = vmatprep.subr.bf16.mxu0 0
        %903 = vmatpush1.bf16.msra.mxu0 0
        %904 = vmatprep.subr.bf16.mxu0 0
        %905 = vmatpush1.bf16.msra.mxu0 0
        %906 = vmatprep.subr.bf16.mxu0 0
        %907 = vmatpush1.bf16.msra.mxu0 0
        %908 = vmatprep.subr.bf16.mxu0 0
        %909 = vmatpush1.bf16.msra.mxu0 0
        %910 = vmatprep.subr.bf16.mxu0 0
        %911 = vmatpush1.bf16.msra.mxu0 0
        %912 = vmatprep.subr.bf16.mxu0 0
        %913 = vmatpush1.bf16.msra.mxu0 0
        %914 = vmatprep.mubr.bf16.mxu0 0
        %915 = vmatmul.mubr.bf16.gmra.mrb[0].mxu0 %v701
        %v916 = vpop.f32.mrb[0].mxu0
        %v917 = vadd.f32 %v742, %v916
        %v918 = vpop.f32.mrb[0].mxu0
        %v919 = vadd.f32 %v746, %v918
        %v920 = vpop.f32.mrb[0].mxu0
        %v921 = vadd.f32 %v742, %v920
        %v922 = vpop.f32.mrb[0].mxu0
        %v923 = vadd.f32 %v746, %v922
        %924 = vdwg.mxu0
        %925 = vmatprep.subr.bf16.mxu0 0
        %926 = vmatpush1.bf16.msra.mxu0 %v836
        %927 = vmatprep.subr.bf16.mxu0 0
        %928 = vmatpush1.bf16.msra.mxu0 %v839
        %929 = vmatprep.subr.bf16.mxu0 0
        %930 = vmatpush1.bf16.msra.mxu0 %v842
        %931 = vmatprep.subr.bf16.mxu0 0
        %932 = vmatpush1.bf16.msra.mxu0 %v845
        %933 = vmatprep.subr.bf16.mxu0 0
        %934 = vmatpush1.bf16.msra.mxu0 %v848
        %935 = vmatprep.subr.bf16.mxu0 0
        %936 = vmatpush1.bf16.msra.mxu0 %v851
        %937 = vmatprep.subr.bf16.mxu0 0
        %938 = vmatpush1.bf16.msra.mxu0 %v854
        %939 = vmatprep.subr.bf16.mxu0 0
        %940 = vmatpush1.bf16.msra.mxu0 %v857
        %941 = vmatprep.subr.bf16.mxu0 0
        %942 = vmatpush1.bf16.msra.mxu0 0
        %943 = vmatprep.subr.bf16.mxu0 0
        %944 = vmatpush1.bf16.msra.mxu0 0
        %945 = vmatprep.subr.bf16.mxu0 0
        %946 = vmatpush1.bf16.msra.mxu0 0
        %947 = vmatprep.subr.bf16.mxu0 0
        %948 = vmatpush1.bf16.msra.mxu0 0
        %949 = vmatprep.subr.bf16.mxu0 0
        %950 = vmatpush1.bf16.msra.mxu0 0
        %951 = vmatprep.subr.bf16.mxu0 0
        %952 = vmatpush1.bf16.msra.mxu0 0
        %953 = vmatprep.subr.bf16.mxu0 0
        %954 = vmatpush1.bf16.msra.mxu0 0
        %955 = vmatprep.subr.bf16.mxu0 0
        %956 = vmatpush1.bf16.msra.mxu0 0
        %957 = vmatprep.mubr.bf16.mxu0 0
        %958 = vmatmul.mubr.bf16.gmra.mrb[0].mxu0 %v701
        %v959 = vpop.f32.mrb[0].mxu0
        %v960 = vadd.f32 %v750, %v959
        %v961 = vpop.f32.mrb[0].mxu0
        %v962 = vpop.f32.mrb[0].mxu0
        %v963 = vadd.f32 %v750, %v962
        %v964 = vpop.f32.mrb[0].mxu0
        %965 = vdwg.mxu0
        %v966 = vld [vmem:[#allocation12] sm:$0xff]
        %v967 = vld [vmem:[#allocation12 + $0x8] sm:$0xf]
        %v968 = vld [vmem:[#allocation12 + $0xc] sm:$0xff]
        %v969 = vld [vmem:[#allocation12 + $0x14] sm:$0xf]
        %v970 = vld [vmem:[#allocation12 + $0x18] sm:$0xff]
        %v971 = vld [vmem:[#allocation12 + $0x20] sm:$0xf]
        %v972 = vld [vmem:[#allocation12 + $0x24] sm:$0xff]
        %v973 = vld [vmem:[#allocation12 + $0x2c] sm:$0xf]
        %v974 = vld [vmem:[#allocation12 + $0x30] sm:$0xff]
        %v975 = vld [vmem:[#allocation12 + $0x38] sm:$0xf]
        %v976 = vld [vmem:[#allocation12 + $0x3c] sm:$0xff]
        %v977 = vld [vmem:[#allocation12 + $0x44] sm:$0xf]
        %v978 = vld [vmem:[#allocation12 + $0x48] sm:$0xff]
        %v979 = vld [vmem:[#allocation12 + $0x50] sm:$0xf]
        %v980 = vld [vmem:[#allocation12 + $0x54] sm:$0xff]
        %v981 = vld [vmem:[#allocation12 + $0x5c] sm:$0xf]
        %v982 = vld [vmem:[#allocation12 + $0x60] sm:$0xff]
        %v983 = vld [vmem:[#allocation12 + $0x68] sm:$0xf]
        %v984 = vld [vmem:[#allocation12 + $0x6c] sm:$0xff]
        %v985 = vld [vmem:[#allocation12 + $0x74] sm:$0xf]
        %v986 = vld [vmem:[#allocation12 + $0x78] sm:$0xff]
        %v987 = vld [vmem:[#allocation12 + $0x80] sm:$0xf]
        %v988 = vld [vmem:[#allocation12 + $0x84] sm:$0xff]
        %v989 = vld [vmem:[#allocation12 + $0x8c] sm:$0xf]
        %v990 = vld [vmem:[#allocation12 + $0x90] sm:$0xff]
        %v991 = vld [vmem:[#allocation12 + $0x98] sm:$0xf]
        %v992 = vld [vmem:[#allocation12 + $0x9c] sm:$0xff]
        %v993 = vld [vmem:[#allocation12 + $0xa4] sm:$0xf]
        %v994 = vld [vmem:[#allocation12 + $0xa8] sm:$0xff]
        %v995 = vld [vmem:[#allocation12 + $0xb0] sm:$0xf]
        %v996 = vld [vmem:[#allocation12 + $0xb4] sm:$0xff]
        %v997 = vld [vmem:[#allocation12 + $0xbc] sm:$0xf]
        %v998 = vld [vmem:[%s10] sm:$0x7]
        %v1000 = vlaneseq
        %v1001 = vshrl.u32 %v1000, 7
        %v1002 = vsub.s32 0, %v1001
        %v1003 = vrot.slane %v998, %v1002
        %v1004 = vlaneseq
        %v1005 = vshrl.u32 %v1004, 7
        %v1006 = vsub.s32 1, %v1005
        %v1007 = vrot.slane %v998, %v1006
        %v1008 = vlaneseq
        %v1009 = vshrl.u32 %v1008, 7
        %v1010 = vsub.s32 2, %v1009
        %v1011 = vrot.slane %v998, %v1010
        %v1047 = vunpack.c.l.b16 %v966
        %v1048 = vunpack.c.h.b16 %v966
        %v1049 = vunpack.c.l.b16 %v967
        %v1050 = vunpack.c.l.b16 %v968
        %v1051 = vunpack.c.h.b16 %v968
        %v1052 = vunpack.c.l.b16 %v969
        %v1053 = vunpack.c.l.b16 %v970
        %v1054 = vunpack.c.h.b16 %v970
        %v1055 = vunpack.c.l.b16 %v971
        %v1056 = vunpack.c.l.b16 %v972
        %v1057 = vunpack.c.h.b16 %v972
        %v1058 = vunpack.c.l.b16 %v973
        %v1059 = vunpack.c.l.b16 %v974
        %v1060 = vunpack.c.h.b16 %v974
        %v1061 = vunpack.c.l.b16 %v975
        %v1062 = vunpack.c.l.b16 %v976
        %v1063 = vunpack.c.h.b16 %v976
        %v1064 = vunpack.c.l.b16 %v977
        %v1065 = vunpack.c.l.b16 %v978
        %v1066 = vunpack.c.h.b16 %v978
        %v1067 = vunpack.c.l.b16 %v979
        %v1068 = vunpack.c.l.b16 %v980
        %v1069 = vunpack.c.h.b16 %v980
        %v1070 = vunpack.c.l.b16 %v981
        %v1071 = vunpack.c.l.b16 %v982
        %v1072 = vunpack.c.h.b16 %v982
        %v1073 = vunpack.c.l.b16 %v983
        %v1074 = vunpack.c.l.b16 %v984
        %v1075 = vunpack.c.h.b16 %v984
        %v1076 = vunpack.c.l.b16 %v985
        %v1077 = vunpack.c.l.b16 %v986
        %v1078 = vunpack.c.h.b16 %v986
        %v1079 = vunpack.c.l.b16 %v987
        %v1080 = vunpack.c.l.b16 %v988
        %v1081 = vunpack.c.h.b16 %v988
        %v1082 = vunpack.c.l.b16 %v989
        %v1083 = vunpack.c.l.b16 %v990
        %v1084 = vunpack.c.h.b16 %v990
        %v1085 = vunpack.c.l.b16 %v991
        %v1086 = vunpack.c.l.b16 %v992
        %v1087 = vunpack.c.h.b16 %v992
        %v1088 = vunpack.c.l.b16 %v993
        %v1089 = vunpack.c.l.b16 %v994
        %v1090 = vunpack.c.h.b16 %v994
        %v1091 = vunpack.c.l.b16 %v995
        %v1092 = vunpack.c.l.b16 %v996
        %v1093 = vunpack.c.h.b16 %v996
        %v1094 = vunpack.c.l.b16 %v997
        %v1095 = vpack.c.b16 %v1050, %v1047
        %v1096 = vpack.c.b16 %v1051, %v1048
        %v1097 = vpack.c.b16 %v1052, %v1049
        %v1098 = vpack.c.b16 %v1056, %v1053
        %v1099 = vpack.c.b16 %v1057, %v1054
        %v1100 = vpack.c.b16 %v1058, %v1055
        %v1101 = vpack.c.b16 %v1062, %v1059
        %v1102 = vpack.c.b16 %v1063, %v1060
        %v1103 = vpack.c.b16 %v1064, %v1061
        %v1104 = vpack.c.b16 %v1068, %v1065
        %v1105 = vpack.c.b16 %v1069, %v1066
        %v1106 = vpack.c.b16 %v1070, %v1067
        %v1107 = vpack.c.b16 %v1074, %v1071
        %v1108 = vpack.c.b16 %v1075, %v1072
        %v1109 = vpack.c.b16 %v1076, %v1073
        %v1110 = vpack.c.b16 %v1080, %v1077
        %v1111 = vpack.c.b16 %v1081, %v1078
        %v1112 = vpack.c.b16 %v1082, %v1079
        %v1113 = vpack.c.b16 %v1086, %v1083
        %v1114 = vpack.c.b16 %v1087, %v1084
        %v1115 = vpack.c.b16 %v1088, %v1085
        %v1116 = vpack.c.b16 %v1092, %v1089
        %v1117 = vpack.c.b16 %v1093, %v1090
        %v1118 = vpack.c.b16 %v1094, %v1091
        %1143 = vmatprep.subr.bf16.mxu0 %v1096
        %1144 = vmatpush1.bf16.msra.mxu0 %v1095
        %1145 = vmatprep.subr.bf16.mxu0 %v1099
        %1146 = vmatpush1.bf16.msra.mxu0 %v1098
        %1147 = vmatprep.subr.bf16.mxu0 %v1102
        %1148 = vmatpush1.bf16.msra.mxu0 %v1101
        %1149 = vmatprep.subr.bf16.mxu0 %v1105
        %1150 = vmatpush1.bf16.msra.mxu0 %v1104
        %1151 = vmatprep.subr.bf16.mxu0 %v1108
        %1152 = vmatpush1.bf16.msra.mxu0 %v1107
        %1153 = vmatprep.subr.bf16.mxu0 %v1111
        %1154 = vmatpush1.bf16.msra.mxu0 %v1110
        %1155 = vmatprep.subr.bf16.mxu0 %v1114
        %1156 = vmatpush1.bf16.msra.mxu0 %v1113
        %1157 = vmatprep.subr.bf16.mxu0 %v1117
        %1158 = vmatpush1.bf16.msra.mxu0 %v1116
        %1159 = vmatprep.subr.bf16.mxu0 0
        %1160 = vmatpush1.bf16.msra.mxu0 0
        %1161 = vmatprep.subr.bf16.mxu0 0
        %1162 = vmatpush1.bf16.msra.mxu0 0
        %1163 = vmatprep.subr.bf16.mxu0 0
        %1164 = vmatpush1.bf16.msra.mxu0 0
        %1165 = vmatprep.subr.bf16.mxu0 0
        %1166 = vmatpush1.bf16.msra.mxu0 0
        %1167 = vmatprep.subr.bf16.mxu0 0
        %1168 = vmatpush1.bf16.msra.mxu0 0
        %1169 = vmatprep.subr.bf16.mxu0 0
        %1170 = vmatpush1.bf16.msra.mxu0 0
        %1171 = vmatprep.subr.bf16.mxu0 0
        %1172 = vmatpush1.bf16.msra.mxu0 0
        %1173 = vmatprep.subr.bf16.mxu0 0
        %1174 = vmatpush1.bf16.msra.mxu0 0
        %1175 = vmatprep.mubr.bf16.mxu0 0
        %1176 = vmatmul.mubr.bf16.gmra.mrb[0].mxu0 %v704
        %v1177 = vpop.f32.mrb[0].mxu0
        %v1178 = vadd.f32 %v1003, %v1177
        %v1179 = vpop.f32.mrb[0].mxu0
        %v1180 = vadd.f32 %v1007, %v1179
        %v1181 = vpop.f32.mrb[0].mxu0
        %v1182 = vadd.f32 %v1003, %v1181
        %v1183 = vpop.f32.mrb[0].mxu0
        %v1184 = vadd.f32 %v1007, %v1183
        %1185 = vdwg.mxu0
        %1186 = vmatprep.subr.bf16.mxu0 0
        %1187 = vmatpush1.bf16.msra.mxu0 %v1097
        %1188 = vmatprep.subr.bf16.mxu0 0
        %1189 = vmatpush1.bf16.msra.mxu0 %v1100
        %1190 = vmatprep.subr.bf16.mxu0 0
        %1191 = vmatpush1.bf16.msra.mxu0 %v1103
        %1192 = vmatprep.subr.bf16.mxu0 0
        %1193 = vmatpush1.bf16.msra.mxu0 %v1106
        %1194 = vmatprep.subr.bf16.mxu0 0
        %1195 = vmatpush1.bf16.msra.mxu0 %v1109
        %1196 = vmatprep.subr.bf16.mxu0 0
        %1197 = vmatpush1.bf16.msra.mxu0 %v1112
        %1198 = vmatprep.subr.bf16.mxu0 0
        %1199 = vmatpush1.bf16.msra.mxu0 %v1115
        %1200 = vmatprep.subr.bf16.mxu0 0
        %1201 = vmatpush1.bf16.msra.mxu0 %v1118
        %1202 = vmatprep.subr.bf16.mxu0 0
        %1203 = vmatpush1.bf16.msra.mxu0 0
        %1204 = vmatprep.subr.bf16.mxu0 0
        %1205 = vmatpush1.bf16.msra.mxu0 0
        %1206 = vmatprep.subr.bf16.mxu0 0
        %1207 = vmatpush1.bf16.msra.mxu0 0
        %1208 = vmatprep.subr.bf16.mxu0 0
        %1209 = vmatpush1.bf16.msra.mxu0 0
        %1210 = vmatprep.subr.bf16.mxu0 0
        %1211 = vmatpush1.bf16.msra.mxu0 0
        %1212 = vmatprep.subr.bf16.mxu0 0
        %1213 = vmatpush1.bf16.msra.mxu0 0
        %1214 = vmatprep.subr.bf16.mxu0 0
        %1215 = vmatpush1.bf16.msra.mxu0 0
        %1216 = vmatprep.subr.bf16.mxu0 0
        %1217 = vmatpush1.bf16.msra.mxu0 0
        %1218 = vmatprep.mubr.bf16.mxu0 0
        %1219 = vmatmul.mubr.bf16.gmra.mrb[0].mxu0 %v704
        %v1220 = vpop.f32.mrb[0].mxu0
        %v1221 = vadd.f32 %v1011, %v1220
        %v1222 = vpop.f32.mrb[0].mxu0
        %v1223 = vpop.f32.mrb[0].mxu0
        %v1224 = vadd.f32 %v1011, %v1223
        %v1225 = vpop.f32.mrb[0].mxu0
        %1226 = vdwg.mxu0
        %v1227 = vadd.f32 %v917, %v1178
        %v1228 = vadd.f32 %v921, %v1182
        %v1229 = vxor.u32 %v1227, 2147483648
        %v1230 = vxor.u32 %v1228, 2147483648
        %v1231 = vmul.f32 %v1229, 1.442695
        %v1232 = vpow.pop %v1231
        %v1233 = vmul.f32 %v1230, 1.442695
        %v1234 = vpow.pop %v1233
        %v1235 = vadd.f32 %v1232, 1.0
        %v1236 = vadd.f32 %v1234, 1.0
        %v1237 = vrcp.pop %v1235
        %v1238 = vmul.f32 1.0, %v1237
        %v1239 = vrcp.pop %v1236
        %v1240 = vmul.f32 1.0, %v1239
        %v1241 = vadd.f32 %v919, %v1180
        %v1242 = vadd.f32 %v923, %v1184
        %v1243 = vxor.u32 %v1241, 2147483648
        %v1244 = vxor.u32 %v1242, 2147483648
        %v1245 = vmul.f32 %v1243, 1.442695
        %v1246 = vpow.pop %v1245
        %v1247 = vmul.f32 %v1244, 1.442695
        %v1248 = vpow.pop %v1247
        %v1249 = vadd.f32 %v1246, 1.0
        %v1250 = vadd.f32 %v1248, 1.0
        %v1251 = vrcp.pop %v1249
        %v1252 = vmul.f32 1.0, %v1251
        %v1253 = vrcp.pop %v1250
        %v1254 = vmul.f32 1.0, %v1253
        %v1255 = vmul.f32 %v1238, %v1221
        %v1256 = vmul.f32 %v1240, %v1224
        %v1257 = vadd.f32 %v960, %v1255
        %v1258 = vadd.f32 %v963, %v1256
        %v1259 = vtanh.pop %v1257
        %v1260 = vtanh.pop %v1258
        %v1261 = vsub.f32 1.0, %v1252
        %v1262 = vsub.f32 1.0, %v1254
        %v1263 = vmul.f32 %v1261, %v1259
        %v1264 = vmul.f32 %v1262, %v1260
        %v1265 = vmul.f32 %v1252, %v702
        %v1266 = vmul.f32 %v1254, %v703
        %v1267 = vadd.f32 %v1263, %v1265
        %v1268 = vadd.f32 %v1264, %v1266
        %v1269 = vpack.c.bf16 %v1268, %v1267
        %v1270 = vld [vmem:[%s6] sm:$0xf]
        %v1271 = vld [vmem:[%s6 + $0x4] sm:$0xf]
        %v1272 = vld [vmem:[%s6 + $0x8] sm:$0xf]
        %v1273 = vld [vmem:[%s6 + $0xc] sm:$0xf]
        %v1274 = vld [vmem:[%s6 + $0x10] sm:$0xf]
        %v1275 = vld [vmem:[%s6 + $0x14] sm:$0xf]
        %v1276 = vld [vmem:[%s6 + $0x18] sm:$0xf]
        %v1277 = vld [vmem:[%s6 + $0x1c] sm:$0xf]
        %v1278 = vld [vmem:[%s6 + $0x20] sm:$0xf]
        %v1279 = vld [vmem:[%s6 + $0x24] sm:$0xf]
        %v1280 = vld [vmem:[%s6 + $0x28] sm:$0xf]
        %v1281 = vld [vmem:[%s6 + $0x2c] sm:$0xf]
        %v1282 = vld [vmem:[%s6 + $0x30] sm:$0xf]
        %v1283 = vld [vmem:[%s6 + $0x34] sm:$0xf]
        %v1284 = vld [vmem:[%s6 + $0x38] sm:$0xf]
        %v1285 = vld [vmem:[%s6 + $0x3c] sm:$0xf]
        %v1286 = vld [vmem:[#allocation11] sm:$0x1]
        %v1288 = vlaneseq
        %v1289 = vshrl.u32 %v1288, 7
        %v1290 = vsub.s32 0, %v1289
        %v1291 = vrot.slane %v1286, %v1290
        %v1309 = vunpack.c.l.b16 %v1270
        %v1310 = vunpack.c.l.b16 %v1271
        %v1311 = vunpack.c.l.b16 %v1272
        %v1312 = vunpack.c.l.b16 %v1273
        %v1313 = vunpack.c.l.b16 %v1274
        %v1314 = vunpack.c.l.b16 %v1275
        %v1315 = vunpack.c.l.b16 %v1276
        %v1316 = vunpack.c.l.b16 %v1277
        %v1317 = vunpack.c.l.b16 %v1278
        %v1318 = vunpack.c.l.b16 %v1279
        %v1319 = vunpack.c.l.b16 %v1280
        %v1320 = vunpack.c.l.b16 %v1281
        %v1321 = vunpack.c.l.b16 %v1282
        %v1322 = vunpack.c.l.b16 %v1283
        %v1323 = vunpack.c.l.b16 %v1284
        %v1324 = vunpack.c.l.b16 %v1285
        %v1325 = vpack.c.b16 %v1310, %v1309
        %v1326 = vpack.c.b16 %v1312, %v1311
        %v1327 = vpack.c.b16 %v1314, %v1313
        %v1328 = vpack.c.b16 %v1316, %v1315
        %v1329 = vpack.c.b16 %v1318, %v1317
        %v1330 = vpack.c.b16 %v1320, %v1319
        %v1331 = vpack.c.b16 %v1322, %v1321
        %v1332 = vpack.c.b16 %v1324, %v1323
        %1341 = vmatprep.subr.bf16.mxu0 0
        %1342 = vmatpush1.bf16.xpose.msra.mxu0 %v1325
        %1343 = vmatprep.subr.bf16.mxu0 0
        %1344 = vmatpush1.bf16.xpose.msra.mxu0 %v1326
        %1345 = vmatprep.subr.bf16.mxu0 0
        %1346 = vmatpush1.bf16.xpose.msra.mxu0 %v1327
        %1347 = vmatprep.subr.bf16.mxu0 0
        %1348 = vmatpush1.bf16.xpose.msra.mxu0 %v1328
        %1349 = vmatprep.subr.bf16.mxu0 0
        %1350 = vmatpush1.bf16.xpose.msra.mxu0 %v1329
        %1351 = vmatprep.subr.bf16.mxu0 0
        %1352 = vmatpush1.bf16.xpose.msra.mxu0 %v1330
        %1353 = vmatprep.subr.bf16.mxu0 0
        %1354 = vmatpush1.bf16.xpose.msra.mxu0 %v1331
        %1355 = vmatprep.subr.bf16.mxu0 0
        %1356 = vmatpush1.bf16.xpose.msra.mxu0 %v1332
        %1357 = vmatprep.subr.bf16.mxu0 0
        %1358 = vmatpush1.bf16.xpose.msra.mxu0 0
        %1359 = vmatprep.subr.bf16.mxu0 0
        %1360 = vmatpush1.bf16.xpose.msra.mxu0 0
        %1361 = vmatprep.subr.bf16.mxu0 0
        %1362 = vmatpush1.bf16.xpose.msra.mxu0 0
        %1363 = vmatprep.subr.bf16.mxu0 0
        %1364 = vmatpush1.bf16.xpose.msra.mxu0 0
        %1365 = vmatprep.subr.bf16.mxu0 0
        %1366 = vmatpush1.bf16.xpose.msra.mxu0 0
        %1367 = vmatprep.subr.bf16.mxu0 0
        %1368 = vmatpush1.bf16.xpose.msra.mxu0 0
        %1369 = vmatprep.subr.bf16.mxu0 0
        %1370 = vmatpush1.bf16.xpose.msra.mxu0 0
        %1371 = vmatprep.subr.bf16.mxu0 0
        %1372 = vmatpush1.bf16.xpose.msra.mxu0 0
        %1373 = vmatprep.mubr.bf16.mxu0 0
        %1374 = vmatmul.mubr.bf16.gmra.mrb[0].mxu0 %v1269
        %v1375 = vpop.f32.mrb[0].mxu0
        %v1376 = vadd.f32 %v1291, %v1375
        %v1377 = vpop.f32.mrb[0].mxu0
        %v1378 = vpop.f32.mrb[0].mxu0
        %v1379 = vadd.f32 %v1291, %v1378
        %v1380 = vpop.f32.mrb[0].mxu0
        %1381 = vdwg.mxu0
        %1382 = vmax.xlane.f32.xlu0 %v1376
        %v1383 = vpop.xlane.xlu0 %1382
        %1384 = vmax.xlane.f32.xlu0 %v1379
        %v1385 = vpop.xlane.xlu0 %1384
        %v1386 = vsub.f32 %v1376, %v1383
        %v1387 = vsub.f32 %v1379, %v1385
        %v1388 = vmul.f32 %v1386, 1.442695
        %v1389 = vpow.pop %v1388
        %v1390 = vmul.f32 %v1387, 1.442695
        %v1391 = vpow.pop %v1390
        %1392 = vadd.xlane.f32.xlu0 %v1389
        %v1393 = vpop.xlane.xlu0 %1392
        %1394 = vadd.xlane.f32.xlu0 %v1391
        %v1395 = vpop.xlane.xlu0 %1394
        %v1396 = vrcp.pop %v1393
        %v1397 = vmul.f32 1.0, %v1396
        %v1398 = vrcp.pop %v1395
        %v1399 = vmul.f32 1.0, %v1398
        %v1400 = vmul.f32 %v1389, %v1397
        %v1401 = vmul.f32 %v1391, %v1399
        %v1402 = vld [vmem:[#allocation6] sm:$0xf]
        %v1403 = vld [vmem:[#allocation6 + $0x4] sm:$0xf]
        %v1404 = vld [vmem:[#allocation6 + $0x8] sm:$0xf]
        %v1405 = vld [vmem:[#allocation6 + $0xc] sm:$0xf]
        %v1406 = vld [vmem:[#allocation6 + $0x10] sm:$0xf]
        %v1407 = vld [vmem:[#allocation6 + $0x14] sm:$0xf]
        %v1408 = vld [vmem:[#allocation6 + $0x18] sm:$0xf]
        %v1409 = vld [vmem:[#allocation6 + $0x1c] sm:$0xf]
        %v1410 = vld [vmem:[#allocation6 + $0x20] sm:$0xf]
        %v1411 = vld [vmem:[#allocation6 + $0x24] sm:$0xf]
        %v1412 = vld [vmem:[#allocation6 + $0x28] sm:$0xf]
        %v1413 = vld [vmem:[#allocation6 + $0x2c] sm:$0xf]
        %v1414 = vld [vmem:[#allocation6 + $0x30] sm:$0xf]
        %v1415 = vld [vmem:[#allocation6 + $0x34] sm:$0xf]
        %v1416 = vld [vmem:[#allocation6 + $0x38] sm:$0xf]
        %v1417 = vld [vmem:[#allocation6 + $0x3c] sm:$0xf]
        %v1418 = vld [vmem:[#allocation6 + $0x40] sm:$0xf]
        %v1419 = vld [vmem:[#allocation6 + $0x44] sm:$0xf]
        %v1420 = vld [vmem:[#allocation6 + $0x48] sm:$0xf]
        %v1421 = vld [vmem:[#allocation6 + $0x4c] sm:$0xf]
        %v1422 = vld [vmem:[#allocation6 + $0x50] sm:$0xf]
        %v1423 = vld [vmem:[#allocation6 + $0x54] sm:$0xf]
        %v1424 = vld [vmem:[#allocation6 + $0x58] sm:$0xf]
        %v1425 = vld [vmem:[#allocation6 + $0x5c] sm:$0xf]
        %v1426 = vld [vmem:[#allocation6 + $0x60] sm:$0xf]
        %v1427 = vld [vmem:[#allocation6 + $0x64] sm:$0xf]
        %v1428 = vld [vmem:[#allocation6 + $0x68] sm:$0xf]
        %v1429 = vld [vmem:[#allocation6 + $0x6c] sm:$0xf]
        %v1430 = vld [vmem:[#allocation6 + $0x70] sm:$0xf]
        %v1431 = vld [vmem:[#allocation6 + $0x74] sm:$0xf]
        %v1432 = vld [vmem:[#allocation6 + $0x78] sm:$0xf]
        %v1433 = vld [vmem:[#allocation6 + $0x7c] sm:$0xf]
        %v1435 = vunpack.c.l.b16 %v1269
        %v1436 = vunpack.c.h.b16 %v1269
        %v1437 = vpack.c.b16 %v1435, %v1435
        %v1438 = vpack.c.b16 %v1436, %v1436
        %v1441 = vld [vmem:[#allocation9] sm:$0x1]
        %v1442 = vld [vmem:[#allocation9 + $0x1] sm:$0x1]
        %v1445 = vlaneseq
        %v1446 = vshrl.u32 %v1445, 7
        %v1447 = vsub.s32 0, %v1446
        %v1448 = vrot.slane %v1441, %v1447
        %v1449 = vlaneseq
        %v1450 = vshrl.u32 %v1449, 7
        %v1451 = vsub.s32 0, %v1450
        %v1452 = vrot.slane %v1442, %v1451
        %v1471 = vunpack.c.l.b16 %v1402
        %v1472 = vunpack.c.l.b16 %v1403
        %v1473 = vunpack.c.l.b16 %v1404
        %v1474 = vunpack.c.l.b16 %v1405
        %v1475 = vunpack.c.l.b16 %v1406
        %v1476 = vunpack.c.l.b16 %v1407
        %v1477 = vunpack.c.l.b16 %v1408
        %v1478 = vunpack.c.l.b16 %v1409
        %v1479 = vunpack.c.l.b16 %v1410
        %v1480 = vunpack.c.l.b16 %v1411
        %v1481 = vunpack.c.l.b16 %v1412
        %v1482 = vunpack.c.l.b16 %v1413
        %v1483 = vunpack.c.l.b16 %v1414
        %v1484 = vunpack.c.l.b16 %v1415
        %v1485 = vunpack.c.l.b16 %v1416
        %v1486 = vunpack.c.l.b16 %v1417
        %v1487 = vpack.c.b16 %v1472, %v1471
        %v1488 = vpack.c.b16 %v1474, %v1473
        %v1489 = vpack.c.b16 %v1476, %v1475
        %v1490 = vpack.c.b16 %v1478, %v1477
        %v1491 = vpack.c.b16 %v1480, %v1479
        %v1492 = vpack.c.b16 %v1482, %v1481
        %v1493 = vpack.c.b16 %v1484, %v1483
        %v1494 = vpack.c.b16 %v1486, %v1485
        %1503 = vmatprep.subr.bf16.mxu0 0
        %1504 = vmatpush1.bf16.xpose.msra.mxu0 %v1487
        %1505 = vmatprep.subr.bf16.mxu0 0
        %1506 = vmatpush1.bf16.xpose.msra.mxu0 %v1488
        %1507 = vmatprep.subr.bf16.mxu0 0
        %1508 = vmatpush1.bf16.xpose.msra.mxu0 %v1489
        %1509 = vmatprep.subr.bf16.mxu0 0
        %1510 = vmatpush1.bf16.xpose.msra.mxu0 %v1490
        %1511 = vmatprep.subr.bf16.mxu0 0
        %1512 = vmatpush1.bf16.xpose.msra.mxu0 %v1491
        %1513 = vmatprep.subr.bf16.mxu0 0
        %1514 = vmatpush1.bf16.xpose.msra.mxu0 %v1492
        %1515 = vmatprep.subr.bf16.mxu0 0
        %1516 = vmatpush1.bf16.xpose.msra.mxu0 %v1493
        %1517 = vmatprep.subr.bf16.mxu0 0
        %1518 = vmatpush1.bf16.xpose.msra.mxu0 %v1494
        %1519 = vmatprep.subr.bf16.mxu0 0
        %1520 = vmatpush1.bf16.xpose.msra.mxu0 0
        %1521 = vmatprep.subr.bf16.mxu0 0
        %1522 = vmatpush1.bf16.xpose.msra.mxu0 0
        %1523 = vmatprep.subr.bf16.mxu0 0
        %1524 = vmatpush1.bf16.xpose.msra.mxu0 0
        %1525 = vmatprep.subr.bf16.mxu0 0
        %1526 = vmatpush1.bf16.xpose.msra.mxu0 0
        %1527 = vmatprep.subr.bf16.mxu0 0
        %1528 = vmatpush1.bf16.xpose.msra.mxu0 0
        %1529 = vmatprep.subr.bf16.mxu0 0
        %1530 = vmatpush1.bf16.xpose.msra.mxu0 0
        %1531 = vmatprep.subr.bf16.mxu0 0
        %1532 = vmatpush1.bf16.xpose.msra.mxu0 0
        %1533 = vmatprep.subr.bf16.mxu0 0
        %1534 = vmatpush1.bf16.xpose.msra.mxu0 0
        %1535 = vmatprep.mubr.bf16.mxu0 0
        %1536 = vmatmul.mubr.bf16.gmra.mrb[0].mxu0 %v1437
        %v1537 = vpop.f32.mrb[0].mxu0
        %v1538 = vadd.f32 %v1448, %v1537
        %v1539 = vpop.f32.mrb[0].mxu0
        %v1540 = vpop.f32.mrb[0].mxu0
        %v1541 = vpop.f32.mrb[0].mxu0
        %1542 = vdwg.mxu0
        %v1559 = vunpack.c.l.b16 %v1418
        %v1560 = vunpack.c.l.b16 %v1419
        %v1561 = vunpack.c.l.b16 %v1420
        %v1562 = vunpack.c.l.b16 %v1421
        %v1563 = vunpack.c.l.b16 %v1422
        %v1564 = vunpack.c.l.b16 %v1423
        %v1565 = vunpack.c.l.b16 %v1424
        %v1566 = vunpack.c.l.b16 %v1425
        %v1567 = vunpack.c.l.b16 %v1426
        %v1568 = vunpack.c.l.b16 %v1427
        %v1569 = vunpack.c.l.b16 %v1428
        %v1570 = vunpack.c.l.b16 %v1429
        %v1571 = vunpack.c.l.b16 %v1430
        %v1572 = vunpack.c.l.b16 %v1431
        %v1573 = vunpack.c.l.b16 %v1432
        %v1574 = vunpack.c.l.b16 %v1433
        %v1575 = vpack.c.b16 %v1560, %v1559
        %v1576 = vpack.c.b16 %v1562, %v1561
        %v1577 = vpack.c.b16 %v1564, %v1563
        %v1578 = vpack.c.b16 %v1566, %v1565
        %v1579 = vpack.c.b16 %v1568, %v1567
        %v1580 = vpack.c.b16 %v1570, %v1569
        %v1581 = vpack.c.b16 %v1572, %v1571
        %v1582 = vpack.c.b16 %v1574, %v1573
        %1591 = vmatprep.subr.bf16.mxu0 0
        %1592 = vmatpush1.bf16.xpose.msra.mxu0 %v1575
        %1593 = vmatprep.subr.bf16.mxu0 0
        %1594 = vmatpush1.bf16.xpose.msra.mxu0 %v1576
        %1595 = vmatprep.subr.bf16.mxu0 0
        %1596 = vmatpush1.bf16.xpose.msra.mxu0 %v1577
        %1597 = vmatprep.subr.bf16.mxu0 0
        %1598 = vmatpush1.bf16.xpose.msra.mxu0 %v1578
        %1599 = vmatprep.subr.bf16.mxu0 0
        %1600 = vmatpush1.bf16.xpose.msra.mxu0 %v1579
        %1601 = vmatprep.subr.bf16.mxu0 0
        %1602 = vmatpush1.bf16.xpose.msra.mxu0 %v1580
        %1603 = vmatprep.subr.bf16.mxu0 0
        %1604 = vmatpush1.bf16.xpose.msra.mxu0 %v1581
        %1605 = vmatprep.subr.bf16.mxu0 0
        %1606 = vmatpush1.bf16.xpose.msra.mxu0 %v1582
        %1607 = vmatprep.subr.bf16.mxu0 0
        %1608 = vmatpush1.bf16.xpose.msra.mxu0 0
        %1609 = vmatprep.subr.bf16.mxu0 0
        %1610 = vmatpush1.bf16.xpose.msra.mxu0 0
        %1611 = vmatprep.subr.bf16.mxu0 0
        %1612 = vmatpush1.bf16.xpose.msra.mxu0 0
        %1613 = vmatprep.subr.bf16.mxu0 0
        %1614 = vmatpush1.bf16.xpose.msra.mxu0 0
        %1615 = vmatprep.subr.bf16.mxu0 0
        %1616 = vmatpush1.bf16.xpose.msra.mxu0 0
        %1617 = vmatprep.subr.bf16.mxu0 0
        %1618 = vmatpush1.bf16.xpose.msra.mxu0 0
        %1619 = vmatprep.subr.bf16.mxu0 0
        %1620 = vmatpush1.bf16.xpose.msra.mxu0 0
        %1621 = vmatprep.subr.bf16.mxu0 0
        %1622 = vmatpush1.bf16.xpose.msra.mxu0 0
        %1623 = vmatprep.mubr.bf16.mxu0 0
        %1624 = vmatmul.mubr.bf16.gmra.mrb[0].mxu0 %v1438
        %v1625 = vpop.f32.mrb[0].mxu0
        %v1626 = vadd.f32 %v1452, %v1625
        %v1627 = vpop.f32.mrb[0].mxu0
        %v1628 = vpop.f32.mrb[0].mxu0
        %v1629 = vpop.f32.mrb[0].mxu0
        %1630 = vdwg.mxu0
        %1631 = vmax.xlane.f32.xlu0 %v1538
        %v1632 = vpop.xlane.xlu0 %1631
        %1633 = vmax.xlane.f32.xlu0 %v1626
        %v1634 = vpop.xlane.xlu0 %1633
        %v1635 = vsub.f32 %v1538, %v1632
        %v1636 = vsub.f32 %v1626, %v1634
        %v1637 = vmul.f32 %v1635, 1.442695
        %v1638 = vpow.pop %v1637
        %v1639 = vmul.f32 %v1636, 1.442695
        %v1640 = vpow.pop %v1639
        %1641 = vadd.xlane.f32.xlu0 %v1638
        %v1642 = vpop.xlane.xlu0 %1641
        %1643 = vadd.xlane.f32.xlu0 %v1640
        %v1644 = vpop.xlane.xlu0 %1643
        %v1645 = vrcp.pop %v1642
        %v1646 = vmul.f32 1.0, %v1645
        %v1647 = vrcp.pop %v1644
        %v1648 = vmul.f32 1.0, %v1647
        %v1649 = vmul.f32 %v1638, %v1646
        %v1650 = vmul.f32 %v1640, %v1648
        %v1651 = vpack.c.bf16 %v1649, %v1649
        %v1652 = vpack.c.bf16 %v1650, %v1650
        %1653 = vmatprep.subr.bf16.mxu0 0
        %1654 = vmatpush1.bf16.msra.mxu0 %v1487
        %1655 = vmatprep.subr.bf16.mxu0 0
        %1656 = vmatpush1.bf16.msra.mxu0 %v1488
        %1657 = vmatprep.subr.bf16.mxu0 0
        %1658 = vmatpush1.bf16.msra.mxu0 %v1489
        %1659 = vmatprep.subr.bf16.mxu0 0
        %1660 = vmatpush1.bf16.msra.mxu0 %v1490
        %1661 = vmatprep.subr.bf16.mxu0 0
        %1662 = vmatpush1.bf16.msra.mxu0 %v1491
        %1663 = vmatprep.subr.bf16.mxu0 0
        %1664 = vmatpush1.bf16.msra.mxu0 %v1492
        %1665 = vmatprep.subr.bf16.mxu0 0
        %1666 = vmatpush1.bf16.msra.mxu0 %v1493
        %1667 = vmatprep.subr.bf16.mxu0 0
        %1668 = vmatpush1.bf16.msra.mxu0 %v1494
        %1669 = vmatprep.subr.bf16.mxu0 0
        %1670 = vmatpush1.bf16.msra.mxu0 0
        %1671 = vmatprep.subr.bf16.mxu0 0
        %1672 = vmatpush1.bf16.msra.mxu0 0
        %1673 = vmatprep.subr.bf16.mxu0 0
        %1674 = vmatpush1.bf16.msra.mxu0 0
        %1675 = vmatprep.subr.bf16.mxu0 0
        %1676 = vmatpush1.bf16.msra.mxu0 0
        %1677 = vmatprep.subr.bf16.mxu0 0
        %1678 = vmatpush1.bf16.msra.mxu0 0
        %1679 = vmatprep.subr.bf16.mxu0 0
        %1680 = vmatpush1.bf16.msra.mxu0 0
        %1681 = vmatprep.subr.bf16.mxu0 0
        %1682 = vmatpush1.bf16.msra.mxu0 0
        %1683 = vmatprep.subr.bf16.mxu0 0
        %1684 = vmatpush1.bf16.msra.mxu0 0
        %1685 = vmatprep.mubr.bf16.mxu0 0
        %1686 = vmatmul.mubr.bf16.gmra.mrb[0].mxu0 %v1651
        %v1687 = vpop.f32.mrb[0].mxu0
        %v1688 = vadd.f32 0.0, %v1687
        %v1689 = vpop.f32.mrb[0].mxu0
        %v1690 = vpop.f32.mrb[0].mxu0
        %v1691 = vpop.f32.mrb[0].mxu0
        %1692 = vdwg.mxu0
        %1693 = vmatprep.subr.bf16.mxu0 0
        %1694 = vmatpush1.bf16.msra.mxu0 %v1575
        %1695 = vmatprep.subr.bf16.mxu0 0
        %1696 = vmatpush1.bf16.msra.mxu0 %v1576
        %1697 = vmatprep.subr.bf16.mxu0 0
        %1698 = vmatpush1.bf16.msra.mxu0 %v1577
        %1699 = vmatprep.subr.bf16.mxu0 0
        %1700 = vmatpush1.bf16.msra.mxu0 %v1578
        %1701 = vmatprep.subr.bf16.mxu0 0
        %1702 = vmatpush1.bf16.msra.mxu0 %v1579
        %1703 = vmatprep.subr.bf16.mxu0 0
        %1704 = vmatpush1.bf16.msra.mxu0 %v1580
        %1705 = vmatprep.subr.bf16.mxu0 0
        %1706 = vmatpush1.bf16.msra.mxu0 %v1581
        %1707 = vmatprep.subr.bf16.mxu0 0
        %1708 = vmatpush1.bf16.msra.mxu0 %v1582
        %1709 = vmatprep.subr.bf16.mxu0 0
        %1710 = vmatpush1.bf16.msra.mxu0 0
        %1711 = vmatprep.subr.bf16.mxu0 0
        %1712 = vmatpush1.bf16.msra.mxu0 0
        %1713 = vmatprep.subr.bf16.mxu0 0
        %1714 = vmatpush1.bf16.msra.mxu0 0
        %1715 = vmatprep.subr.bf16.mxu0 0
        %1716 = vmatpush1.bf16.msra.mxu0 0
        %1717 = vmatprep.subr.bf16.mxu0 0
        %1718 = vmatpush1.bf16.msra.mxu0 0
        %1719 = vmatprep.subr.bf16.mxu0 0
        %1720 = vmatpush1.bf16.msra.mxu0 0
        %1721 = vmatprep.subr.bf16.mxu0 0
        %1722 = vmatpush1.bf16.msra.mxu0 0
        %1723 = vmatprep.subr.bf16.mxu0 0
        %1724 = vmatpush1.bf16.msra.mxu0 0
        %1725 = vmatprep.mubr.bf16.mxu0 0
        %1726 = vmatmul.mubr.bf16.gmra.mrb[0].mxu0 %v1652
        %v1727 = vpop.f32.mrb[0].mxu0
        %v1728 = vadd.f32 0.0, %v1727
        %v1729 = vpop.f32.mrb[0].mxu0
        %v1730 = vpop.f32.mrb[0].mxu0
        %v1731 = vpop.f32.mrb[0].mxu0
        %1732 = vdwg.mxu0
        %v1733 = vld [vmem:[%s676] sm:$0xff]
        %v1734 = vld [vmem:[%s676 + $0x8] sm:$0xff]
        %v1735 = vld [vmem:[%s676 + $0x10] sm:$0xff]
        %v1736 = vld [vmem:[%s676 + $0x18] sm:$0xff]
        %v1737 = vld [vmem:[%s676 + $0x20] sm:$0xff]
        %v1738 = vld [vmem:[%s676 + $0x28] sm:$0xff]
        %v1739 = vld [vmem:[%s676 + $0x30] sm:$0xff]
        %v1740 = vld [vmem:[%s676 + $0x38] sm:$0xff]
        %v1741 = vld [vmem:[%s676 + $0x40] sm:$0xff]
        %v1742 = vld [vmem:[%s676 + $0x48] sm:$0xff]
        %v1743 = vld [vmem:[%s676 + $0x50] sm:$0xff]
        %v1744 = vld [vmem:[%s676 + $0x58] sm:$0xff]
        %v1745 = vld [vmem:[%s676 + $0x60] sm:$0xff]
        %v1746 = vld [vmem:[%s676 + $0x68] sm:$0xff]
        %v1747 = vld [vmem:[%s676 + $0x70] sm:$0xff]
        %v1748 = vld [vmem:[%s676 + $0x78] sm:$0xff]
        %v1749 = vld [vmem:[%s676 + $0x80] sm:$0xff]
        %v1750 = vld [vmem:[%s676 + $0x88] sm:$0xff]
        %v1751 = vld [vmem:[%s676 + $0x90] sm:$0xff]
        %v1752 = vld [vmem:[%s676 + $0x98] sm:$0xff]
        %v1753 = vld [vmem:[%s676 + $0xa0] sm:$0xff]
        %v1754 = vld [vmem:[%s676 + $0xa8] sm:$0xff]
        %v1755 = vld [vmem:[%s676 + $0xb0] sm:$0xff]
        %v1756 = vld [vmem:[%s676 + $0xb8] sm:$0xff]
        %v1757 = vld [vmem:[%s676 + $0xc0] sm:$0xff]
        %v1758 = vld [vmem:[%s676 + $0xc8] sm:$0xff]
        %v1759 = vld [vmem:[%s676 + $0xd0] sm:$0xff]
        %v1760 = vld [vmem:[%s676 + $0xd8] sm:$0xff]
        %v1761 = vld [vmem:[%s676 + $0xe0] sm:$0xff]
        %v1762 = vld [vmem:[%s676 + $0xe8] sm:$0xff]
        %v1763 = vld [vmem:[%s676 + $0xf0] sm:$0xff]
        %v1764 = vld [vmem:[%s676 + $0xf8] sm:$0xff]
        %v1765 = vlaneseq
        %v1766 = vand.u32 %v1765, 127
        %1767 = vset.pattern.permute.xlu0 0
        %1768 = vperm.xlu0 %1767, %v1733
        %v1769 = vpop.permute.xlu0 %1768
        %1770 = vset.pattern.permute.xlu0 0
        %1771 = vperm.xlu0 %1770, %v1734
        %v1772 = vpop.permute.xlu0 %1771
        %1773 = vset.pattern.permute.xlu0 0
        %1774 = vperm.xlu0 %1773, %v1735
        %v1775 = vpop.permute.xlu0 %1774
        %1776 = vset.pattern.permute.xlu0 0
        %1777 = vperm.xlu0 %1776, %v1736
        %v1778 = vpop.permute.xlu0 %1777
        %1779 = vset.pattern.permute.xlu0 0
        %1780 = vperm.xlu0 %1779, %v1737
        %v1781 = vpop.permute.xlu0 %1780
        %1782 = vset.pattern.permute.xlu0 0
        %1783 = vperm.xlu0 %1782, %v1738
        %v1784 = vpop.permute.xlu0 %1783
        %1785 = vset.pattern.permute.xlu0 0
        %1786 = vperm.xlu0 %1785, %v1739
        %v1787 = vpop.permute.xlu0 %1786
        %1788 = vset.pattern.permute.xlu0 0
        %1789 = vperm.xlu0 %1788, %v1740
        %v1790 = vpop.permute.xlu0 %1789
        %1791 = vset.pattern.permute.xlu0 0
        %1792 = vperm.xlu0 %1791, %v1741
        %v1793 = vpop.permute.xlu0 %1792
        %1794 = vset.pattern.permute.xlu0 0
        %1795 = vperm.xlu0 %1794, %v1742
        %v1796 = vpop.permute.xlu0 %1795
        %1797 = vset.pattern.permute.xlu0 0
        %1798 = vperm.xlu0 %1797, %v1743
        %v1799 = vpop.permute.xlu0 %1798
        %1800 = vset.pattern.permute.xlu0 0
        %1801 = vperm.xlu0 %1800, %v1744
        %v1802 = vpop.permute.xlu0 %1801
        %1803 = vset.pattern.permute.xlu0 0
        %1804 = vperm.xlu0 %1803, %v1745
        %v1805 = vpop.permute.xlu0 %1804
        %1806 = vset.pattern.permute.xlu0 0
        %1807 = vperm.xlu0 %1806, %v1746
        %v1808 = vpop.permute.xlu0 %1807
        %1809 = vset.pattern.permute.xlu0 0
        %1810 = vperm.xlu0 %1809, %v1747
        %v1811 = vpop.permute.xlu0 %1810
        %1812 = vset.pattern.permute.xlu0 0
        %1813 = vperm.xlu0 %1812, %v1748
        %v1814 = vpop.permute.xlu0 %1813
        %1815 = vset.pattern.permute.xlu0 0
        %1816 = vperm.xlu0 %1815, %v1749
        %v1817 = vpop.permute.xlu0 %1816
        %1818 = vset.pattern.permute.xlu0 0
        %1819 = vperm.xlu0 %1818, %v1750
        %v1820 = vpop.permute.xlu0 %1819
        %1821 = vset.pattern.permute.xlu0 0
        %1822 = vperm.xlu0 %1821, %v1751
        %v1823 = vpop.permute.xlu0 %1822
        %1824 = vset.pattern.permute.xlu0 0
        %1825 = vperm.xlu0 %1824, %v1752
        %v1826 = vpop.permute.xlu0 %1825
        %1827 = vset.pattern.permute.xlu0 0
        %1828 = vperm.xlu0 %1827, %v1753
        %v1829 = vpop.permute.xlu0 %1828
        %1830 = vset.pattern.permute.xlu0 0
        %1831 = vperm.xlu0 %1830, %v1754
        %v1832 = vpop.permute.xlu0 %1831
        %1833 = vset.pattern.permute.xlu0 0
        %1834 = vperm.xlu0 %1833, %v1755
        %v1835 = vpop.permute.xlu0 %1834
        %1836 = vset.pattern.permute.xlu0 0
        %1837 = vperm.xlu0 %1836, %v1756
        %v1838 = vpop.permute.xlu0 %1837
        %1839 = vset.pattern.permute.xlu0 0
        %1840 = vperm.xlu0 %1839, %v1757
        %v1841 = vpop.permute.xlu0 %1840
        %1842 = vset.pattern.permute.xlu0 0
        %1843 = vperm.xlu0 %1842, %v1758
        %v1844 = vpop.permute.xlu0 %1843
        %1845 = vset.pattern.permute.xlu0 0
        %1846 = vperm.xlu0 %1845, %v1759
        %v1847 = vpop.permute.xlu0 %1846
        %1848 = vset.pattern.permute.xlu0 0
        %1849 = vperm.xlu0 %1848, %v1760
        %v1850 = vpop.permute.xlu0 %1849
        %1851 = vset.pattern.permute.xlu0 0
        %1852 = vperm.xlu0 %1851, %v1761
        %v1853 = vpop.permute.xlu0 %1852
        %1854 = vset.pattern.permute.xlu0 0
        %1855 = vperm.xlu0 %1854, %v1762
        %v1856 = vpop.permute.xlu0 %1855
        %1857 = vset.pattern.permute.xlu0 0
        %1858 = vperm.xlu0 %1857, %v1763
        %v1859 = vpop.permute.xlu0 %1858
        %1860 = vset.pattern.permute.xlu0 0
        %1861 = vperm.xlu0 %1860, %v1764
        %v1862 = vpop.permute.xlu0 %1861
        %vm1863 = vcmp.eq.s32.totalorder %v1769, %v1766
        %vm1864 = vcmp.eq.s32.totalorder %v1772, %v1766
        %vm1865 = vcmp.eq.s32.totalorder %v1775, %v1766
        %vm1866 = vcmp.eq.s32.totalorder %v1778, %v1766
        %vm1867 = vcmp.eq.s32.totalorder %v1781, %v1766
        %vm1868 = vcmp.eq.s32.totalorder %v1784, %v1766
        %vm1869 = vcmp.eq.s32.totalorder %v1787, %v1766
        %vm1870 = vcmp.eq.s32.totalorder %v1790, %v1766
        %vm1871 = vcmp.eq.s32.totalorder %v1793, %v1766
        %vm1872 = vcmp.eq.s32.totalorder %v1796, %v1766
        %vm1873 = vcmp.eq.s32.totalorder %v1799, %v1766
        %vm1874 = vcmp.eq.s32.totalorder %v1802, %v1766
        %vm1875 = vcmp.eq.s32.totalorder %v1805, %v1766
        %vm1876 = vcmp.eq.s32.totalorder %v1808, %v1766
        %vm1877 = vcmp.eq.s32.totalorder %v1811, %v1766
        %vm1878 = vcmp.eq.s32.totalorder %v1814, %v1766
        %vm1879 = vcmp.eq.s32.totalorder %v1817, %v1766
        %vm1880 = vcmp.eq.s32.totalorder %v1820, %v1766
        %vm1881 = vcmp.eq.s32.totalorder %v1823, %v1766
        %vm1882 = vcmp.eq.s32.totalorder %v1826, %v1766
        %vm1883 = vcmp.eq.s32.totalorder %v1829, %v1766
        %vm1884 = vcmp.eq.s32.totalorder %v1832, %v1766
        %vm1885 = vcmp.eq.s32.totalorder %v1835, %v1766
        %vm1886 = vcmp.eq.s32.totalorder %v1838, %v1766
        %vm1887 = vcmp.eq.s32.totalorder %v1841, %v1766
        %vm1888 = vcmp.eq.s32.totalorder %v1844, %v1766
        %vm1889 = vcmp.eq.s32.totalorder %v1847, %v1766
        %vm1890 = vcmp.eq.s32.totalorder %v1850, %v1766
        %vm1891 = vcmp.eq.s32.totalorder %v1853, %v1766
        %vm1892 = vcmp.eq.s32.totalorder %v1856, %v1766
        %vm1893 = vcmp.eq.s32.totalorder %v1859, %v1766
        %vm1894 = vcmp.eq.s32.totalorder %v1862, %v1766
        %v1895 = vsel %vm1863, 1, 0
        %v1896 = vsel %vm1864, 1, 0
        %v1897 = vsel %vm1865, 1, 0
        %v1898 = vsel %vm1866, 1, 0
        %v1899 = vsel %vm1867, 1, 0
        %v1900 = vsel %vm1868, 1, 0
        %v1901 = vsel %vm1869, 1, 0
        %v1902 = vsel %vm1870, 1, 0
        %v1903 = vsel %vm1871, 1, 0
        %v1904 = vsel %vm1872, 1, 0
        %v1905 = vsel %vm1873, 1, 0
        %v1906 = vsel %vm1874, 1, 0
        %v1907 = vsel %vm1875, 1, 0
        %v1908 = vsel %vm1876, 1, 0
        %v1909 = vsel %vm1877, 1, 0
        %v1910 = vsel %vm1878, 1, 0
        %v1911 = vsel %vm1879, 1, 0
        %v1912 = vsel %vm1880, 1, 0
        %v1913 = vsel %vm1881, 1, 0
        %v1914 = vsel %vm1882, 1, 0
        %v1915 = vsel %vm1883, 1, 0
        %v1916 = vsel %vm1884, 1, 0
        %v1917 = vsel %vm1885, 1, 0
        %v1918 = vsel %vm1886, 1, 0
        %v1919 = vsel %vm1887, 1, 0
        %v1920 = vsel %vm1888, 1, 0
        %v1921 = vsel %vm1889, 1, 0
        %v1922 = vsel %vm1890, 1, 0
        %v1923 = vsel %vm1891, 1, 0
        %v1924 = vsel %vm1892, 1, 0
        %v1925 = vsel %vm1893, 1, 0
        %v1926 = vsel %vm1894, 1, 0
        %v1927 = vcvt.s32.f32 %v1895
        %v1928 = vcvt.s32.f32 %v1896
        %v1929 = vcvt.s32.f32 %v1897
        %v1930 = vcvt.s32.f32 %v1898
        %v1931 = vcvt.s32.f32 %v1899
        %v1932 = vcvt.s32.f32 %v1900
        %v1933 = vcvt.s32.f32 %v1901
        %v1934 = vcvt.s32.f32 %v1902
        %v1935 = vcvt.s32.f32 %v1903
        %v1936 = vcvt.s32.f32 %v1904
        %v1937 = vcvt.s32.f32 %v1905
        %v1938 = vcvt.s32.f32 %v1906
        %v1939 = vcvt.s32.f32 %v1907
        %v1940 = vcvt.s32.f32 %v1908
        %v1941 = vcvt.s32.f32 %v1909
        %v1942 = vcvt.s32.f32 %v1910
        %v1943 = vcvt.s32.f32 %v1911
        %v1944 = vcvt.s32.f32 %v1912
        %v1945 = vcvt.s32.f32 %v1913
        %v1946 = vcvt.s32.f32 %v1914
        %v1947 = vcvt.s32.f32 %v1915
        %v1948 = vcvt.s32.f32 %v1916
        %v1949 = vcvt.s32.f32 %v1917
        %v1950 = vcvt.s32.f32 %v1918
        %v1951 = vcvt.s32.f32 %v1919
        %v1952 = vcvt.s32.f32 %v1920
        %v1953 = vcvt.s32.f32 %v1921
        %v1954 = vcvt.s32.f32 %v1922
        %v1955 = vcvt.s32.f32 %v1923
        %v1956 = vcvt.s32.f32 %v1924
        %v1957 = vcvt.s32.f32 %v1925
        %v1958 = vcvt.s32.f32 %v1926
        %v1959 = vpack.c.bf16 %v1928, %v1927
        %v1960 = vpack.c.bf16 %v1930, %v1929
        %v1961 = vpack.c.bf16 %v1932, %v1931
        %v1962 = vpack.c.bf16 %v1934, %v1933
        %v1963 = vpack.c.bf16 %v1936, %v1935
        %v1964 = vpack.c.bf16 %v1938, %v1937
        %v1965 = vpack.c.bf16 %v1940, %v1939
        %v1966 = vpack.c.bf16 %v1942, %v1941
        %v1967 = vpack.c.bf16 %v1944, %v1943
        %v1968 = vpack.c.bf16 %v1946, %v1945
        %v1969 = vpack.c.bf16 %v1948, %v1947
        %v1970 = vpack.c.bf16 %v1950, %v1949
        %v1971 = vpack.c.bf16 %v1952, %v1951
        %v1972 = vpack.c.bf16 %v1954, %v1953
        %v1973 = vpack.c.bf16 %v1956, %v1955
        %v1974 = vpack.c.bf16 %v1958, %v1957
        %1975 = vmatprep.subr.bf16.mxu0 0
        %1976 = vmatpush1.bf16.msra.mxu0 %v1959
        %1977 = vmatprep.subr.bf16.mxu0 0
        %1978 = vmatpush1.bf16.msra.mxu0 %v1960
        %1979 = vmatprep.subr.bf16.mxu0 0
        %1980 = vmatpush1.bf16.msra.mxu0 %v1961
        %1981 = vmatprep.subr.bf16.mxu0 0
        %1982 = vmatpush1.bf16.msra.mxu0 %v1962
        %1983 = vmatprep.subr.bf16.mxu0 0
        %1984 = vmatpush1.bf16.msra.mxu0 %v1963
        %1985 = vmatprep.subr.bf16.mxu0 0
        %1986 = vmatpush1.bf16.msra.mxu0 %v1964
        %1987 = vmatprep.subr.bf16.mxu0 0
        %1988 = vmatpush1.bf16.msra.mxu0 %v1965
        %1989 = vmatprep.subr.bf16.mxu0 0
        %1990 = vmatpush1.bf16.msra.mxu0 %v1966
        %1991 = vmatprep.subr.bf16.mxu0 0
        %1992 = vmatpush1.bf16.msra.mxu0 0
        %1993 = vmatprep.subr.bf16.mxu0 0
        %1994 = vmatpush1.bf16.msra.mxu0 0
        %1995 = vmatprep.subr.bf16.mxu0 0
        %1996 = vmatpush1.bf16.msra.mxu0 0
        %1997 = vmatprep.subr.bf16.mxu0 0
        %1998 = vmatpush1.bf16.msra.mxu0 0
        %1999 = vmatprep.subr.bf16.mxu0 0
        %2000 = vmatpush1.bf16.msra.mxu0 0
        %2001 = vmatprep.subr.bf16.mxu0 0
        %2002 = vmatpush1.bf16.msra.mxu0 0
        %2003 = vmatprep.subr.bf16.mxu0 0
        %2004 = vmatpush1.bf16.msra.mxu0 0
        %2005 = vmatprep.subr.bf16.mxu0 0
        %2006 = vmatpush1.bf16.msra.mxu0 0
        %2007 = vmatprep.mubr.bf16.mxu0 0
        %2008 = vmatmul.mubr.bf16.gmra.mrb[0].mxu0 %v1651
        %v2009 = vpop.f32.mrb[0].mxu0
        %v2010 = vadd.f32 0.0, %v2009
        %v2011 = vpop.f32.mrb[0].mxu0
        %v2012 = vpop.f32.mrb[0].mxu0
        %v2013 = vpop.f32.mrb[0].mxu0
        %2014 = vdwg.mxu0
        %2015 = vmatprep.subr.bf16.mxu0 0
        %2016 = vmatpush1.bf16.msra.mxu0 %v1967
        %2017 = vmatprep.subr.bf16.mxu0 0
        %2018 = vmatpush1.bf16.msra.mxu0 %v1968
        %2019 = vmatprep.subr.bf16.mxu0 0
        %2020 = vmatpush1.bf16.msra.mxu0 %v1969
        %2021 = vmatprep.subr.bf16.mxu0 0
        %2022 = vmatpush1.bf16.msra.mxu0 %v1970
        %2023 = vmatprep.subr.bf16.mxu0 0
        %2024 = vmatpush1.bf16.msra.mxu0 %v1971
        %2025 = vmatprep.subr.bf16.mxu0 0
        %2026 = vmatpush1.bf16.msra.mxu0 %v1972
        %2027 = vmatprep.subr.bf16.mxu0 0
        %2028 = vmatpush1.bf16.msra.mxu0 %v1973
        %2029 = vmatprep.subr.bf16.mxu0 0
        %2030 = vmatpush1.bf16.msra.mxu0 %v1974
        %2031 = vmatprep.subr.bf16.mxu0 0
        %2032 = vmatpush1.bf16.msra.mxu0 0
        %2033 = vmatprep.subr.bf16.mxu0 0
        %2034 = vmatpush1.bf16.msra.mxu0 0
        %2035 = vmatprep.subr.bf16.mxu0 0
        %2036 = vmatpush1.bf16.msra.mxu0 0
        %2037 = vmatprep.subr.bf16.mxu0 0
        %2038 = vmatpush1.bf16.msra.mxu0 0
        %2039 = vmatprep.subr.bf16.mxu0 0
        %2040 = vmatpush1.bf16.msra.mxu0 0
        %2041 = vmatprep.subr.bf16.mxu0 0
        %2042 = vmatpush1.bf16.msra.mxu0 0
        %2043 = vmatprep.subr.bf16.mxu0 0
        %2044 = vmatpush1.bf16.msra.mxu0 0
        %2045 = vmatprep.subr.bf16.mxu0 0
        %2046 = vmatpush1.bf16.msra.mxu0 0
        %2047 = vmatprep.mubr.bf16.mxu0 0
        %2048 = vmatmul.mubr.bf16.gmra.mrb[0].mxu0 %v1652
        %v2049 = vpop.f32.mrb[0].mxu0
        %v2050 = vadd.f32 0.0, %v2049
        %v2051 = vpop.f32.mrb[0].mxu0
        %v2052 = vpop.f32.mrb[0].mxu0
        %v2053 = vpop.f32.mrb[0].mxu0
        %2054 = vdwg.mxu0
        %v2055 = vld [vmem:[%s11] sm:$0xff]
        %v2056 = vlaneseq
        %v2057 = vshrl.u32 %v2056, 7
        %v2058 = vsub.s32 0, %v2057
        %v2059 = vrot.slane %v2055, %v2058
        %v2060 = vmul.f32 %v1267, %v2059
        %v2061 = vmul.f32 %v1268, %v2059
        %v2062 = vlaneseq
        %v2063 = vshrl.u32 %v2062, 7
        %v2064 = vsub.s32 1, %v2063
        %v2065 = vrot.slane %v2055, %v2064
        %v2066 = vmul.f32 %v1688, %v2065
        %v2067 = vmul.f32 %v1728, %v2065
        %v2068 = vadd.f32 %v2060, %v2066
        %v2069 = vadd.f32 %v2061, %v2067
        %v2070 = vunpack.c.l.bf16 %v701
        %v2071 = vunpack.c.h.bf16 %v701
        %v2072 = vlaneseq
        %v2073 = vshrl.u32 %v2072, 7
        %v2074 = vsub.s32 2, %v2073
        %v2075 = vrot.slane %v2055, %v2074
        %v2076 = vmul.f32 %v2070, %v2075
        %v2077 = vmul.f32 %v2071, %v2075
        %v2078 = vadd.f32 %v2068, %v2076
        %v2079 = vadd.f32 %v2069, %v2077
        %2080 = vadd.xlane.f32.xlu0 %v2078
        %v2081 = vpop.xlane.xlu0 %2080
        %2082 = vadd.xlane.f32.xlu0 %v2079
        %v2083 = vpop.xlane.xlu0 %2082
        %v2084 = vld [vmem:[#allocation5] sm:$0x1]
        %v2086 = vlaneseq
        %v2087 = vshrl.u32 %v2086, 7
        %v2088 = vsub.s32 0, %v2087
        %v2089 = vrot.slane %v2084, %v2088
        %v2091 = vadd.f32 %v2081, %v2089
        %v2092 = vadd.f32 %v2083, %v2089
        %v2093 = vxor.u32 %v2091, 2147483648
        %v2094 = vxor.u32 %v2092, 2147483648
        %v2095 = vmul.f32 %v2093, 1.442695
        %v2096 = vpow.pop %v2095
        %v2097 = vmul.f32 %v2094, 1.442695
        %v2098 = vpow.pop %v2097
        %v2099 = vadd.f32 %v2096, 1.0
        %v2100 = vadd.f32 %v2098, 1.0
        %v2101 = vrcp.pop %v2099
        %v2102 = vmul.f32 1.0, %v2101
        %v2103 = vrcp.pop %v2100
        %v2104 = vmul.f32 1.0, %v2103
        // Predicated region
        $region105: #{tpu_custom_call.1} parent=79 // pred_check
          %p2105 = pneg %p682
        $region106: #{tpu_custom_call.1} parent=79 // pred_check_branch
          %2107 = sbr.rel (%p2105) target = $region108
        $region107: #{tpu_custom_call.1} parent=79 // pred_region
          %v2108 = vpack.c.bf16 %v1728, %v1688
          %v2109 = vld [vmem:[#allocation14] sm:$0xf]
          %v2110 = vld [vmem:[#allocation14 + $0x4] sm:$0xf]
          %v2111 = vld [vmem:[#allocation14 + $0x8] sm:$0xf]
          %v2112 = vld [vmem:[#allocation14 + $0xc] sm:$0xf]
          %v2113 = vld [vmem:[#allocation14 + $0x10] sm:$0xf]
          %v2114 = vld [vmem:[#allocation14 + $0x14] sm:$0xf]
          %v2115 = vld [vmem:[#allocation14 + $0x18] sm:$0xf]
          %v2116 = vld [vmem:[#allocation14 + $0x1c] sm:$0xf]
          %v2117 = vld [vmem:[#allocation14 + $0x20] sm:$0xf]
          %v2118 = vld [vmem:[#allocation14 + $0x24] sm:$0xf]
          %v2119 = vld [vmem:[#allocation14 + $0x28] sm:$0xf]
          %v2120 = vld [vmem:[#allocation14 + $0x2c] sm:$0xf]
          %v2121 = vld [vmem:[#allocation14 + $0x30] sm:$0xf]
          %v2122 = vld [vmem:[#allocation14 + $0x34] sm:$0xf]
          %v2123 = vld [vmem:[#allocation14 + $0x38] sm:$0xf]
          %v2124 = vld [vmem:[#allocation14 + $0x3c] sm:$0xf]
          %v2125 = vld [vmem:[%s14] sm:$0x1]
          %v2127 = vlaneseq
          %v2128 = vshrl.u32 %v2127, 7
          %v2129 = vsub.s32 0, %v2128
          %v2130 = vrot.slane %v2125, %v2129
          %v2148 = vunpack.c.l.b16 %v2109
          %v2149 = vunpack.c.l.b16 %v2110
          %v2150 = vunpack.c.l.b16 %v2111
          %v2151 = vunpack.c.l.b16 %v2112
          %v2152 = vunpack.c.l.b16 %v2113
          %v2153 = vunpack.c.l.b16 %v2114
          %v2154 = vunpack.c.l.b16 %v2115
          %v2155 = vunpack.c.l.b16 %v2116
          %v2156 = vunpack.c.l.b16 %v2117
          %v2157 = vunpack.c.l.b16 %v2118
          %v2158 = vunpack.c.l.b16 %v2119
          %v2159 = vunpack.c.l.b16 %v2120
          %v2160 = vunpack.c.l.b16 %v2121
          %v2161 = vunpack.c.l.b16 %v2122
          %v2162 = vunpack.c.l.b16 %v2123
          %v2163 = vunpack.c.l.b16 %v2124
          %v2164 = vpack.c.b16 %v2149, %v2148
          %v2165 = vpack.c.b16 %v2151, %v2150
          %v2166 = vpack.c.b16 %v2153, %v2152
          %v2167 = vpack.c.b16 %v2155, %v2154
          %v2168 = vpack.c.b16 %v2157, %v2156
          %v2169 = vpack.c.b16 %v2159, %v2158
          %v2170 = vpack.c.b16 %v2161, %v2160
          %v2171 = vpack.c.b16 %v2163, %v2162
          %2180 = vmatprep.subr.bf16.mxu0 0
          %2181 = vmatpush1.bf16.msra.mxu0 %v2164
          %2182 = vmatprep.subr.bf16.mxu0 0
          %2183 = vmatpush1.bf16.msra.mxu0 %v2165
          %2184 = vmatprep.subr.bf16.mxu0 0
          %2185 = vmatpush1.bf16.msra.mxu0 %v2166
          %2186 = vmatprep.subr.bf16.mxu0 0
          %2187 = vmatpush1.bf16.msra.mxu0 %v2167
          %2188 = vmatprep.subr.bf16.mxu0 0
          %2189 = vmatpush1.bf16.msra.mxu0 %v2168
          %2190 = vmatprep.subr.bf16.mxu0 0
          %2191 = vmatpush1.bf16.msra.mxu0 %v2169
          %2192 = vmatprep.subr.bf16.mxu0 0
          %2193 = vmatpush1.bf16.msra.mxu0 %v2170
          %2194 = vmatprep.subr.bf16.mxu0 0
          %2195 = vmatpush1.bf16.msra.mxu0 %v2171
          %2196 = vmatprep.subr.bf16.mxu0 0
          %2197 = vmatpush1.bf16.msra.mxu0 0
          %2198 = vmatprep.subr.bf16.mxu0 0
          %2199 = vmatpush1.bf16.msra.mxu0 0
          %2200 = vmatprep.subr.bf16.mxu0 0
          %2201 = vmatpush1.bf16.msra.mxu0 0
          %2202 = vmatprep.subr.bf16.mxu0 0
          %2203 = vmatpush1.bf16.msra.mxu0 0
          %2204 = vmatprep.subr.bf16.mxu0 0
          %2205 = vmatpush1.bf16.msra.mxu0 0
          %2206 = vmatprep.subr.bf16.mxu0 0
          %2207 = vmatpush1.bf16.msra.mxu0 0
          %2208 = vmatprep.subr.bf16.mxu0 0
          %2209 = vmatpush1.bf16.msra.mxu0 0
          %2210 = vmatprep.subr.bf16.mxu0 0
          %2211 = vmatpush1.bf16.msra.mxu0 0
          %2212 = vmatprep.mubr.bf16.mxu0 0
          %2213 = vmatmul.mubr.bf16.gmra.mrb[0].mxu0 %v2108
          %v2214 = vpop.f32.mrb[0].mxu0
          %v2215 = vadd.f32 %v2130, %v2214
          %v2216 = vpop.f32.mrb[0].mxu0
          %v2217 = vpop.f32.mrb[0].mxu0
          %v2218 = vadd.f32 %v2130, %v2217
          %v2219 = vpop.f32.mrb[0].mxu0
          %2220 = vdwg.mxu0
          %2221 = vst [vmem:[#allocation16] sm:$0xff] %v2215
          %2222 = vst [vmem:[#allocation16 + $0x8] sm:$0xff] %v2218
        $region108: #{tpu_custom_call.1} parent=79 // pred_fallthru
          _
        %v2223 = vsub.f32 1.0, %v2102
        %v2224 = vsub.f32 1.0, %v2104
        %2226 = vset.pattern.permute.xlu0 0
        %2227 = vperm.xlu0 %2226, %v2223
        %v2228 = vpop.permute.xlu0 %2227
        %2231 = vset.pattern.permute.xlu0 0
        %2232 = vperm.xlu0 %2231, %v2224
        %v2233 = vpop.permute.xlu0 %2232
        %v2235 = vmul.f32 %v2228, %v2010
        %v2236 = vmul.f32 %v2233, %v2050
        %2238 = vset.pattern.permute.xlu0 0
        %2239 = vperm.xlu0 %2238, %v2102
        %v2240 = vpop.permute.xlu0 %2239
        %2243 = vset.pattern.permute.xlu0 0
        %2244 = vperm.xlu0 %2243, %v2104
        %v2245 = vpop.permute.xlu0 %2244
        %v2247 = vmul.f32 %v2240, %v1400
        %v2248 = vmul.f32 %v2245, %v1401
        %v2249 = vadd.f32 %v2235, %v2247
        %v2250 = vadd.f32 %v2236, %v2248
        %v2251 = vpack.c.bf16 %v2250, %v2249
        %v2253 = vunpack.c.l.b16 %v2251
        %v2254 = vunpack.c.h.b16 %v2251
        %v2255 = vpack.c.b16 %v2253, %v2253
        %v2256 = vpack.c.b16 %v2254, %v2254
        %2259 = vst [vmem:[%s655] sm:$0xf] %v2255
        %2260 = vst [vmem:[%s655 + $0x4] sm:$0xf] %v2256
        %2261 = vmax.xlane.f32.xlu0 %v2249
        %v2262 = vpop.xlane.xlu0 %2261
        %2263 = vmax.xlane.f32.xlu0 %v2250
        %v2264 = vpop.xlane.xlu0 %2263
        %vm2265 = vcmp.eq.f32.partialorder %v2249, %v2262
        %vm2266 = vcmp.eq.f32.partialorder %v2250, %v2264
        %v2267 = vsel %vm2265, %v1766, 128
        %v2268 = vsel %vm2266, %v1766, 128
        %v2269 = vand.u32 %v2267, 65535
        %v2270 = vshra.s32 %v2267, 16
        %v2271 = vcvt.s32.f32 %v2269
        %v2272 = vcvt.s32.f32 %v2270
        %2273 = vmin.xlane.f32.xlu0 %v2272
        %v2274 = vpop.xlane.xlu0 %2273
        %vm2275 = vcmp.eq.f32.partialorder %v2272, %v2274
        %v2276 = vsel %vm2275, %v2271, inf
        %2277 = vmin.xlane.f32.xlu0 %v2276
        %v2278 = vpop.xlane.xlu0 %2277
        %v2279 = vcvt.f32.s32 %v2278
        %v2280 = vcvt.f32.s32 %v2274
        %v2281 = vshll.u32 %v2280, 16
        %v2282 = vadd.s32 %v2281, %v2279
        %v2283 = vand.u32 %v2268, 65535
        %v2284 = vshra.s32 %v2268, 16
        %v2285 = vcvt.s32.f32 %v2283
        %v2286 = vcvt.s32.f32 %v2284
        %2287 = vmin.xlane.f32.xlu0 %v2286
        %v2288 = vpop.xlane.xlu0 %2287
        %vm2289 = vcmp.eq.f32.partialorder %v2286, %v2288
        %v2290 = vsel %vm2289, %v2285, inf
        %2291 = vmin.xlane.f32.xlu0 %v2290
        %v2292 = vpop.xlane.xlu0 %2291
        %v2293 = vcvt.f32.s32 %v2292
        %v2294 = vcvt.f32.s32 %v2288
        %v2295 = vshll.u32 %v2294, 16
        %v2296 = vadd.s32 %v2295, %v2293
        %vm2297 = vcmp.eq.s32.totalorder %v1766, %v2282
        %vm2298 = vcmp.eq.s32.totalorder %v1766, %v2296
        %v2299 = vsel %vm2297, 1, 0
        %v2300 = vsel %vm2298, 1, 0
        %v2301 = vcvt.s32.f32 %v2299
        %v2302 = vcvt.s32.f32 %v2300
        %v2303 = vpack.c.bf16 %v2302, %v2301
        %v2304 = vld [vmem:[%s6] sm:$0xf]
        %v2305 = vld [vmem:[%s6 + $0x4] sm:$0xf]
        %v2306 = vld [vmem:[%s6 + $0x8] sm:$0xf]
        %v2307 = vld [vmem:[%s6 + $0xc] sm:$0xf]
        %v2308 = vld [vmem:[%s6 + $0x10] sm:$0xf]
        %v2309 = vld [vmem:[%s6 + $0x14] sm:$0xf]
        %v2310 = vld [vmem:[%s6 + $0x18] sm:$0xf]
        %v2311 = vld [vmem:[%s6 + $0x1c] sm:$0xf]
        %v2312 = vld [vmem:[%s6 + $0x20] sm:$0xf]
        %v2313 = vld [vmem:[%s6 + $0x24] sm:$0xf]
        %v2314 = vld [vmem:[%s6 + $0x28] sm:$0xf]
        %v2315 = vld [vmem:[%s6 + $0x2c] sm:$0xf]
        %v2316 = vld [vmem:[%s6 + $0x30] sm:$0xf]
        %v2317 = vld [vmem:[%s6 + $0x34] sm:$0xf]
        %v2318 = vld [vmem:[%s6 + $0x38] sm:$0xf]
        %v2319 = vld [vmem:[%s6 + $0x3c] sm:$0xf]
        %v2336 = vunpack.c.l.b16 %v2304
        %v2337 = vunpack.c.l.b16 %v2305
        %v2338 = vunpack.c.l.b16 %v2306
        %v2339 = vunpack.c.l.b16 %v2307
        %v2340 = vunpack.c.l.b16 %v2308
        %v2341 = vunpack.c.l.b16 %v2309
        %v2342 = vunpack.c.l.b16 %v2310
        %v2343 = vunpack.c.l.b16 %v2311
        %v2344 = vunpack.c.l.b16 %v2312
        %v2345 = vunpack.c.l.b16 %v2313
        %v2346 = vunpack.c.l.b16 %v2314
        %v2347 = vunpack.c.l.b16 %v2315
        %v2348 = vunpack.c.l.b16 %v2316
        %v2349 = vunpack.c.l.b16 %v2317
        %v2350 = vunpack.c.l.b16 %v2318
        %v2351 = vunpack.c.l.b16 %v2319
        %v2352 = vpack.c.b16 %v2337, %v2336
        %v2353 = vpack.c.b16 %v2339, %v2338
        %v2354 = vpack.c.b16 %v2341, %v2340
        %v2355 = vpack.c.b16 %v2343, %v2342
        %v2356 = vpack.c.b16 %v2345, %v2344
        %v2357 = vpack.c.b16 %v2347, %v2346
        %v2358 = vpack.c.b16 %v2349, %v2348
        %v2359 = vpack.c.b16 %v2351, %v2350
        %2368 = vmatprep.subr.bf16.mxu0 0
        %2369 = vmatpush1.bf16.msra.mxu0 %v2352
        %2370 = vmatprep.subr.bf16.mxu0 0
        %2371 = vmatpush1.bf16.msra.mxu0 %v2353
        %2372 = vmatprep.subr.bf16.mxu0 0
        %2373 = vmatpush1.bf16.msra.mxu0 %v2354
        %2374 = vmatprep.subr.bf16.mxu0 0
        %2375 = vmatpush1.bf16.msra.mxu0 %v2355
        %2376 = vmatprep.subr.bf16.mxu0 0
        %2377 = vmatpush1.bf16.msra.mxu0 %v2356
        %2378 = vmatprep.subr.bf16.mxu0 0
        %2379 = vmatpush1.bf16.msra.mxu0 %v2357
        %2380 = vmatprep.subr.bf16.mxu0 0
        %2381 = vmatpush1.bf16.msra.mxu0 %v2358
        %2382 = vmatprep.subr.bf16.mxu0 0
        %2383 = vmatpush1.bf16.msra.mxu0 %v2359
        %2384 = vmatprep.subr.bf16.mxu0 0
        %2385 = vmatpush1.bf16.msra.mxu0 0
        %2386 = vmatprep.subr.bf16.mxu0 0
        %2387 = vmatpush1.bf16.msra.mxu0 0
        %2388 = vmatprep.subr.bf16.mxu0 0
        %2389 = vmatpush1.bf16.msra.mxu0 0
        %2390 = vmatprep.subr.bf16.mxu0 0
        %2391 = vmatpush1.bf16.msra.mxu0 0
        %2392 = vmatprep.subr.bf16.mxu0 0
        %2393 = vmatpush1.bf16.msra.mxu0 0
        %2394 = vmatprep.subr.bf16.mxu0 0
        %2395 = vmatpush1.bf16.msra.mxu0 0
        %2396 = vmatprep.subr.bf16.mxu0 0
        %2397 = vmatpush1.bf16.msra.mxu0 0
        %2398 = vmatprep.subr.bf16.mxu0 0
        %2399 = vmatpush1.bf16.msra.mxu0 0
        %2400 = vmatprep.mubr.bf16.mxu0 0
        %2401 = vmatmul.mubr.bf16.gmra.mrb[0].mxu0 %v2303
        %v2402 = vpop.f32.mrb[0].mxu0
        %v2403 = vadd.f32 0.0, %v2402
        %v2404 = vpop.f32.mrb[0].mxu0
        %v2405 = vpop.f32.mrb[0].mxu0
        %v2406 = vadd.f32 0.0, %v2405
        %v2407 = vpop.f32.mrb[0].mxu0
        %2408 = vdwg.mxu0
        %v2409 = vpack.c.bf16 %v2406, %v2403
        %2410 = vst [vmem:[#allocation4] sm:$0xff] %v2409
        %2411 = vst [vmem:[#allocation2] sm:$0xff] %v1267
        %2412 = vst [vmem:[#allocation2 + $0x8] sm:$0xff] %v1268
        %2413 = vst [vmem:[#allocation3] sm:$0xff] %v1269
        %s2414 = sand.u32 %s399, 1
        %s2415 = scalar_lea.sflag [#allocation8], %s2414
        %s2416 = sand.u32 %s399, 1
        %s2417 = smul.addr %s2416, 8
        %s2418 = scalar_lea.vmem [#allocation15], %s2417
        // Predicated region
        $region109: #{tpu_custom_call.1} parent=79 // pred_check
          %p2419 = pneg %p409
        $region110: #{tpu_custom_call.1} parent=79 // pred_check_branch
          %2421 = sbr.rel (%p2419) target = $region112
        $region111: #{tpu_custom_call.1} parent=79 // pred_region
          %s2422 = smul.u32 2, %s41
          %s2424 = ssub.s32 128, 128
          %2425 = vsyncadd %s2415, %s2424
          %s2426 = smul.addr %s42, 2
          %s2427 = sadd.s32 %s2422, %s2426
          %s2428 = smul.addr %s2427, 64
          %s2429 = scalar_lea.hbm %s15, %s2428
          %s2430 = sshll.u32 %s2418, 4
          %s2431 = int_to_ptr.vmem [resolvable:$true] %s2430
          %2436 = dma.vmem_to_hbm [thread:$0]  %s2431, 128, %s2429, %s2415, 64, 64, 4
        $region112: #{tpu_custom_call.1} parent=79 // pred_fallthru
          _
        // Predicated region
        $region113: #{tpu_custom_call.1} parent=79 // pred_check
          %p2437 = pneg %p435
        $region114: #{tpu_custom_call.1} parent=79 // pred_check_branch
          %2439 = sbr.rel (%p2437) target = $region116
        $region115: #{tpu_custom_call.1} parent=79 // pred_region
          %s2440 = smul.u32 2, %s41
          %s2442 = ssub.s32 256, 256
          %2443 = vsyncadd [#allocation17], %s2442
          %s2444 = smul.addr %s2440, 128
          %s2445 = scalar_lea.hbm %s16, %s2444
          %s2446 = sshll.u32 [#allocation16], 4
          %s2447 = int_to_ptr.vmem [resolvable:$true] %s2446
          %2452 = dma.vmem_to_hbm [thread:$0]  %s2447, 256, %s2445, [#allocation17], 128, 128, 8
        $region116: #{tpu_custom_call.1} parent=79 // pred_fallthru
          _
        // Predicated region
        $region117: #{tpu_custom_call.1} parent=79 // pred_check
          %p2453 = pneg %p435
        $region118: #{tpu_custom_call.1} parent=79 // pred_check_branch
          %2455 = sbr.rel (%p2453) target = $region120
        $region119: #{tpu_custom_call.1} parent=79 // pred_region
          %2456 = dma.done [#allocation17], 256
        $region120: #{tpu_custom_call.1} parent=79 // pred_fallthru
          _
      $region80: #{tpu_custom_call.1} parent=5 // pred_fallthru
        _
      %p2457 = scmp.le.s32.totalorder 2, %s32
      // Predicated region
      $region121: #{tpu_custom_call.1} parent=5 // pred_check
        %p2458 = pneg %p2457
      $region122: #{tpu_custom_call.1} parent=5 // pred_check_branch
        %2460 = sbr.rel (%p2458) target = $region124
      $region123: #{tpu_custom_call.1} parent=5 // pred_region
        %s2461 = ssub.s32 %s32, 2
        // Predicated region
        $region125: #{tpu_custom_call.1} parent=123 // pred_check
          %p2462 = pneg %p415
        $region126: #{tpu_custom_call.1} parent=123 // pred_check_branch
          %2464 = sbr.rel (%p2462) target = $region128
        $region127: #{tpu_custom_call.1} parent=123 // pred_region
          %s2465 = sand.u32 %s400, 1
          %s2466 = scalar_lea.sflag [#allocation8], %s2465
          %s2467 = sand.u32 %s400, 1
          %s2468 = smul.addr %s2467, 8
          %s2469 = scalar_lea.vmem [#allocation15], %s2468
          %2470 = dma.done %s2466, 128
        $region128: #{tpu_custom_call.1} parent=123 // pred_fallthru
          _
      $region124: #{tpu_custom_call.1} parent=5 // pred_fallthru
        _
    $region6: #{tpu_custom_call.1} parent=1 // loop_footer
      %s36 = sadd.s32 1, %s32
    $region7: #{tpu_custom_call.1} parent=1 // loop_footer_branch
      %31 = sbr.rel target = $region3
    $region8: #{tpu_custom_call.1} parent=1 // loop_exit
      _
    %2471 = vsyncpa [#allocation7], 1
    %s2472 = scalar_lea.sflag [#allocation7], 1
    %2473 = vsyncpa %s2472, 1
    %2474 = vsyncpa [#allocation10], 1
    %2475 = vsyncpa [#allocation13], 1
    %2476 = vsyncpa [#allocation8], 1
    %s2477 = scalar_lea.sflag [#allocation8], 1
    %2478 = vsyncpa %s2477, 1
    %2479 = vsyncpa [#allocation17], 1

// kernel: tpu_custom_call.1
$region0: #{tpu_custom_call.1}
  #allocation0 [shape = 'u32[]', space=smem, size = 0x4, offset = 0x4, fixed_abs, tag = 'smem constant byte address 0x4 - core index']
  #allocation1 [shape = 'u32[144,128]{1,0:T(1,128)}', space=vmem, size = 0x12000, scoped, tag = 'internal scratch']
  #allocation2 [shape = 'f32[16,128]{1,0:T(8,128)}', space=vmem, size = 0x2000, scoped, tag = 'scratch operand']
  #allocation3 [shape = 'bf16[16,128]{1,0:T(16,128)(2,1)}', space=vmem, size = 0x1000, scoped, tag = 'scratch operand']
  #allocation4 [shape = 'bf16[16,128]{1,0:T(16,128)(2,1)}', space=vmem, size = 0x1000, scoped, tag = 'scratch operand']
  #allocation5 [shape = 'f32[1,1]{1,0:T(1,128)S(1)}', space=vmem, size = 0x200, scoped, tag = 'scoped memory for tpu_custom_call.1']
  %s0 = inlined_call_operand.vmem [shape: bf16[16,128], index: 0, kind: input, shape index: {}]
  %s1 = inlined_call_operand.vmem [shape: f32[16,128], index: 1, kind: input, shape index: {}]
  %s2 = inlined_call_operand.hbm [shape: bf16[2,128,128], index: 2, kind: input, shape index: {}]
  %s3 = inlined_call_operand.vmem [shape: s32[2,128,1], index: 3, kind: input, shape index: {}]
  %s4 = inlined_call_operand.hbm [shape: f32[2,1,128], index: 4, kind: input, shape index: {}]
  %s5 = inlined_call_operand.hbm [shape: f32[1,128], index: 5, kind: input, shape index: {}]
  %s6 = inlined_call_operand.vmem [shape: bf16[128,128], index: 6, kind: input, shape index: {}]
  %s7 = inlined_call_operand.vmem [shape: bf16[128,384], index: 7, kind: input, shape index: {}]
  %s8 = inlined_call_operand.hbm [shape: bf16[128,384], index: 8, kind: input, shape index: {}]
  %s9 = inlined_call_operand.vmem [shape: f32[1,384], index: 9, kind: input, shape index: {}]
  %s10 = inlined_call_operand.vmem [shape: f32[1,384], index: 10, kind: input, shape index: {}]
  %s11 = inlined_call_operand.vmem [shape: f32[8,128], index: 11, kind: input, shape index: {}]
  %s12 = inlined_call_operand.<no memory space> [shape: f32[1,1], index: 12, kind: input, shape index: {}]
  %s13 = inlined_call_operand.hbm [shape: bf16[128,128], index: 13, kind: input, shape index: {}]
  %s14 = inlined_call_operand.vmem [shape: f32[1,128], index: 14, kind: input, shape index: {}]
  %s15 = inlined_call_operand.hbm [shape: bf16[10,16,128], index: 15, kind: output, shape index: {0}]
  %s16 = inlined_call_operand.hbm [shape: f32[16,128], index: 16, kind: output, shape index: {1}]
  %17 = xla_tuple %s15, %s16
  %s18 = sld [smem:[#allocation0]]
  $region129: #{tpu_custom_call.1} parent=0
    _
  %s20 = ssub.s32 1, %s18
  %s21 = scalar_select 0, %s20, %s18
  %v22 = vstv %s12
  %23 = vst [vmem:[#allocation5] sm:$0x1] %v22
  $region1: #{tpu_custom_call.1} parent=0
    #allocation6 [shape = 'u8[65536]{0}', space=vmem, size = 0x10000, scoped, tag = 'input window, operand 2, single buffered']
    #allocation7 [shape = 's32[2]{0}', space=sflag, size = 0x8, scoped, tag = 'scoped memory for tpu_custom_call.1']
    #allocation8 [shape = 's32[2]{0}', space=sflag, size = 0x8, scoped, tag = 'scoped memory for tpu_custom_call.1']
    #allocation9 [shape = 'u8[1024]{0}', space=vmem, size = 0x400, scoped, tag = 'input window, operand 4, single buffered']
    #allocation10 [shape = 's32[1]{0}', space=sflag, size = 0x4, scoped, tag = 'scoped memory for tpu_custom_call.1']
    #allocation11 [shape = 'u8[512]{0}', space=vmem, size = 0x400, scoped, tag = 'input window, operand 5, single buffered']
    #allocation12 [shape = 'u8[98304]{0}', space=vmem, size = 0x18000, scoped, tag = 'input window, operand 8, single buffered']
    #allocation13 [shape = 's32[1]{0}', space=sflag, size = 0x4, scoped, tag = 'scoped memory for tpu_custom_call.1']
    #allocation14 [shape = 'u8[32768]{0}', space=vmem, size = 0x8000, scoped, tag = 'input window, operand 13, single buffered']
    #allocation15 [shape = 'u8[8192]{0}', space=vmem, size = 0x2000, scoped, tag = 'output window, operand 0']
    #allocation16 [shape = 'u8[8192]{0}', space=vmem, size = 0x2000, scoped, tag = 'output window, operand 1, single buffered']
    #allocation17 [shape = 's32[1]{0}', space=sflag, size = 0x4, scoped, tag = 'scoped memory for tpu_custom_call.1']
    %24 = vsyncpa [#allocation7], 0
    %25 = vsyncpa [#allocation10], 0
    %26 = vsyncpa [#allocation13], 0
    %27 = vsyncpa [#allocation8], 0
    %s28 = scalar_lea.sflag [#allocation8], 1
    %29 = vsyncpa %s28, 0
    %30 = vsyncpa [#allocation17], 0
    loop: start=0, step=1, limit=12
    $region2: #{tpu_custom_call.1} parent=1 // loop_pre_header
      _
    $region3: #{tpu_custom_call.1} parent=1 // loop_header
      %s32 = sphi 0, %s36
      %p33 = scmp.ge.s32.totalorder %s32, 12
      %s39 = sphi 0, %s51
      %s40 = sphi 0, %s47
      %s41 = sphi 0, %s39
      %s42 = sphi 0, %s40
      %s43 = sphi 0, %s41
      %s44 = sphi 0, %s42
      %s54 = sphi 0, %s56
      %s57 = sphi 0, %s54
      %s58 = sphi 0, %s57
      %s74 = sphi 0, %s58
      %s80 = sphi 0, %s82
      %s83 = sphi 0, %s80
      %s84 = sphi 0, %s83
      %s100 = sphi 0, %s84
      %s106 = sphi 0, %s108
      %s109 = sphi 0, %s106
      %s110 = sphi 0, %s109
      %s126 = sphi 0, %s110
      %s132 = sphi 0, %s134
      %s135 = sphi 0, %s132
      %s136 = sphi 0, %s135
      %s152 = sphi 0, %s136
      %s158 = sphi 0, %s160
      %s161 = sphi 0, %s158
      %s162 = sphi 0, %s161
      %s178 = sphi 0, %s162
      %s182 = sphi 0, %s182
      %s184 = sphi 0, %s182
      %s185 = sphi 0, %s184
      %s199 = sphi 0, %s185
      %s203 = sphi 0, %s203
      %s205 = sphi 0, %s203
      %s206 = sphi 0, %s205
      %s220 = sphi 0, %s206
      %s224 = sphi 0, %s224
      %s226 = sphi 0, %s224
      %s227 = sphi 0, %s226
      %s241 = sphi 0, %s227
      %s245 = sphi 0, %s245
      %s247 = sphi 0, %s245
      %s248 = sphi 0, %s247
      %s262 = sphi 0, %s248
      %s266 = sphi 0, %s266
      %s268 = sphi 0, %s266
      %s269 = sphi 0, %s268
      %s283 = sphi 0, %s269
      %s287 = sphi 0, %s287
      %s289 = sphi 0, %s287
      %s290 = sphi 0, %s289
      %s304 = sphi 0, %s290
      %s308 = sphi 0, %s308
      %s310 = sphi 0, %s308
      %s311 = sphi 0, %s310
      %s325 = sphi 0, %s311
      %s329 = sphi 0, %s329
      %s331 = sphi 0, %s329
      %s332 = sphi 0, %s331
      %s346 = sphi 0, %s332
      %s350 = sphi 0, %s350
      %s352 = sphi 0, %s350
      %s353 = sphi 0, %s352
      %s367 = sphi 0, %s353
      %s371 = sphi 0, %s371
      %s373 = sphi 0, %s371
      %s374 = sphi 0, %s373
      %s388 = sphi 0, %s374
      %s396 = sphi 0, %s398
      %s399 = sphi 0, %s396
      %s400 = sphi 0, %s399
      %s416 = sphi 0, %s400
      %s422 = sphi 0, %s424
      %s425 = sphi 0, %s422
      %s426 = sphi 0, %s425
      %s442 = sphi 0, %s426
    $region4: #{tpu_custom_call.1} parent=1 // loop_header_branch
      %35 = sbr.rel (%p33) target = $region8
    $region5: #{tpu_custom_call.1} parent=1 // loop_body
      %s37 = ssub.s32 %s32, 1
      %s38 = ssub.s32 %s32, 2
      %s45 = sadd.s32 1, %s40
      %p46 = scmp.ge.s32.totalorder %s45, 10
      %s47 = scalar_select %p46, 0, %s45
      %s48 = sadd.s32 1, %s39
      %s49 = scalar_select %p46, %s48, %s39
      %p50 = scmp.ge.s32.totalorder %s49, 1
      %s51 = scalar_select %p50, 0, %s49
      %s52 = ssub.s32 %s39, %s51
      %p53 = scmp.eq.s32.totalorder %s52, 0
      %s55 = sadd.s32 %s54, 1
      %s56 = scalar_select %p53, %s54, %s55
      %p59 = pneg %p53
      %p60 = scmp.eq.s32.totalorder %s32, 9
      %p61 = por %p59, %p60
      %p62 = scmp.ne.s32.totalorder %s54, %s57
      %p63 = scmp.eq.s32.totalorder %s32, 0
      %p64 = por %p62, %p63
      %p65 = scmp.ne.s32.totalorder %s54, %s57
      %p66 = scmp.eq.s32.totalorder %s37, 9
      %p67 = por %p65, %p66
      %p68 = scmp.ne.s32.totalorder %s57, %s58
      %p69 = scmp.eq.s32.totalorder %s37, 0
      %p70 = por %p68, %p69
      %p71 = scmp.ne.s32.totalorder %s57, %s58
      %p72 = scmp.eq.s32.totalorder %s38, 9
      %p73 = por %p71, %p72
      %p75 = scmp.ne.s32.totalorder %s58, %s74
      %p76 = scmp.eq.s32.totalorder %s38, 0
      %p77 = por %p75, %p76
      %s78 = ssub.s32 %s39, %s51
      %p79 = scmp.eq.s32.totalorder %s78, 0
      %s81 = sadd.s32 %s80, 1
      %s82 = scalar_select %p79, %s80, %s81
      %p85 = pneg %p79
      %p86 = scmp.eq.s32.totalorder %s32, 9
      %p87 = por %p85, %p86
      %p88 = scmp.ne.s32.totalorder %s80, %s83
      %p89 = scmp.eq.s32.totalorder %s32, 0
      %p90 = por %p88, %p89
      %p91 = scmp.ne.s32.totalorder %s80, %s83
      %p92 = scmp.eq.s32.totalorder %s37, 9
      %p93 = por %p91, %p92
      %p94 = scmp.ne.s32.totalorder %s83, %s84
      %p95 = scmp.eq.s32.totalorder %s37, 0
      %p96 = por %p94, %p95
      %p97 = scmp.ne.s32.totalorder %s83, %s84
      %p98 = scmp.eq.s32.totalorder %s38, 9
      %p99 = por %p97, %p98
      %p101 = scmp.ne.s32.totalorder %s84, %s100
      %p102 = scmp.eq.s32.totalorder %s38, 0
      %p103 = por %p101, %p102
      %s104 = ssub.s32 %s39, %s51
      %p105 = scmp.eq.s32.totalorder %s104, 0
      %s107 = sadd.s32 %s106, 1
      %s108 = scalar_select %p105, %s106, %s107
      %p111 = pneg %p105
      %p112 = scmp.eq.s32.totalorder %s32, 9
      %p113 = por %p111, %p112
      %p114 = scmp.ne.s32.totalorder %s106, %s109
      %p115 = scmp.eq.s32.totalorder %s32, 0
      %p116 = por %p114, %p115
      %p117 = scmp.ne.s32.totalorder %s106, %s109
      %p118 = scmp.eq.s32.totalorder %s37, 9
      %p119 = por %p117, %p118
      %p120 = scmp.ne.s32.totalorder %s109, %s110
      %p121 = scmp.eq.s32.totalorder %s37, 0
      %p122 = por %p120, %p121
      %p123 = scmp.ne.s32.totalorder %s109, %s110
      %p124 = scmp.eq.s32.totalorder %s38, 9
      %p125 = por %p123, %p124
      %p127 = scmp.ne.s32.totalorder %s110, %s126
      %p128 = scmp.eq.s32.totalorder %s38, 0
      %p129 = por %p127, %p128
      %s130 = ssub.s32 %s39, %s51
      %p131 = scmp.eq.s32.totalorder %s130, 0
      %s133 = sadd.s32 %s132, 1
      %s134 = scalar_select %p131, %s132, %s133
      %p137 = pneg %p131
      %p138 = scmp.eq.s32.totalorder %s32, 9
      %p139 = por %p137, %p138
      %p140 = scmp.ne.s32.totalorder %s132, %s135
      %p141 = scmp.eq.s32.totalorder %s32, 0
      %p142 = por %p140, %p141
      %p143 = scmp.ne.s32.totalorder %s132, %s135
      %p144 = scmp.eq.s32.totalorder %s37, 9
      %p145 = por %p143, %p144
      %p146 = scmp.ne.s32.totalorder %s135, %s136
      %p147 = scmp.eq.s32.totalorder %s37, 0
      %p148 = por %p146, %p147
      %p149 = scmp.ne.s32.totalorder %s135, %s136
      %p150 = scmp.eq.s32.totalorder %s38, 9
      %p151 = por %p149, %p150
      %p153 = scmp.ne.s32.totalorder %s136, %s152
      %p154 = scmp.eq.s32.totalorder %s38, 0
      %p155 = por %p153, %p154
      %s156 = ssub.s32 %s39, %s51
      %p157 = scmp.eq.s32.totalorder %s156, 0
      %s159 = sadd.s32 %s158, 1
      %s160 = scalar_select %p157, %s158, %s159
      %p163 = pneg %p157
      %p164 = scmp.eq.s32.totalorder %s32, 9
      %p165 = por %p163, %p164
      %p166 = scmp.ne.s32.totalorder %s158, %s161
      %p167 = scmp.eq.s32.totalorder %s32, 0
      %p168 = por %p166, %p167
      %p169 = scmp.ne.s32.totalorder %s158, %s161
      %p170 = scmp.eq.s32.totalorder %s37, 9
      %p171 = por %p169, %p170
      %p172 = scmp.ne.s32.totalorder %s161, %s162
      %p173 = scmp.eq.s32.totalorder %s37, 0
      %p174 = por %p172, %p173
      %p175 = scmp.ne.s32.totalorder %s161, %s162
      %p176 = scmp.eq.s32.totalorder %s38, 9
      %p177 = por %p175, %p176
      %p179 = scmp.ne.s32.totalorder %s162, %s178
      %p180 = scmp.eq.s32.totalorder %s38, 0
      %p181 = por %p179, %p180
      %s183 = sadd.s32 %s182, 1
      %p186 = scmp.eq.s32.totalorder %s32, 9
      %p187 = scmp.ne.s32.totalorder %s182, %s184
      %p188 = scmp.eq.s32.totalorder %s32, 0
      %p189 = por %p187, %p188
      %p190 = scmp.ne.s32.totalorder %s182, %s184
      %p191 = scmp.eq.s32.totalorder %s37, 9
      %p192 = por %p190, %p191
      %p193 = scmp.ne.s32.totalorder %s184, %s185
      %p194 = scmp.eq.s32.totalorder %s37, 0
      %p195 = por %p193, %p194
      %p196 = scmp.ne.s32.totalorder %s184, %s185
      %p197 = scmp.eq.s32.totalorder %s38, 9
      %p198 = por %p196, %p197
      %p200 = scmp.ne.s32.totalorder %s185, %s199
      %p201 = scmp.eq.s32.totalorder %s38, 0
      %p202 = por %p200, %p201
      %s204 = sadd.s32 %s203, 1
      %p207 = scmp.eq.s32.totalorder %s32, 9
      %p208 = scmp.ne.s32.totalorder %s203, %s205
      %p209 = scmp.eq.s32.totalorder %s32, 0
      %p210 = por %p208, %p209
      %p211 = scmp.ne.s32.totalorder %s203, %s205
      %p212 = scmp.eq.s32.totalorder %s37, 9
      %p213 = por %p211, %p212
      %p214 = scmp.ne.s32.totalorder %s205, %s206
      %p215 = scmp.eq.s32.totalorder %s37, 0
      %p216 = por %p214, %p215
      %p217 = scmp.ne.s32.totalorder %s205, %s206
      %p218 = scmp.eq.s32.totalorder %s38, 9
      %p219 = por %p217, %p218
      %p221 = scmp.ne.s32.totalorder %s206, %s220
      %p222 = scmp.eq.s32.totalorder %s38, 0
      %p223 = por %p221, %p222
      %s225 = sadd.s32 %s224, 1
      %p228 = scmp.eq.s32.totalorder %s32, 9
      %p229 = scmp.ne.s32.totalorder %s224, %s226
      %p230 = scmp.eq.s32.totalorder %s32, 0
      %p231 = por %p229, %p230
      %p232 = scmp.ne.s32.totalorder %s224, %s226
      %p233 = scmp.eq.s32.totalorder %s37, 9
      %p234 = por %p232, %p233
      %p235 = scmp.ne.s32.totalorder %s226, %s227
      %p236 = scmp.eq.s32.totalorder %s37, 0
      %p237 = por %p235, %p236
      %p238 = scmp.ne.s32.totalorder %s226, %s227
      %p239 = scmp.eq.s32.totalorder %s38, 9
      %p240 = por %p238, %p239
      %p242 = scmp.ne.s32.totalorder %s227, %s241
      %p243 = scmp.eq.s32.totalorder %s38, 0
      %p244 = por %p242, %p243
      %s246 = sadd.s32 %s245, 1
      %p249 = scmp.eq.s32.totalorder %s32, 9
      %p250 = scmp.ne.s32.totalorder %s245, %s247
      %p251 = scmp.eq.s32.totalorder %s32, 0
      %p252 = por %p250, %p251
      %p253 = scmp.ne.s32.totalorder %s245, %s247
      %p254 = scmp.eq.s32.totalorder %s37, 9
      %p255 = por %p253, %p254
      %p256 = scmp.ne.s32.totalorder %s247, %s248
      %p257 = scmp.eq.s32.totalorder %s37, 0
      %p258 = por %p256, %p257
      %p259 = scmp.ne.s32.totalorder %s247, %s248
      %p260 = scmp.eq.s32.totalorder %s38, 9
      %p261 = por %p259, %p260
      %p263 = scmp.ne.s32.totalorder %s248, %s262
      %p264 = scmp.eq.s32.totalorder %s38, 0
      %p265 = por %p263, %p264
      %s267 = sadd.s32 %s266, 1
      %p270 = scmp.eq.s32.totalorder %s32, 9
      %p271 = scmp.ne.s32.totalorder %s266, %s268
      %p272 = scmp.eq.s32.totalorder %s32, 0
      %p273 = por %p271, %p272
      %p274 = scmp.ne.s32.totalorder %s266, %s268
      %p275 = scmp.eq.s32.totalorder %s37, 9
      %p276 = por %p274, %p275
      %p277 = scmp.ne.s32.totalorder %s268, %s269
      %p278 = scmp.eq.s32.totalorder %s37, 0
      %p279 = por %p277, %p278
      %p280 = scmp.ne.s32.totalorder %s268, %s269
      %p281 = scmp.eq.s32.totalorder %s38, 9
      %p282 = por %p280, %p281
      %p284 = scmp.ne.s32.totalorder %s269, %s283
      %p285 = scmp.eq.s32.totalorder %s38, 0
      %p286 = por %p284, %p285
      %s288 = sadd.s32 %s287, 1
      %p291 = scmp.eq.s32.totalorder %s32, 9
      %p292 = scmp.ne.s32.totalorder %s287, %s289
      %p293 = scmp.eq.s32.totalorder %s32, 0
      %p294 = por %p292, %p293
      %p295 = scmp.ne.s32.totalorder %s287, %s289
      %p296 = scmp.eq.s32.totalorder %s37, 9
      %p297 = por %p295, %p296
      %p298 = scmp.ne.s32.totalorder %s289, %s290
      %p299 = scmp.eq.s32.totalorder %s37, 0
      %p300 = por %p298, %p299
      %p301 = scmp.ne.s32.totalorder %s289, %s290
      %p302 = scmp.eq.s32.totalorder %s38, 9
      %p303 = por %p301, %p302
      %p305 = scmp.ne.s32.totalorder %s290, %s304
      %p306 = scmp.eq.s32.totalorder %s38, 0
      %p307 = por %p305, %p306
      %s309 = sadd.s32 %s308, 1
      %p312 = scmp.eq.s32.totalorder %s32, 9
      %p313 = scmp.ne.s32.totalorder %s308, %s310
      %p314 = scmp.eq.s32.totalorder %s32, 0
      %p315 = por %p313, %p314
      %p316 = scmp.ne.s32.totalorder %s308, %s310
      %p317 = scmp.eq.s32.totalorder %s37, 9
      %p318 = por %p316, %p317
      %p319 = scmp.ne.s32.totalorder %s310, %s311
      %p320 = scmp.eq.s32.totalorder %s37, 0
      %p321 = por %p319, %p320
      %p322 = scmp.ne.s32.totalorder %s310, %s311
      %p323 = scmp.eq.s32.totalorder %s38, 9
      %p324 = por %p322, %p323
      %p326 = scmp.ne.s32.totalorder %s311, %s325
      %p327 = scmp.eq.s32.totalorder %s38, 0
      %p328 = por %p326, %p327
      %s330 = sadd.s32 %s329, 1
      %p333 = scmp.eq.s32.totalorder %s32, 9
      %p334 = scmp.ne.s32.totalorder %s329, %s331
      %p335 = scmp.eq.s32.totalorder %s32, 0
      %p336 = por %p334, %p335
      %p337 = scmp.ne.s32.totalorder %s329, %s331
      %p338 = scmp.eq.s32.totalorder %s37, 9
      %p339 = por %p337, %p338
      %p340 = scmp.ne.s32.totalorder %s331, %s332
      %p341 = scmp.eq.s32.totalorder %s37, 0
      %p342 = por %p340, %p341
      %p343 = scmp.ne.s32.totalorder %s331, %s332
      %p344 = scmp.eq.s32.totalorder %s38, 9
      %p345 = por %p343, %p344
      %p347 = scmp.ne.s32.totalorder %s332, %s346
      %p348 = scmp.eq.s32.totalorder %s38, 0
      %p349 = por %p347, %p348
      %s351 = sadd.s32 %s350, 1
      %p354 = scmp.eq.s32.totalorder %s32, 9
      %p355 = scmp.ne.s32.totalorder %s350, %s352
      %p356 = scmp.eq.s32.totalorder %s32, 0
      %p357 = por %p355, %p356
      %p358 = scmp.ne.s32.totalorder %s350, %s352
      %p359 = scmp.eq.s32.totalorder %s37, 9
      %p360 = por %p358, %p359
      %p361 = scmp.ne.s32.totalorder %s352, %s353
      %p362 = scmp.eq.s32.totalorder %s37, 0
      %p363 = por %p361, %p362
      %p364 = scmp.ne.s32.totalorder %s352, %s353
      %p365 = scmp.eq.s32.totalorder %s38, 9
      %p366 = por %p364, %p365
      %p368 = scmp.ne.s32.totalorder %s353, %s367
      %p369 = scmp.eq.s32.totalorder %s38, 0
      %p370 = por %p368, %p369
      %s372 = sadd.s32 %s371, 1
      %p375 = scmp.eq.s32.totalorder %s32, 9
      %p376 = scmp.ne.s32.totalorder %s371, %s373
      %p377 = scmp.eq.s32.totalorder %s32, 0
      %p378 = por %p376, %p377
      %p379 = scmp.ne.s32.totalorder %s371, %s373
      %p380 = scmp.eq.s32.totalorder %s37, 9
      %p381 = por %p379, %p380
      %p382 = scmp.ne.s32.totalorder %s373, %s374
      %p383 = scmp.eq.s32.totalorder %s37, 0
      %p384 = por %p382, %p383
      %p385 = scmp.ne.s32.totalorder %s373, %s374
      %p386 = scmp.eq.s32.totalorder %s38, 9
      %p387 = por %p385, %p386
      %p389 = scmp.ne.s32.totalorder %s374, %s388
      %p390 = scmp.eq.s32.totalorder %s38, 0
      %p391 = por %p389, %p390
      %s392 = ssub.s32 %s40, %s47
      %s393 = ssub.s32 %s39, %s51
      %s394 = sor.u32 %s392, %s393
      %p395 = scmp.eq.s32.totalorder %s394, 0
      %s397 = sadd.s32 %s396, 1
      %s398 = scalar_select %p395, %s396, %s397
      %p401 = pneg %p395
      %p402 = scmp.eq.s32.totalorder %s32, 9
      %p403 = por %p401, %p402
      %p404 = scmp.ne.s32.totalorder %s396, %s399
      %p405 = scmp.eq.s32.totalorder %s32, 0
      %p406 = por %p404, %p405
      %p407 = scmp.ne.s32.totalorder %s396, %s399
      %p408 = scmp.eq.s32.totalorder %s37, 9
      %p409 = por %p407, %p408
      %p410 = scmp.ne.s32.totalorder %s399, %s400
      %p411 = scmp.eq.s32.totalorder %s37, 0
      %p412 = por %p410, %p411
      %p413 = scmp.ne.s32.totalorder %s399, %s400
      %p414 = scmp.eq.s32.totalorder %s38, 9
      %p415 = por %p413, %p414
      %p417 = scmp.ne.s32.totalorder %s400, %s416
      %p418 = scmp.eq.s32.totalorder %s38, 0
      %p419 = por %p417, %p418
      %s420 = ssub.s32 %s39, %s51
      %p421 = scmp.eq.s32.totalorder %s420, 0
      %s423 = sadd.s32 %s422, 1
      %s424 = scalar_select %p421, %s422, %s423
      %p427 = pneg %p421
      %p428 = scmp.eq.s32.totalorder %s32, 9
      %p429 = por %p427, %p428
      %p430 = scmp.ne.s32.totalorder %s422, %s425
      %p431 = scmp.eq.s32.totalorder %s32, 0
      %p432 = por %p430, %p431
      %p433 = scmp.ne.s32.totalorder %s422, %s425
      %p434 = scmp.eq.s32.totalorder %s37, 9
      %p435 = por %p433, %p434
      %p436 = scmp.ne.s32.totalorder %s425, %s426
      %p437 = scmp.eq.s32.totalorder %s37, 0
      %p438 = por %p436, %p437
      %p439 = scmp.ne.s32.totalorder %s425, %s426
      %p440 = scmp.eq.s32.totalorder %s38, 9
      %p441 = por %p439, %p440
      %p443 = scmp.ne.s32.totalorder %s426, %s442
      %p444 = scmp.eq.s32.totalorder %s38, 0
      %p445 = por %p443, %p444
      %p446 = scmp.le.s32.totalorder 1, %s32
      %p447 = scmp.lt.s32.totalorder %s32, 11
      %p448 = pnand %p446, %p447
      %p449 = pneg %p448
      // Predicated region
      $region9: #{tpu_custom_call.1} parent=5 // pred_check
        _
      $region10: #{tpu_custom_call.1} parent=5 // pred_check_branch
        %451 = sbr.rel (%p448) target = $region12
      $region11: #{tpu_custom_call.1} parent=5 // pred_region
        %s452 = ssub.s32 %s32, 1
        // Predicated region
        $region13: #{tpu_custom_call.1} parent=11 // pred_check
          %p453 = pneg %p70
        $region14: #{tpu_custom_call.1} parent=11 // pred_check_branch
          %455 = sbr.rel (%p453) target = $region16
        $region15: #{tpu_custom_call.1} parent=11 // pred_region
          %s456 = smul.u32 2, %s41
          %p457 = scmp.lt.s32.totalorder %s456, 1
          %s458 = scalar_select %p457, %s456, 1
          %s459 = smul.addr %s458, 4
          %s460 = scalar_lea.vmem %s0, %s459
          %s461 = smul.u32 2, %s41
        $region16: #{tpu_custom_call.1} parent=11 // pred_fallthru
          _
        // Predicated region
        $region17: #{tpu_custom_call.1} parent=11 // pred_check
          %p462 = pneg %p96
        $region18: #{tpu_custom_call.1} parent=11 // pred_check_branch
          %464 = sbr.rel (%p462) target = $region20
        $region19: #{tpu_custom_call.1} parent=11 // pred_region
          %s465 = smul.u32 2, %s41
          %p466 = scmp.lt.s32.totalorder %s465, 1
          %s467 = scalar_select %p466, %s465, 1
          %s468 = smul.addr %s467, 8
          %s469 = scalar_lea.vmem %s1, %s468
          %s470 = smul.u32 2, %s41
        $region20: #{tpu_custom_call.1} parent=11 // pred_fallthru
          _
        // Predicated region
        $region21: #{tpu_custom_call.1} parent=11 // pred_check
          %p471 = pneg %p122
        $region22: #{tpu_custom_call.1} parent=11 // pred_check_branch
          %473 = sbr.rel (%p471) target = $region24
        $region23: #{tpu_custom_call.1} parent=11 // pred_region
          %s474 = smul.u32 2, %s41
          %s476 = ssub.s32 2048, 2048
          %477 = vsyncadd [#allocation7], %s476
          %s478 = smul.addr %s474, 16
          %s479 = smul.addr %s478, 64
          %s480 = scalar_lea.hbm %s2, %s479
          %s481 = sshll.u32 [#allocation6], 4
          %s482 = int_to_ptr.vmem [resolvable:$true] %s481
          %487 = dma.hbm_to_vmem [thread:$0]  %s480, 2048, %s482, [#allocation7], 64, 64, 4
        $region24: #{tpu_custom_call.1} parent=11 // pred_fallthru
          _
        // Predicated region
        $region25: #{tpu_custom_call.1} parent=11 // pred_check
          %p488 = pneg %p148
        $region26: #{tpu_custom_call.1} parent=11 // pred_check_branch
          %490 = sbr.rel (%p488) target = $region28
        $region27: #{tpu_custom_call.1} parent=11 // pred_region
          %s491 = smul.u32 2, %s41
          %p492 = scmp.lt.s32.totalorder %s491, 1
          %s493 = scalar_select %p492, %s491, 1
          %s494 = smul.addr %s493, 16
          %s495 = smul.addr %s494, 8
          %s496 = scalar_lea.vmem %s3, %s495
          %s497 = smul.u32 2, %s41
        $region28: #{tpu_custom_call.1} parent=11 // pred_fallthru
          _
        // Predicated region
        $region29: #{tpu_custom_call.1} parent=11 // pred_check
          %p498 = pneg %p174
        $region30: #{tpu_custom_call.1} parent=11 // pred_check_branch
          %500 = sbr.rel (%p498) target = $region32
        $region31: #{tpu_custom_call.1} parent=11 // pred_region
          %s501 = smul.u32 2, %s41
          %s503 = ssub.s32 32, 32
          %504 = vsyncadd [#allocation10], %s503
          %s505 = smul.addr %s501, 16
          %s506 = scalar_lea.hbm %s4, %s505
          %s507 = sshll.u32 [#allocation9], 4
          %s508 = int_to_ptr.vmem [resolvable:$true] %s507
          %513 = dma.hbm_to_vmem [thread:$0]  %s506, 32, %s508, [#allocation10], 16, 16, 1
        $region32: #{tpu_custom_call.1} parent=11 // pred_fallthru
          _
        // Predicated region
        $region33: #{tpu_custom_call.1} parent=11 // pred_check
          %p514 = pneg %p195
        $region34: #{tpu_custom_call.1} parent=11 // pred_check_branch
          %516 = sbr.rel (%p514) target = $region36
        $region35: #{tpu_custom_call.1} parent=11 // pred_region
          %s518 = ssub.s32 16, 16
          %519 = vsyncadd [#allocation10], %s518
          %s521 = sshll.u32 [#allocation11], 4
          %s522 = int_to_ptr.vmem [resolvable:$true] %s521
          %524 = dma.hbm_to_vmem [thread:$0]  %s5, 16, %s522, [#allocation10]
        $region36: #{tpu_custom_call.1} parent=11 // pred_fallthru
          _
        // Predicated region
        $region37: #{tpu_custom_call.1} parent=11 // pred_check
          %p525 = pneg %p216
        $region38: #{tpu_custom_call.1} parent=11 // pred_check_branch
          %527 = sbr.rel (%p525) target = $region40
        $region39: #{tpu_custom_call.1} parent=11 // pred_region
          _
        $region40: #{tpu_custom_call.1} parent=11 // pred_fallthru
          _
        // Predicated region
        $region41: #{tpu_custom_call.1} parent=11 // pred_check
          %p528 = pneg %p237
        $region42: #{tpu_custom_call.1} parent=11 // pred_check_branch
          %530 = sbr.rel (%p528) target = $region44
        $region43: #{tpu_custom_call.1} parent=11 // pred_region
          _
        $region44: #{tpu_custom_call.1} parent=11 // pred_fallthru
          _
        // Predicated region
        $region45: #{tpu_custom_call.1} parent=11 // pred_check
          %p531 = pneg %p258
        $region46: #{tpu_custom_call.1} parent=11 // pred_check_branch
          %533 = sbr.rel (%p531) target = $region48
        $region47: #{tpu_custom_call.1} parent=11 // pred_region
          %s535 = ssub.s32 3072, 3072
          %536 = vsyncadd [#allocation13], %s535
          %s537 = sshll.u32 [#allocation12], 4
          %s538 = int_to_ptr.vmem [resolvable:$true] %s537
          %543 = dma.hbm_to_vmem [thread:$0]  %s8, 3072, %s538, [#allocation13], 192, 192, 12
        $region48: #{tpu_custom_call.1} parent=11 // pred_fallthru
          _
        // Predicated region
        $region49: #{tpu_custom_call.1} parent=11 // pred_check
          %p544 = pneg %p279
        $region50: #{tpu_custom_call.1} parent=11 // pred_check_branch
          %546 = sbr.rel (%p544) target = $region52
        $region51: #{tpu_custom_call.1} parent=11 // pred_region
          _
        $region52: #{tpu_custom_call.1} parent=11 // pred_fallthru
          _
        // Predicated region
        $region53: #{tpu_custom_call.1} parent=11 // pred_check
          %p547 = pneg %p300
        $region54: #{tpu_custom_call.1} parent=11 // pred_check_branch
          %549 = sbr.rel (%p547) target = $region56
        $region55: #{tpu_custom_call.1} parent=11 // pred_region
          _
        $region56: #{tpu_custom_call.1} parent=11 // pred_fallthru
          _
        // Predicated region
        $region57: #{tpu_custom_call.1} parent=11 // pred_check
          %p550 = pneg %p321
        $region58: #{tpu_custom_call.1} parent=11 // pred_check_branch
          %552 = sbr.rel (%p550) target = $region60
        $region59: #{tpu_custom_call.1} parent=11 // pred_region
          _
        $region60: #{tpu_custom_call.1} parent=11 // pred_fallthru
          _
        // Predicated region
        $region61: #{tpu_custom_call.1} parent=11 // pred_check
          %p553 = pneg %p342
        $region62: #{tpu_custom_call.1} parent=11 // pred_check_branch
          %555 = sbr.rel (%p553) target = $region64
        $region63: #{tpu_custom_call.1} parent=11 // pred_region
          _
        $region64: #{tpu_custom_call.1} parent=11 // pred_fallthru
          _
        // Predicated region
        $region65: #{tpu_custom_call.1} parent=11 // pred_check
          %p556 = pneg %p363
        $region66: #{tpu_custom_call.1} parent=11 // pred_check_branch
          %558 = sbr.rel (%p556) target = $region68
        $region67: #{tpu_custom_call.1} parent=11 // pred_region
          %s560 = ssub.s32 1024, 1024
          %561 = vsyncadd [#allocation13], %s560
          %s562 = sshll.u32 [#allocation14], 4
          %s563 = int_to_ptr.vmem [resolvable:$true] %s562
          %568 = dma.hbm_to_vmem [thread:$0]  %s13, 1024, %s563, [#allocation13], 64, 64, 4
        $region68: #{tpu_custom_call.1} parent=11 // pred_fallthru
          _
        // Predicated region
        $region69: #{tpu_custom_call.1} parent=11 // pred_check
          %p569 = pneg %p384
        $region70: #{tpu_custom_call.1} parent=11 // pred_check_branch
          %571 = sbr.rel (%p569) target = $region72
        $region71: #{tpu_custom_call.1} parent=11 // pred_region
          _
        $region72: #{tpu_custom_call.1} parent=11 // pred_fallthru
          _
      $region12: #{tpu_custom_call.1} parent=5 // pred_fallthru
        _
      %p572 = scmp.lt.s32.totalorder %s32, 10
      // Predicated region
      $region73: #{tpu_custom_call.1} parent=5 // pred_check
        %p573 = pneg %p572
      $region74: #{tpu_custom_call.1} parent=5 // pred_check_branch
        %575 = sbr.rel (%p573) target = $region76
      $region75: #{tpu_custom_call.1} parent=5 // pred_region
        _
      $region76: #{tpu_custom_call.1} parent=5 // pred_fallthru
        _
      %p576 = scmp.le.s32.totalorder 1, %s32
      %p577 = scmp.lt.s32.totalorder %s32, 11
      %p578 = pnand %p576, %p577
      %p579 = pneg %p578
      // Predicated region
      $region77: #{tpu_custom_call.1} parent=5 // pred_check
        _
      $region78: #{tpu_custom_call.1} parent=5 // pred_check_branch
        %581 = sbr.rel (%p578) target = $region80
      $region79: #{tpu_custom_call.1} parent=5 // pred_region
        %s582 = ssub.s32 %s32, 1
        // Predicated region
        $region81: #{tpu_custom_call.1} parent=79 // pred_check
          %p583 = pneg %p122
        $region82: #{tpu_custom_call.1} parent=79 // pred_check_branch
          %585 = sbr.rel (%p583) target = $region84
        $region83: #{tpu_custom_call.1} parent=79 // pred_region
          %586 = dma.done [#allocation7], 2048
        $region84: #{tpu_custom_call.1} parent=79 // pred_fallthru
          _
        // Predicated region
        $region85: #{tpu_custom_call.1} parent=79 // pred_check
          %p587 = pneg %p174
        $region86: #{tpu_custom_call.1} parent=79 // pred_check_branch
          %589 = sbr.rel (%p587) target = $region88
        $region87: #{tpu_custom_call.1} parent=79 // pred_region
          %590 = dma.done [#allocation10], 32
        $region88: #{tpu_custom_call.1} parent=79 // pred_fallthru
          _
        // Predicated region
        $region89: #{tpu_custom_call.1} parent=79 // pred_check
          %p591 = pneg %p195
        $region90: #{tpu_custom_call.1} parent=79 // pred_check_branch
          %593 = sbr.rel (%p591) target = $region92
        $region91: #{tpu_custom_call.1} parent=79 // pred_region
          %594 = dma.done [#allocation10], 16
        $region92: #{tpu_custom_call.1} parent=79 // pred_fallthru
          _
        // Predicated region
        $region93: #{tpu_custom_call.1} parent=79 // pred_check
          %p595 = pneg %p258
        $region94: #{tpu_custom_call.1} parent=79 // pred_check_branch
          %597 = sbr.rel (%p595) target = $region96
        $region95: #{tpu_custom_call.1} parent=79 // pred_region
          %598 = dma.done [#allocation13], 3072
        $region96: #{tpu_custom_call.1} parent=79 // pred_fallthru
          _
        // Predicated region
        $region97: #{tpu_custom_call.1} parent=79 // pred_check
          %p599 = pneg %p363
        $region98: #{tpu_custom_call.1} parent=79 // pred_check_branch
          %601 = sbr.rel (%p599) target = $region100
        $region99: #{tpu_custom_call.1} parent=79 // pred_region
          %602 = dma.done [#allocation13], 1024
        $region100: #{tpu_custom_call.1} parent=79 // pred_fallthru
          _
        %s603 = smul.u32 2, %s41
        %p604 = scmp.lt.s32.totalorder %s603, 1
        %s605 = scalar_select %p604, %s603, 1
        %s606 = smul.addr %s605, 4
        %s607 = scalar_lea.vmem %s0, %s606
        %p608 = pneg %p70
        %p609 = pneg %p67
        %s610 = smul.u32 2, %s41
        %p611 = scmp.lt.s32.totalorder %s610, 1
        %s612 = scalar_select %p611, %s610, 1
        %s613 = smul.addr %s612, 8
        %s614 = scalar_lea.vmem %s1, %s613
        %p615 = pneg %p96
        %p616 = pneg %p93
        %p617 = pneg %p122
        %p618 = pneg %p119
        %s619 = smul.u32 2, %s41
        %p620 = scmp.lt.s32.totalorder %s619, 1
        %s621 = scalar_select %p620, %s619, 1
        %s622 = smul.addr %s621, 16
        %s623 = smul.addr %s622, 8
        %s624 = scalar_lea.vmem %s3, %s623
        %p625 = pneg %p148
        %p626 = pneg %p145
        %p627 = pneg %p174
        %p628 = pneg %p171
        %p629 = pneg %p195
        %p630 = pneg %p192
        %p631 = pneg %p216
        %p632 = pneg %p213
        %p633 = pneg %p237
        %p634 = pneg %p234
        %p635 = pneg %p258
        %p636 = pneg %p255
        %p637 = pneg %p279
        %p638 = pneg %p276
        %p639 = pneg %p300
        %p640 = pneg %p297
        %p641 = pneg %p321
        %p642 = pneg %p318
        %p643 = pneg %p342
        %p644 = pneg %p339
        %p645 = pneg %p363
        %p646 = pneg %p360
        %p647 = pneg %p384
        %p648 = pneg %p381
        %p649 = pneg %p412
        %p650 = pneg %p409
        %s651 = sand.u32 %s399, 1
        %s652 = scalar_lea.sflag [#allocation8], %s651
        %s653 = sand.u32 %s399, 1
        %s654 = smul.addr %s653, 8
        %s655 = scalar_lea.vmem [#allocation15], %s654
        %p656 = pneg %p438
        %p657 = pneg %p435
        %s658 = smul.u32 2, %s41
        %p659 = scmp.lt.s32.totalorder %s658, 1
        %s660 = scalar_select %p659, %s658, 1
        %s661 = smul.addr %s660, 4
        %s662 = scalar_lea.vmem %s0, %s661
        %s663 = smul.u32 2, %s41
        %s664 = smul.u32 2, %s41
        %p665 = scmp.lt.s32.totalorder %s664, 1
        %s666 = scalar_select %p665, %s664, 1
        %s667 = smul.addr %s666, 8
        %s668 = scalar_lea.vmem %s1, %s667
        %s669 = smul.u32 2, %s41
        %s670 = smul.u32 2, %s41
        %s671 = smul.u32 2, %s41
        %p672 = scmp.lt.s32.totalorder %s671, 1
        %s673 = scalar_select %p672, %s671, 1
        %s674 = smul.addr %s673, 16
        %s675 = smul.addr %s674, 8
        %s676 = scalar_lea.vmem %s3, %s675
        %s677 = smul.u32 2, %s41
        %s678 = smul.u32 2, %s41
        %s679 = smul.u32 2, %s41
        %s680 = smul.u32 2, %s41
        %p682 = scmp.eq.s32.totalorder %s42, 0
        // Predicated region
        $region101: #{tpu_custom_call.1} parent=79 // pred_check
          %p683 = pneg %p682
        $region102: #{tpu_custom_call.1} parent=79 // pred_check_branch
          %685 = sbr.rel (%p683) target = $region104
        $region103: #{tpu_custom_call.1} parent=79 // pred_region
          %v686 = vld [vmem:[%s668] sm:$0xff]
          %v687 = vld [vmem:[%s668 + $0x8] sm:$0xff]
          %688 = vst [vmem:[#allocation2] sm:$0xff] %v686
          %689 = vst [vmem:[#allocation2 + $0x8] sm:$0xff] %v687
          %v690 = vpack.c.bf16 %v687, %v686
          %691 = vst [vmem:[#allocation3] sm:$0xff] %v690
          %v692 = vld [vmem:[%s662] sm:$0xf]
          %v693 = vld [vmem:[%s662 + $0x4] sm:$0xf]
          %v696 = vunpack.c.l.b16 %v692
          %v697 = vunpack.c.l.b16 %v693
          %v698 = vpack.c.b16 %v697, %v696
          %700 = vst [vmem:[#allocation4] sm:$0xff] %v698
        $region104: #{tpu_custom_call.1} parent=79 // pred_fallthru
          _
        %v701 = vld [vmem:[#allocation4] sm:$0xff]
        %v702 = vld [vmem:[#allocation2] sm:$0xff]
        %v703 = vld [vmem:[#allocation2 + $0x8] sm:$0xff]
        %v704 = vld [vmem:[#allocation3] sm:$0xff]
        %v705 = vld [vmem:[%s7] sm:$0xff]
        %v706 = vld [vmem:[%s7 + $0x8] sm:$0xf]
        %v707 = vld [vmem:[%s7 + $0xc] sm:$0xff]
        %v708 = vld [vmem:[%s7 + $0x14] sm:$0xf]
        %v709 = vld [vmem:[%s7 + $0x18] sm:$0xff]
        %v710 = vld [vmem:[%s7 + $0x20] sm:$0xf]
        %v711 = vld [vmem:[%s7 + $0x24] sm:$0xff]
        %v712 = vld [vmem:[%s7 + $0x2c] sm:$0xf]
        %v713 = vld [vmem:[%s7 + $0x30] sm:$0xff]
        %v714 = vld [vmem:[%s7 + $0x38] sm:$0xf]
        %v715 = vld [vmem:[%s7 + $0x3c] sm:$0xff]
        %v716 = vld [vmem:[%s7 + $0x44] sm:$0xf]
        %v717 = vld [vmem:[%s7 + $0x48] sm:$0xff]
        %v718 = vld [vmem:[%s7 + $0x50] sm:$0xf]
        %v719 = vld [vmem:[%s7 + $0x54] sm:$0xff]
        %v720 = vld [vmem:[%s7 + $0x5c] sm:$0xf]
        %v721 = vld [vmem:[%s7 + $0x60] sm:$0xff]
        %v722 = vld [vmem:[%s7 + $0x68] sm:$0xf]
        %v723 = vld [vmem:[%s7 + $0x6c] sm:$0xff]
        %v724 = vld [vmem:[%s7 + $0x74] sm:$0xf]
        %v725 = vld [vmem:[%s7 + $0x78] sm:$0xff]
        %v726 = vld [vmem:[%s7 + $0x80] sm:$0xf]
        %v727 = vld [vmem:[%s7 + $0x84] sm:$0xff]
        %v728 = vld [vmem:[%s7 + $0x8c] sm:$0xf]
        %v729 = vld [vmem:[%s7 + $0x90] sm:$0xff]
        %v730 = vld [vmem:[%s7 + $0x98] sm:$0xf]
        %v731 = vld [vmem:[%s7 + $0x9c] sm:$0xff]
        %v732 = vld [vmem:[%s7 + $0xa4] sm:$0xf]
        %v733 = vld [vmem:[%s7 + $0xa8] sm:$0xff]
        %v734 = vld [vmem:[%s7 + $0xb0] sm:$0xf]
        %v735 = vld [vmem:[%s7 + $0xb4] sm:$0xff]
        %v736 = vld [vmem:[%s7 + $0xbc] sm:$0xf]
        %v737 = vld [vmem:[%s9] sm:$0x7]
        %v739 = vlaneseq
        %v740 = vshrl.u32 %v739, 7
        %v741 = vsub.s32 0, %v740
        %v742 = vrot.slane %v737, %v741
        %v743 = vlaneseq
        %v744 = vshrl.u32 %v743, 7
        %v745 = vsub.s32 1, %v744
        %v746 = vrot.slane %v737, %v745
        %v747 = vlaneseq
        %v748 = vshrl.u32 %v747, 7
        %v749 = vsub.s32 2, %v748
        %v750 = vrot.slane %v737, %v749
        %v786 = vunpack.c.l.b16 %v705
        %v787 = vunpack.c.h.b16 %v705
        %v788 = vunpack.c.l.b16 %v706
        %v789 = vunpack.c.l.b16 %v707
        %v790 = vunpack.c.h.b16 %v707
        %v791 = vunpack.c.l.b16 %v708
        %v792 = vunpack.c.l.b16 %v709
        %v793 = vunpack.c.h.b16 %v709
        %v794 = vunpack.c.l.b16 %v710
        %v795 = vunpack.c.l.b16 %v711
        %v796 = vunpack.c.h.b16 %v711
        %v797 = vunpack.c.l.b16 %v712
        %v798 = vunpack.c.l.b16 %v713
        %v799 = vunpack.c.h.b16 %v713
        %v800 = vunpack.c.l.b16 %v714
        %v801 = vunpack.c.l.b16 %v715
        %v802 = vunpack.c.h.b16 %v715
        %v803 = vunpack.c.l.b16 %v716
        %v804 = vunpack.c.l.b16 %v717
        %v805 = vunpack.c.h.b16 %v717
        %v806 = vunpack.c.l.b16 %v718
        %v807 = vunpack.c.l.b16 %v719
        %v808 = vunpack.c.h.b16 %v719
        %v809 = vunpack.c.l.b16 %v720
        %v810 = vunpack.c.l.b16 %v721
        %v811 = vunpack.c.h.b16 %v721
        %v812 = vunpack.c.l.b16 %v722
        %v813 = vunpack.c.l.b16 %v723
        %v814 = vunpack.c.h.b16 %v723
        %v815 = vunpack.c.l.b16 %v724
        %v816 = vunpack.c.l.b16 %v725
        %v817 = vunpack.c.h.b16 %v725
        %v818 = vunpack.c.l.b16 %v726
        %v819 = vunpack.c.l.b16 %v727
        %v820 = vunpack.c.h.b16 %v727
        %v821 = vunpack.c.l.b16 %v728
        %v822 = vunpack.c.l.b16 %v729
        %v823 = vunpack.c.h.b16 %v729
        %v824 = vunpack.c.l.b16 %v730
        %v825 = vunpack.c.l.b16 %v731
        %v826 = vunpack.c.h.b16 %v731
        %v827 = vunpack.c.l.b16 %v732
        %v828 = vunpack.c.l.b16 %v733
        %v829 = vunpack.c.h.b16 %v733
        %v830 = vunpack.c.l.b16 %v734
        %v831 = vunpack.c.l.b16 %v735
        %v832 = vunpack.c.h.b16 %v735
        %v833 = vunpack.c.l.b16 %v736
        %v834 = vpack.c.b16 %v789, %v786
        %v835 = vpack.c.b16 %v790, %v787
        %v836 = vpack.c.b16 %v791, %v788
        %v837 = vpack.c.b16 %v795, %v792
        %v838 = vpack.c.b16 %v796, %v793
        %v839 = vpack.c.b16 %v797, %v794
        %v840 = vpack.c.b16 %v801, %v798
        %v841 = vpack.c.b16 %v802, %v799
        %v842 = vpack.c.b16 %v803, %v800
        %v843 = vpack.c.b16 %v807, %v804
        %v844 = vpack.c.b16 %v808, %v805
        %v845 = vpack.c.b16 %v809, %v806
        %v846 = vpack.c.b16 %v813, %v810
        %v847 = vpack.c.b16 %v814, %v811
        %v848 = vpack.c.b16 %v815, %v812
        %v849 = vpack.c.b16 %v819, %v816
        %v850 = vpack.c.b16 %v820, %v817
        %v851 = vpack.c.b16 %v821, %v818
        %v852 = vpack.c.b16 %v825, %v822
        %v853 = vpack.c.b16 %v826, %v823
        %v854 = vpack.c.b16 %v827, %v824
        %v855 = vpack.c.b16 %v831, %v828
        %v856 = vpack.c.b16 %v832, %v829
        %v857 = vpack.c.b16 %v833, %v830
        %882 = vmatprep.subr.bf16.mxu0 %v835
        %883 = vmatpush1.bf16.msra.mxu0 %v834
        %884 = vmatprep.subr.bf16.mxu0 %v838
        %885 = vmatpush1.bf16.msra.mxu0 %v837
        %886 = vmatprep.subr.bf16.mxu0 %v841
        %887 = vmatpush1.bf16.msra.mxu0 %v840
        %888 = vmatprep.subr.bf16.mxu0 %v844
        %889 = vmatpush1.bf16.msra.mxu0 %v843
        %890 = vmatprep.subr.bf16.mxu0 %v847
        %891 = vmatpush1.bf16.msra.mxu0 %v846
        %892 = vmatprep.subr.bf16.mxu0 %v850
        %893 = vmatpush1.bf16.msra.mxu0 %v849
        %894 = vmatprep.subr.bf16.mxu0 %v853
        %895 = vmatpush1.bf16.msra.mxu0 %v852
        %896 = vmatprep.subr.bf16.mxu0 %v856
        %897 = vmatpush1.bf16.msra.mxu0 %v855
        %898 = vmatprep.subr.bf16.mxu0 0
        %899 = vmatpush1.bf16.msra.mxu0 0
        %900 = vmatprep.subr.bf16.mxu0 0
        %901 = vmatpush1.bf16.msra.mxu0 0
        %902 = vmatprep.subr.bf16.mxu0 0
        %903 = vmatpush1.bf16.msra.mxu0 0
        %904 = vmatprep.subr.bf16.mxu0 0
        %905 = vmatpush1.bf16.msra.mxu0 0
        %906 = vmatprep.subr.bf16.mxu0 0
        %907 = vmatpush1.bf16.msra.mxu0 0
        %908 = vmatprep.subr.bf16.mxu0 0
        %909 = vmatpush1.bf16.msra.mxu0 0
        %910 = vmatprep.subr.bf16.mxu0 0
        %911 = vmatpush1.bf16.msra.mxu0 0
        %912 = vmatprep.subr.bf16.mxu0 0
        %913 = vmatpush1.bf16.msra.mxu0 0
        %914 = vmatprep.mubr.bf16.mxu0 0
        %915 = vmatmul.mubr.bf16.gmra.mrb[0].mxu0 %v701
        %v916 = vpop.f32.mrb[0].mxu0
        %v917 = vadd.f32 %v742, %v916
        %v918 = vpop.f32.mrb[0].mxu0
        %v919 = vadd.f32 %v746, %v918
        %v920 = vpop.f32.mrb[0].mxu0
        %v921 = vadd.f32 %v742, %v920
        %v922 = vpop.f32.mrb[0].mxu0
        %v923 = vadd.f32 %v746, %v922
        %924 = vdwg.mxu0
        %925 = vmatprep.subr.bf16.mxu0 0
        %926 = vmatpush1.bf16.msra.mxu0 %v836
        %927 = vmatprep.subr.bf16.mxu0 0
        %928 = vmatpush1.bf16.msra.mxu0 %v839
        %929 = vmatprep.subr.bf16.mxu0 0
        %930 = vmatpush1.bf16.msra.mxu0 %v842
        %931 = vmatprep.subr.bf16.mxu0 0
        %932 = vmatpush1.bf16.msra.mxu0 %v845
        %933 = vmatprep.subr.bf16.mxu0 0
        %934 = vmatpush1.bf16.msra.mxu0 %v848
        %935 = vmatprep.subr.bf16.mxu0 0
        %936 = vmatpush1.bf16.msra.mxu0 %v851
        %937 = vmatprep.subr.bf16.mxu0 0
        %938 = vmatpush1.bf16.msra.mxu0 %v854
        %939 = vmatprep.subr.bf16.mxu0 0
        %940 = vmatpush1.bf16.msra.mxu0 %v857
        %941 = vmatprep.subr.bf16.mxu0 0
        %942 = vmatpush1.bf16.msra.mxu0 0
        %943 = vmatprep.subr.bf16.mxu0 0
        %944 = vmatpush1.bf16.msra.mxu0 0
        %945 = vmatprep.subr.bf16.mxu0 0
        %946 = vmatpush1.bf16.msra.mxu0 0
        %947 = vmatprep.subr.bf16.mxu0 0
        %948 = vmatpush1.bf16.msra.mxu0 0
        %949 = vmatprep.subr.bf16.mxu0 0
        %950 = vmatpush1.bf16.msra.mxu0 0
        %951 = vmatprep.subr.bf16.mxu0 0
        %952 = vmatpush1.bf16.msra.mxu0 0
        %953 = vmatprep.subr.bf16.mxu0 0
        %954 = vmatpush1.bf16.msra.mxu0 0
        %955 = vmatprep.subr.bf16.mxu0 0
        %956 = vmatpush1.bf16.msra.mxu0 0
        %957 = vmatprep.mubr.bf16.mxu0 0
        %958 = vmatmul.mubr.bf16.gmra.mrb[0].mxu0 %v701
        %v959 = vpop.f32.mrb[0].mxu0
        %v960 = vadd.f32 %v750, %v959
        %v961 = vpop.f32.mrb[0].mxu0
        %v962 = vpop.f32.mrb[0].mxu0
        %v963 = vadd.f32 %v750, %v962
        %v964 = vpop.f32.mrb[0].mxu0
        %965 = vdwg.mxu0
        %v966 = vld [vmem:[#allocation12] sm:$0xff]
        %v967 = vld [vmem:[#allocation12 + $0x8] sm:$0xf]
        %v968 = vld [vmem:[#allocation12 + $0xc] sm:$0xff]
        %v969 = vld [vmem:[#allocation12 + $0x14] sm:$0xf]
        %v970 = vld [vmem:[#allocation12 + $0x18] sm:$0xff]
        %v971 = vld [vmem:[#allocation12 + $0x20] sm:$0xf]
        %v972 = vld [vmem:[#allocation12 + $0x24] sm:$0xff]
        %v973 = vld [vmem:[#allocation12 + $0x2c] sm:$0xf]
        %v974 = vld [vmem:[#allocation12 + $0x30] sm:$0xff]
        %v975 = vld [vmem:[#allocation12 + $0x38] sm:$0xf]
        %v976 = vld [vmem:[#allocation12 + $0x3c] sm:$0xff]
        %v977 = vld [vmem:[#allocation12 + $0x44] sm:$0xf]
        %v978 = vld [vmem:[#allocation12 + $0x48] sm:$0xff]
        %v979 = vld [vmem:[#allocation12 + $0x50] sm:$0xf]
        %v980 = vld [vmem:[#allocation12 + $0x54] sm:$0xff]
        %v981 = vld [vmem:[#allocation12 + $0x5c] sm:$0xf]
        %v982 = vld [vmem:[#allocation12 + $0x60] sm:$0xff]
        %v983 = vld [vmem:[#allocation12 + $0x68] sm:$0xf]
        %v984 = vld [vmem:[#allocation12 + $0x6c] sm:$0xff]
        %v985 = vld [vmem:[#allocation12 + $0x74] sm:$0xf]
        %v986 = vld [vmem:[#allocation12 + $0x78] sm:$0xff]
        %v987 = vld [vmem:[#allocation12 + $0x80] sm:$0xf]
        %v988 = vld [vmem:[#allocation12 + $0x84] sm:$0xff]
        %v989 = vld [vmem:[#allocation12 + $0x8c] sm:$0xf]
        %v990 = vld [vmem:[#allocation12 + $0x90] sm:$0xff]
        %v991 = vld [vmem:[#allocation12 + $0x98] sm:$0xf]
        %v992 = vld [vmem:[#allocation12 + $0x9c] sm:$0xff]
        %v993 = vld [vmem:[#allocation12 + $0xa4] sm:$0xf]
        %v994 = vld [vmem:[#allocation12 + $0xa8] sm:$0xff]
        %v995 = vld [vmem:[#allocation12 + $0xb0] sm:$0xf]
        %v996 = vld [vmem:[#allocation12 + $0xb4] sm:$0xff]
        %v997 = vld [vmem:[#allocation12 + $0xbc] sm:$0xf]
        %v998 = vld [vmem:[%s10] sm:$0x7]
        %v1000 = vlaneseq
        %v1001 = vshrl.u32 %v1000, 7
        %v1002 = vsub.s32 0, %v1001
        %v1003 = vrot.slane %v998, %v1002
        %v1004 = vlaneseq
        %v1005 = vshrl.u32 %v1004, 7
        %v1006 = vsub.s32 1, %v1005
        %v1007 = vrot.slane %v998, %v1006
        %v1008 = vlaneseq
        %v1009 = vshrl.u32 %v1008, 7
        %v1010 = vsub.s32 2, %v1009
        %v1011 = vrot.slane %v998, %v1010
        %v1047 = vunpack.c.l.b16 %v966
        %v1048 = vunpack.c.h.b16 %v966
        %v1049 = vunpack.c.l.b16 %v967
        %v1050 = vunpack.c.l.b16 %v968
        %v1051 = vunpack.c.h.b16 %v968
        %v1052 = vunpack.c.l.b16 %v969
        %v1053 = vunpack.c.l.b16 %v970
        %v1054 = vunpack.c.h.b16 %v970
        %v1055 = vunpack.c.l.b16 %v971
        %v1056 = vunpack.c.l.b16 %v972
        %v1057 = vunpack.c.h.b16 %v972
        %v1058 = vunpack.c.l.b16 %v973
        %v1059 = vunpack.c.l.b16 %v974
        %v1060 = vunpack.c.h.b16 %v974
        %v1061 = vunpack.c.l.b16 %v975
        %v1062 = vunpack.c.l.b16 %v976
        %v1063 = vunpack.c.h.b16 %v976
        %v1064 = vunpack.c.l.b16 %v977
        %v1065 = vunpack.c.l.b16 %v978
        %v1066 = vunpack.c.h.b16 %v978
        %v1067 = vunpack.c.l.b16 %v979
        %v1068 = vunpack.c.l.b16 %v980
        %v1069 = vunpack.c.h.b16 %v980
        %v1070 = vunpack.c.l.b16 %v981
        %v1071 = vunpack.c.l.b16 %v982
        %v1072 = vunpack.c.h.b16 %v982
        %v1073 = vunpack.c.l.b16 %v983
        %v1074 = vunpack.c.l.b16 %v984
        %v1075 = vunpack.c.h.b16 %v984
        %v1076 = vunpack.c.l.b16 %v985
        %v1077 = vunpack.c.l.b16 %v986
        %v1078 = vunpack.c.h.b16 %v986
        %v1079 = vunpack.c.l.b16 %v987
        %v1080 = vunpack.c.l.b16 %v988
        %v1081 = vunpack.c.h.b16 %v988
        %v1082 = vunpack.c.l.b16 %v989
        %v1083 = vunpack.c.l.b16 %v990
        %v1084 = vunpack.c.h.b16 %v990
        %v1085 = vunpack.c.l.b16 %v991
        %v1086 = vunpack.c.l.b16 %v992
        %v1087 = vunpack.c.h.b16 %v992
        %v1088 = vunpack.c.l.b16 %v993
        %v1089 = vunpack.c.l.b16 %v994
        %v1090 = vunpack.c.h.b16 %v994
        %v1091 = vunpack.c.l.b16 %v995
        %v1092 = vunpack.c.l.b16 %v996
        %v1093 = vunpack.c.h.b16 %v996
        %v1094 = vunpack.c.l.b16 %v997
        %v1095 = vpack.c.b16 %v1050, %v1047
        %v1096 = vpack.c.b16 %v1051, %v1048
        %v1097 = vpack.c.b16 %v1052, %v1049
        %v1098 = vpack.c.b16 %v1056, %v1053
        %v1099 = vpack.c.b16 %v1057, %v1054
        %v1100 = vpack.c.b16 %v1058, %v1055
        %v1101 = vpack.c.b16 %v1062, %v1059
        %v1102 = vpack.c.b16 %v1063, %v1060
        %v1103 = vpack.c.b16 %v1064, %v1061
        %v1104 = vpack.c.b16 %v1068, %v1065
        %v1105 = vpack.c.b16 %v1069, %v1066
        %v1106 = vpack.c.b16 %v1070, %v1067
        %v1107 = vpack.c.b16 %v1074, %v1071
        %v1108 = vpack.c.b16 %v1075, %v1072
        %v1109 = vpack.c.b16 %v1076, %v1073
        %v1110 = vpack.c.b16 %v1080, %v1077
        %v1111 = vpack.c.b16 %v1081, %v1078
        %v1112 = vpack.c.b16 %v1082, %v1079
        %v1113 = vpack.c.b16 %v1086, %v1083
        %v1114 = vpack.c.b16 %v1087, %v1084
        %v1115 = vpack.c.b16 %v1088, %v1085
        %v1116 = vpack.c.b16 %v1092, %v1089
        %v1117 = vpack.c.b16 %v1093, %v1090
        %v1118 = vpack.c.b16 %v1094, %v1091
        %1143 = vmatprep.subr.bf16.mxu0 %v1096
        %1144 = vmatpush1.bf16.msra.mxu0 %v1095
        %1145 = vmatprep.subr.bf16.mxu0 %v1099
        %1146 = vmatpush1.bf16.msra.mxu0 %v1098
        %1147 = vmatprep.subr.bf16.mxu0 %v1102
        %1148 = vmatpush1.bf16.msra.mxu0 %v1101
        %1149 = vmatprep.subr.bf16.mxu0 %v1105
        %1150 = vmatpush1.bf16.msra.mxu0 %v1104
        %1151 = vmatprep.subr.bf16.mxu0 %v1108
        %1152 = vmatpush1.bf16.msra.mxu0 %v1107
        %1153 = vmatprep.subr.bf16.mxu0 %v1111
        %1154 = vmatpush1.bf16.msra.mxu0 %v1110
        %1155 = vmatprep.subr.bf16.mxu0 %v1114
        %1156 = vmatpush1.bf16.msra.mxu0 %v1113
        %1157 = vmatprep.subr.bf16.mxu0 %v1117
        %1158 = vmatpush1.bf16.msra.mxu0 %v1116
        %1159 = vmatprep.subr.bf16.mxu0 0
        %1160 = vmatpush1.bf16.msra.mxu0 0
        %1161 = vmatprep.subr.bf16.mxu0 0
        %1162 = vmatpush1.bf16.msra.mxu0 0
        %1163 = vmatprep.subr.bf16.mxu0 0
        %1164 = vmatpush1.bf16.msra.mxu0 0
        %1165 = vmatprep.subr.bf16.mxu0 0
        %1166 = vmatpush1.bf16.msra.mxu0 0
        %1167 = vmatprep.subr.bf16.mxu0 0
        %1168 = vmatpush1.bf16.msra.mxu0 0
        %1169 = vmatprep.subr.bf16.mxu0 0
        %1170 = vmatpush1.bf16.msra.mxu0 0
        %1171 = vmatprep.subr.bf16.mxu0 0
        %1172 = vmatpush1.bf16.msra.mxu0 0
        %1173 = vmatprep.subr.bf16.mxu0 0
        %1174 = vmatpush1.bf16.msra.mxu0 0
        %1175 = vmatprep.mubr.bf16.mxu0 0
        %1176 = vmatmul.mubr.bf16.gmra.mrb[0].mxu0 %v704
        %v1177 = vpop.f32.mrb[0].mxu0
        %v1178 = vadd.f32 %v1003, %v1177
        %v1179 = vpop.f32.mrb[0].mxu0
        %v1180 = vadd.f32 %v1007, %v1179
        %v1181 = vpop.f32.mrb[0].mxu0
        %v1182 = vadd.f32 %v1003, %v1181
        %v1183 = vpop.f32.mrb[0].mxu0
        %v1184 = vadd.f32 %v1007, %v1183
        %1185 = vdwg.mxu0
        %1186 = vmatprep.subr.bf16.mxu0 0
        %1187 = vmatpush1.bf16.msra.mxu0 %v1097
        %1188 = vmatprep.subr.bf16.mxu0 0
        %1189 = vmatpush1.bf16.msra.mxu0 %v1100
        %1190 = vmatprep.subr.bf16.mxu0 0
        %1191 = vmatpush1.bf16.msra.mxu0 %v1103
        %1192 = vmatprep.subr.bf16.mxu0 0
        %1193 = vmatpush1.bf16.msra.mxu0 %v1106
        %1194 = vmatprep.subr.bf16.mxu0 0
        %1195 = vmatpush1.bf16.msra.mxu0 %v1109
        %1196 = vmatprep.subr.bf16.mxu0 0
        %1197 = vmatpush1.bf16.msra.mxu0 %v1112
        %1198 = vmatprep.subr.bf16.mxu0 0
        %1199 = vmatpush1.bf16.msra.mxu0 %v1115
        %1200 = vmatprep.subr.bf16.mxu0 0
        %1201 = vmatpush1.bf16.msra.mxu0 %v1118
        %1202 = vmatprep.subr.bf16.mxu0 0
        %1203 = vmatpush1.bf16.msra.mxu0 0
        %1204 = vmatprep.subr.bf16.mxu0 0
        %1205 = vmatpush1.bf16.msra.mxu0 0
        %1206 = vmatprep.subr.bf16.mxu0 0
        %1207 = vmatpush1.bf16.msra.mxu0 0
        %1208 = vmatprep.subr.bf16.mxu0 0
        %1209 = vmatpush1.bf16.msra.mxu0 0
        %1210 = vmatprep.subr.bf16.mxu0 0
        %1211 = vmatpush1.bf16.msra.mxu0 0
        %1212 = vmatprep.subr.bf16.mxu0 0
        %1213 = vmatpush1.bf16.msra.mxu0 0
        %1214 = vmatprep.subr.bf16.mxu0 0
        %1215 = vmatpush1.bf16.msra.mxu0 0
        %1216 = vmatprep.subr.bf16.mxu0 0
        %1217 = vmatpush1.bf16.msra.mxu0 0
        %1218 = vmatprep.mubr.bf16.mxu0 0
        %1219 = vmatmul.mubr.bf16.gmra.mrb[0].mxu0 %v704
        %v1220 = vpop.f32.mrb[0].mxu0
        %v1221 = vadd.f32 %v1011, %v1220
        %v1222 = vpop.f32.mrb[0].mxu0
        %v1223 = vpop.f32.mrb[0].mxu0
        %v1224 = vadd.f32 %v1011, %v1223
        %v1225 = vpop.f32.mrb[0].mxu0
        %1226 = vdwg.mxu0
        %v1227 = vadd.f32 %v917, %v1178
        %v1228 = vadd.f32 %v921, %v1182
        %v1229 = vxor.u32 %v1227, 2147483648
        %v1230 = vxor.u32 %v1228, 2147483648
        %v1231 = vmul.f32 %v1229, 1.442695
        %v1232 = vpow.pop %v1231
        %v1233 = vmul.f32 %v1230, 1.442695
        %v1234 = vpow.pop %v1233
        %v1235 = vadd.f32 %v1232, 1.0
        %v1236 = vadd.f32 %v1234, 1.0
        %v1237 = vrcp.pop %v1235
        %v1238 = vmul.f32 1.0, %v1237
        %v1239 = vrcp.pop %v1236
        %v1240 = vmul.f32 1.0, %v1239
        %v1241 = vadd.f32 %v919, %v1180
        %v1242 = vadd.f32 %v923, %v1184
        %v1243 = vxor.u32 %v1241, 2147483648
        %v1244 = vxor.u32 %v1242, 2147483648
        %v1245 = vmul.f32 %v1243, 1.442695
        %v1246 = vpow.pop %v1245
        %v1247 = vmul.f32 %v1244, 1.442695
        %v1248 = vpow.pop %v1247
        %v1249 = vadd.f32 %v1246, 1.0
        %v1250 = vadd.f32 %v1248, 1.0
        %v1251 = vrcp.pop %v1249
        %v1252 = vmul.f32 1.0, %v1251
        %v1253 = vrcp.pop %v1250
        %v1254 = vmul.f32 1.0, %v1253
        %v1255 = vmul.f32 %v1238, %v1221
        %v1256 = vmul.f32 %v1240, %v1224
        %v1257 = vadd.f32 %v960, %v1255
        %v1258 = vadd.f32 %v963, %v1256
        %v1259 = vtanh.pop %v1257
        %v1260 = vtanh.pop %v1258
        %v1261 = vsub.f32 1.0, %v1252
        %v1262 = vsub.f32 1.0, %v1254
        %v1263 = vmul.f32 %v1261, %v1259
        %v1264 = vmul.f32 %v1262, %v1260
        %v1265 = vmul.f32 %v1252, %v702
        %v1266 = vmul.f32 %v1254, %v703
        %v1267 = vadd.f32 %v1263, %v1265
        %v1268 = vadd.f32 %v1264, %v1266
        %v1269 = vpack.c.bf16 %v1268, %v1267
        %v1270 = vld [vmem:[%s6] sm:$0xf]
        %v1271 = vld [vmem:[%s6 + $0x4] sm:$0xf]
        %v1272 = vld [vmem:[%s6 + $0x8] sm:$0xf]
        %v1273 = vld [vmem:[%s6 + $0xc] sm:$0xf]
        %v1274 = vld [vmem:[%s6 + $0x10] sm:$0xf]
        %v1275 = vld [vmem:[%s6 + $0x14] sm:$0xf]
        %v1276 = vld [vmem:[%s6 + $0x18] sm:$0xf]
        %v1277 = vld [vmem:[%s6 + $0x1c] sm:$0xf]
        %v1278 = vld [vmem:[%s6 + $0x20] sm:$0xf]
        %v1279 = vld [vmem:[%s6 + $0x24] sm:$0xf]
        %v1280 = vld [vmem:[%s6 + $0x28] sm:$0xf]
        %v1281 = vld [vmem:[%s6 + $0x2c] sm:$0xf]
        %v1282 = vld [vmem:[%s6 + $0x30] sm:$0xf]
        %v1283 = vld [vmem:[%s6 + $0x34] sm:$0xf]
        %v1284 = vld [vmem:[%s6 + $0x38] sm:$0xf]
        %v1285 = vld [vmem:[%s6 + $0x3c] sm:$0xf]
        %v1286 = vld [vmem:[#allocation11] sm:$0x1]
        %v1288 = vlaneseq
        %v1289 = vshrl.u32 %v1288, 7
        %v1290 = vsub.s32 0, %v1289
        %v1291 = vrot.slane %v1286, %v1290
        %v1309 = vunpack.c.l.b16 %v1270
        %v1310 = vunpack.c.l.b16 %v1271
        %v1311 = vunpack.c.l.b16 %v1272
        %v1312 = vunpack.c.l.b16 %v1273
        %v1313 = vunpack.c.l.b16 %v1274
        %v1314 = vunpack.c.l.b16 %v1275
        %v1315 = vunpack.c.l.b16 %v1276
        %v1316 = vunpack.c.l.b16 %v1277
        %v1317 = vunpack.c.l.b16 %v1278
        %v1318 = vunpack.c.l.b16 %v1279
        %v1319 = vunpack.c.l.b16 %v1280
        %v1320 = vunpack.c.l.b16 %v1281
        %v1321 = vunpack.c.l.b16 %v1282
        %v1322 = vunpack.c.l.b16 %v1283
        %v1323 = vunpack.c.l.b16 %v1284
        %v1324 = vunpack.c.l.b16 %v1285
        %v1325 = vpack.c.b16 %v1310, %v1309
        %v1326 = vpack.c.b16 %v1312, %v1311
        %v1327 = vpack.c.b16 %v1314, %v1313
        %v1328 = vpack.c.b16 %v1316, %v1315
        %v1329 = vpack.c.b16 %v1318, %v1317
        %v1330 = vpack.c.b16 %v1320, %v1319
        %v1331 = vpack.c.b16 %v1322, %v1321
        %v1332 = vpack.c.b16 %v1324, %v1323
        %1341 = vmatprep.subr.bf16.mxu0 0
        %1342 = vmatpush1.bf16.xpose.msra.mxu0 %v1325
        %1343 = vmatprep.subr.bf16.mxu0 0
        %1344 = vmatpush1.bf16.xpose.msra.mxu0 %v1326
        %1345 = vmatprep.subr.bf16.mxu0 0
        %1346 = vmatpush1.bf16.xpose.msra.mxu0 %v1327
        %1347 = vmatprep.subr.bf16.mxu0 0
        %1348 = vmatpush1.bf16.xpose.msra.mxu0 %v1328
        %1349 = vmatprep.subr.bf16.mxu0 0
        %1350 = vmatpush1.bf16.xpose.msra.mxu0 %v1329
        %1351 = vmatprep.subr.bf16.mxu0 0
        %1352 = vmatpush1.bf16.xpose.msra.mxu0 %v1330
        %1353 = vmatprep.subr.bf16.mxu0 0
        %1354 = vmatpush1.bf16.xpose.msra.mxu0 %v1331
        %1355 = vmatprep.subr.bf16.mxu0 0
        %1356 = vmatpush1.bf16.xpose.msra.mxu0 %v1332
        %1357 = vmatprep.subr.bf16.mxu0 0
        %1358 = vmatpush1.bf16.xpose.msra.mxu0 0
        %1359 = vmatprep.subr.bf16.mxu0 0
        %1360 = vmatpush1.bf16.xpose.msra.mxu0 0
        %1361 = vmatprep.subr.bf16.mxu0 0
        %1362 = vmatpush1.bf16.xpose.msra.mxu0 0
        %1363 = vmatprep.subr.bf16.mxu0 0
        %1364 = vmatpush1.bf16.xpose.msra.mxu0 0
        %1365 = vmatprep.subr.bf16.mxu0 0
        %1366 = vmatpush1.bf16.xpose.msra.mxu0 0
        %1367 = vmatprep.subr.bf16.mxu0 0
        %1368 = vmatpush1.bf16.xpose.msra.mxu0 0
        %1369 = vmatprep.subr.bf16.mxu0 0
        %1370 = vmatpush1.bf16.xpose.msra.mxu0 0
        %1371 = vmatprep.subr.bf16.mxu0 0
        %1372 = vmatpush1.bf16.xpose.msra.mxu0 0
        %1373 = vmatprep.mubr.bf16.mxu0 0
        %1374 = vmatmul.mubr.bf16.gmra.mrb[0].mxu0 %v1269
        %v1375 = vpop.f32.mrb[0].mxu0
        %v1376 = vadd.f32 %v1291, %v1375
        %v1377 = vpop.f32.mrb[0].mxu0
        %v1378 = vpop.f32.mrb[0].mxu0
        %v1379 = vadd.f32 %v1291, %v1378
        %v1380 = vpop.f32.mrb[0].mxu0
        %1381 = vdwg.mxu0
        %1382 = vmax.xlane.f32.xlu0 %v1376
        %v1383 = vpop.xlane.xlu0 %1382
        %1384 = vmax.xlane.f32.xlu0 %v1379
        %v1385 = vpop.xlane.xlu0 %1384
        %v1386 = vsub.f32 %v1376, %v1383
        %v1387 = vsub.f32 %v1379, %v1385
        %v1388 = vmul.f32 %v1386, 1.442695
        %v1389 = vpow.pop %v1388
        %v1390 = vmul.f32 %v1387, 1.442695
        %v1391 = vpow.pop %v1390
        %1392 = vadd.xlane.f32.xlu0 %v1389
        %v1393 = vpop.xlane.xlu0 %1392
        %1394 = vadd.xlane.f32.xlu0 %v1391
        %v1395 = vpop.xlane.xlu0 %1394
        %v1396 = vrcp.pop %v1393
        %v1397 = vmul.f32 1.0, %v1396
        %v1398 = vrcp.pop %v1395
        %v1399 = vmul.f32 1.0, %v1398
        %v1400 = vmul.f32 %v1389, %v1397
        %v1401 = vmul.f32 %v1391, %v1399
        %v1402 = vld [vmem:[#allocation6] sm:$0xf]
        %v1403 = vld [vmem:[#allocation6 + $0x4] sm:$0xf]
        %v1404 = vld [vmem:[#allocation6 + $0x8] sm:$0xf]
        %v1405 = vld [vmem:[#allocation6 + $0xc] sm:$0xf]
        %v1406 = vld [vmem:[#allocation6 + $0x10] sm:$0xf]
        %v1407 = vld [vmem:[#allocation6 + $0x14] sm:$0xf]
        %v1408 = vld [vmem:[#allocation6 + $0x18] sm:$0xf]
        %v1409 = vld [vmem:[#allocation6 + $0x1c] sm:$0xf]
        %v1410 = vld [vmem:[#allocation6 + $0x20] sm:$0xf]
        %v1411 = vld [vmem:[#allocation6 + $0x24] sm:$0xf]
        %v1412 = vld [vmem:[#allocation6 + $0x28] sm:$0xf]
        %v1413 = vld [vmem:[#allocation6 + $0x2c] sm:$0xf]
        %v1414 = vld [vmem:[#allocation6 + $0x30] sm:$0xf]
        %v1415 = vld [vmem:[#allocation6 + $0x34] sm:$0xf]
        %v1416 = vld [vmem:[#allocation6 + $0x38] sm:$0xf]
        %v1417 = vld [vmem:[#allocation6 + $0x3c] sm:$0xf]
        %v1418 = vld [vmem:[#allocation6 + $0x40] sm:$0xf]
        %v1419 = vld [vmem:[#allocation6 + $0x44] sm:$0xf]
        %v1420 = vld [vmem:[#allocation6 + $0x48] sm:$0xf]
        %v1421 = vld [vmem:[#allocation6 + $0x4c] sm:$0xf]
        %v1422 = vld [vmem:[#allocation6 + $0x50] sm:$0xf]
        %v1423 = vld [vmem:[#allocation6 + $0x54] sm:$0xf]
        %v1424 = vld [vmem:[#allocation6 + $0x58] sm:$0xf]
        %v1425 = vld [vmem:[#allocation6 + $0x5c] sm:$0xf]
        %v1426 = vld [vmem:[#allocation6 + $0x60] sm:$0xf]
        %v1427 = vld [vmem:[#allocation6 + $0x64] sm:$0xf]
        %v1428 = vld [vmem:[#allocation6 + $0x68] sm:$0xf]
        %v1429 = vld [vmem:[#allocation6 + $0x6c] sm:$0xf]
        %v1430 = vld [vmem:[#allocation6 + $0x70] sm:$0xf]
        %v1431 = vld [vmem:[#allocation6 + $0x74] sm:$0xf]
        %v1432 = vld [vmem:[#allocation6 + $0x78] sm:$0xf]
        %v1433 = vld [vmem:[#allocation6 + $0x7c] sm:$0xf]
        %v1435 = vunpack.c.l.b16 %v1269
        %v1436 = vunpack.c.h.b16 %v1269
        %v1437 = vpack.c.b16 %v1435, %v1435
        %v1438 = vpack.c.b16 %v1436, %v1436
        %v1441 = vld [vmem:[#allocation9] sm:$0x1]
        %v1442 = vld [vmem:[#allocation9 + $0x1] sm:$0x1]
        %v1445 = vlaneseq
        %v1446 = vshrl.u32 %v1445, 7
        %v1447 = vsub.s32 0, %v1446
        %v1448 = vrot.slane %v1441, %v1447
        %v1449 = vlaneseq
        %v1450 = vshrl.u32 %v1449, 7
        %v1451 = vsub.s32 0, %v1450
        %v1452 = vrot.slane %v1442, %v1451
        %v1471 = vunpack.c.l.b16 %v1402
        %v1472 = vunpack.c.l.b16 %v1403
        %v1473 = vunpack.c.l.b16 %v1404
        %v1474 = vunpack.c.l.b16 %v1405
        %v1475 = vunpack.c.l.b16 %v1406
        %v1476 = vunpack.c.l.b16 %v1407
        %v1477 = vunpack.c.l.b16 %v1408
        %v1478 = vunpack.c.l.b16 %v1409
        %v1479 = vunpack.c.l.b16 %v1410
        %v1480 = vunpack.c.l.b16 %v1411
        %v1481 = vunpack.c.l.b16 %v1412
        %v1482 = vunpack.c.l.b16 %v1413
        %v1483 = vunpack.c.l.b16 %v1414
        %v1484 = vunpack.c.l.b16 %v1415
        %v1485 = vunpack.c.l.b16 %v1416
        %v1486 = vunpack.c.l.b16 %v1417
        %v1487 = vpack.c.b16 %v1472, %v1471
        %v1488 = vpack.c.b16 %v1474, %v1473
        %v1489 = vpack.c.b16 %v1476, %v1475
        %v1490 = vpack.c.b16 %v1478, %v1477
        %v1491 = vpack.c.b16 %v1480, %v1479
        %v1492 = vpack.c.b16 %v1482, %v1481
        %v1493 = vpack.c.b16 %v1484, %v1483
        %v1494 = vpack.c.b16 %v1486, %v1485
        %1503 = vmatprep.subr.bf16.mxu0 0
        %1504 = vmatpush1.bf16.xpose.msra.mxu0 %v1487
        %1505 = vmatprep.subr.bf16.mxu0 0
        %1506 = vmatpush1.bf16.xpose.msra.mxu0 %v1488
        %1507 = vmatprep.subr.bf16.mxu0 0
        %1508 = vmatpush1.bf16.xpose.msra.mxu0 %v1489
        %1509 = vmatprep.subr.bf16.mxu0 0
        %1510 = vmatpush1.bf16.xpose.msra.mxu0 %v1490
        %1511 = vmatprep.subr.bf16.mxu0 0
        %1512 = vmatpush1.bf16.xpose.msra.mxu0 %v1491
        %1513 = vmatprep.subr.bf16.mxu0 0
        %1514 = vmatpush1.bf16.xpose.msra.mxu0 %v1492
        %1515 = vmatprep.subr.bf16.mxu0 0
        %1516 = vmatpush1.bf16.xpose.msra.mxu0 %v1493
        %1517 = vmatprep.subr.bf16.mxu0 0
        %1518 = vmatpush1.bf16.xpose.msra.mxu0 %v1494
        %1519 = vmatprep.subr.bf16.mxu0 0
        %1520 = vmatpush1.bf16.xpose.msra.mxu0 0
        %1521 = vmatprep.subr.bf16.mxu0 0
        %1522 = vmatpush1.bf16.xpose.msra.mxu0 0
        %1523 = vmatprep.subr.bf16.mxu0 0
        %1524 = vmatpush1.bf16.xpose.msra.mxu0 0
        %1525 = vmatprep.subr.bf16.mxu0 0
        %1526 = vmatpush1.bf16.xpose.msra.mxu0 0
        %1527 = vmatprep.subr.bf16.mxu0 0
        %1528 = vmatpush1.bf16.xpose.msra.mxu0 0
        %1529 = vmatprep.subr.bf16.mxu0 0
        %1530 = vmatpush1.bf16.xpose.msra.mxu0 0
        %1531 = vmatprep.subr.bf16.mxu0 0
        %1532 = vmatpush1.bf16.xpose.msra.mxu0 0
        %1533 = vmatprep.subr.bf16.mxu0 0
        %1534 = vmatpush1.bf16.xpose.msra.mxu0 0
        %1535 = vmatprep.mubr.bf16.mxu0 0
        %1536 = vmatmul.mubr.bf16.gmra.mrb[0].mxu0 %v1437
        %v1537 = vpop.f32.mrb[0].mxu0
        %v1538 = vadd.f32 %v1448, %v1537
        %v1539 = vpop.f32.mrb[0].mxu0
        %v1540 = vpop.f32.mrb[0].mxu0
        %v1541 = vpop.f32.mrb[0].mxu0
        %1542 = vdwg.mxu0
        %v1559 = vunpack.c.l.b16 %v1418
        %v1560 = vunpack.c.l.b16 %v1419
        %v1561 = vunpack.c.l.b16 %v1420
        %v1562 = vunpack.c.l.b16 %v1421
        %v1563 = vunpack.c.l.b16 %v1422
        %v1564 = vunpack.c.l.b16 %v1423
        %v1565 = vunpack.c.l.b16 %v1424
        %v1566 = vunpack.c.l.b16 %v1425
        %v1567 = vunpack.c.l.b16 %v1426
        %v1568 = vunpack.c.l.b16 %v1427
        %v1569 = vunpack.c.l.b16 %v1428
        %v1570 = vunpack.c.l.b16 %v1429
        %v1571 = vunpack.c.l.b16 %v1430
        %v1572 = vunpack.c.l.b16 %v1431
        %v1573 = vunpack.c.l.b16 %v1432
        %v1574 = vunpack.c.l.b16 %v1433
        %v1575 = vpack.c.b16 %v1560, %v1559
        %v1576 = vpack.c.b16 %v1562, %v1561
        %v1577 = vpack.c.b16 %v1564, %v1563
        %v1578 = vpack.c.b16 %v1566, %v1565
        %v1579 = vpack.c.b16 %v1568, %v1567
        %v1580 = vpack.c.b16 %v1570, %v1569
        %v1581 = vpack.c.b16 %v1572, %v1571
        %v1582 = vpack.c.b16 %v1574, %v1573
        %1591 = vmatprep.subr.bf16.mxu0 0
        %1592 = vmatpush1.bf16.xpose.msra.mxu0 %v1575
        %1593 = vmatprep.subr.bf16.mxu0 0
        %1594 = vmatpush1.bf16.xpose.msra.mxu0 %v1576
        %1595 = vmatprep.subr.bf16.mxu0 0
        %1596 = vmatpush1.bf16.xpose.msra.mxu0 %v1577
        %1597 = vmatprep.subr.bf16.mxu0 0
        %1598 = vmatpush1.bf16.xpose.msra.mxu0 %v1578
        %1599 = vmatprep.subr.bf16.mxu0 0
        %1600 = vmatpush1.bf16.xpose.msra.mxu0 %v1579
        %1601 = vmatprep.subr.bf16.mxu0 0
        %1602 = vmatpush1.bf16.xpose.msra.mxu0 %v1580
        %1603 = vmatprep.subr.bf16.mxu0 0
        %1604 = vmatpush1.bf16.xpose.msra.mxu0 %v1581
        %1605 = vmatprep.subr.bf16.mxu0 0
        %1606 = vmatpush1.bf16.xpose.msra.mxu0 %v1582
        %1607 = vmatprep.subr.bf16.mxu0 0
        %1608 = vmatpush1.bf16.xpose.msra.mxu0 0
        %1609 = vmatprep.subr.bf16.mxu0 0
        %1610 = vmatpush1.bf16.xpose.msra.mxu0 0
        %1611 = vmatprep.subr.bf16.mxu0 0
        %1612 = vmatpush1.bf16.xpose.msra.mxu0 0
        %1613 = vmatprep.subr.bf16.mxu0 0
        %1614 = vmatpush1.bf16.xpose.msra.mxu0 0
        %1615 = vmatprep.subr.bf16.mxu0 0
        %1616 = vmatpush1.bf16.xpose.msra.mxu0 0
        %1617 = vmatprep.subr.bf16.mxu0 0
        %1618 = vmatpush1.bf16.xpose.msra.mxu0 0
        %1619 = vmatprep.subr.bf16.mxu0 0
        %1620 = vmatpush1.bf16.xpose.msra.mxu0 0
        %1621 = vmatprep.subr.bf16.mxu0 0
        %1622 = vmatpush1.bf16.xpose.msra.mxu0 0
        %1623 = vmatprep.mubr.bf16.mxu0 0
        %1624 = vmatmul.mubr.bf16.gmra.mrb[0].mxu0 %v1438
        %v1625 = vpop.f32.mrb[0].mxu0
        %v1626 = vadd.f32 %v1452, %v1625
        %v1627 = vpop.f32.mrb[0].mxu0
        %v1628 = vpop.f32.mrb[0].mxu0
        %v1629 = vpop.f32.mrb[0].mxu0
        %1630 = vdwg.mxu0
        %1631 = vmax.xlane.f32.xlu0 %v1538
        %v1632 = vpop.xlane.xlu0 %1631
        %1633 = vmax.xlane.f32.xlu0 %v1626
        %v1634 = vpop.xlane.xlu0 %1633
        %v1635 = vsub.f32 %v1538, %v1632
        %v1636 = vsub.f32 %v1626, %v1634
        %v1637 = vmul.f32 %v1635, 1.442695
        %v1638 = vpow.pop %v1637
        %v1639 = vmul.f32 %v1636, 1.442695
        %v1640 = vpow.pop %v1639
        %1641 = vadd.xlane.f32.xlu0 %v1638
        %v1642 = vpop.xlane.xlu0 %1641
        %1643 = vadd.xlane.f32.xlu0 %v1640
        %v1644 = vpop.xlane.xlu0 %1643
        %v1645 = vrcp.pop %v1642
        %v1646 = vmul.f32 1.0, %v1645
        %v1647 = vrcp.pop %v1644
        %v1648 = vmul.f32 1.0, %v1647
        %v1649 = vmul.f32 %v1638, %v1646
        %v1650 = vmul.f32 %v1640, %v1648
        %v1651 = vpack.c.bf16 %v1649, %v1649
        %v1652 = vpack.c.bf16 %v1650, %v1650
        %1653 = vmatprep.subr.bf16.mxu0 0
        %1654 = vmatpush1.bf16.msra.mxu0 %v1487
        %1655 = vmatprep.subr.bf16.mxu0 0
        %1656 = vmatpush1.bf16.msra.mxu0 %v1488
        %1657 = vmatprep.subr.bf16.mxu0 0
        %1658 = vmatpush1.bf16.msra.mxu0 %v1489
        %1659 = vmatprep.subr.bf16.mxu0 0
        %1660 = vmatpush1.bf16.msra.mxu0 %v1490
        %1661 = vmatprep.subr.bf16.mxu0 0
        %1662 = vmatpush1.bf16.msra.mxu0 %v1491
        %1663 = vmatprep.subr.bf16.mxu0 0
        %1664 = vmatpush1.bf16.msra.mxu0 %v1492
        %1665 = vmatprep.subr.bf16.mxu0 0
        %1666 = vmatpush1.bf16.msra.mxu0 %v1493
        %1667 = vmatprep.subr.bf16.mxu0 0
        %1668 = vmatpush1.bf16.msra.mxu0 %v1494
        %1669 = vmatprep.subr.bf16.mxu0 0
        %1670 = vmatpush1.bf16.msra.mxu0 0
        %1671 = vmatprep.subr.bf16.mxu0 0
        %1672 = vmatpush1.bf16.msra.mxu0 0
        %1673 = vmatprep.subr.bf16.mxu0 0
        %1674 = vmatpush1.bf16.msra.mxu0 0
        %1675 = vmatprep.subr.bf16.mxu0 0
        %1676 = vmatpush1.bf16.msra.mxu0 0
        %1677 = vmatprep.subr.bf16.mxu0 0
        %1678 = vmatpush1.bf16.msra.mxu0 0
        %1679 = vmatprep.subr.bf16.mxu0 0
        %1680 = vmatpush1.bf16.msra.mxu0 0
        %1681 = vmatprep.subr.bf16.mxu0 0
        %1682 = vmatpush1.bf16.msra.mxu0 0
        %1683 = vmatprep.subr.bf16.mxu0 0
        %1684 = vmatpush1.bf16.msra.mxu0 0
        %1685 = vmatprep.mubr.bf16.mxu0 0
        %1686 = vmatmul.mubr.bf16.gmra.mrb[0].mxu0 %v1651
        %v1687 = vpop.f32.mrb[0].mxu0
        %v1688 = vadd.f32 0.0, %v1687
        %v1689 = vpop.f32.mrb[0].mxu0
        %v1690 = vpop.f32.mrb[0].mxu0
        %v1691 = vpop.f32.mrb[0].mxu0
        %1692 = vdwg.mxu0
        %1693 = vmatprep.subr.bf16.mxu0 0
        %1694 = vmatpush1.bf16.msra.mxu0 %v1575
        %1695 = vmatprep.subr.bf16.mxu0 0
        %1696 = vmatpush1.bf16.msra.mxu0 %v1576
        %1697 = vmatprep.subr.bf16.mxu0 0
        %1698 = vmatpush1.bf16.msra.mxu0 %v1577
        %1699 = vmatprep.subr.bf16.mxu0 0
        %1700 = vmatpush1.bf16.msra.mxu0 %v1578
        %1701 = vmatprep.subr.bf16.mxu0 0
        %1702 = vmatpush1.bf16.msra.mxu0 %v1579
        %1703 = vmatprep.subr.bf16.mxu0 0
        %1704 = vmatpush1.bf16.msra.mxu0 %v1580
        %1705 = vmatprep.subr.bf16.mxu0 0
        %1706 = vmatpush1.bf16.msra.mxu0 %v1581
        %1707 = vmatprep.subr.bf16.mxu0 0
        %1708 = vmatpush1.bf16.msra.mxu0 %v1582
        %1709 = vmatprep.subr.bf16.mxu0 0
        %1710 = vmatpush1.bf16.msra.mxu0 0
        %1711 = vmatprep.subr.bf16.mxu0 0
        %1712 = vmatpush1.bf16.msra.mxu0 0
        %1713 = vmatprep.subr.bf16.mxu0 0
        %1714 = vmatpush1.bf16.msra.mxu0 0
        %1715 = vmatprep.subr.bf16.mxu0 0
        %1716 = vmatpush1.bf16.msra.mxu0 0
        %1717 = vmatprep.subr.bf16.mxu0 0
        %1718 = vmatpush1.bf16.msra.mxu0 0
        %1719 = vmatprep.subr.bf16.mxu0 0
        %1720 = vmatpush1.bf16.msra.mxu0 0
        %1721 = vmatprep.subr.bf16.mxu0 0
        %1722 = vmatpush1.bf16.msra.mxu0 0
        %1723 = vmatprep.subr.bf16.mxu0 0
        %1724 = vmatpush1.bf16.msra.mxu0 0
        %1725 = vmatprep.mubr.bf16.mxu0 0
        %1726 = vmatmul.mubr.bf16.gmra.mrb[0].mxu0 %v1652
        %v1727 = vpop.f32.mrb[0].mxu0
        %v1728 = vadd.f32 0.0, %v1727
        %v1729 = vpop.f32.mrb[0].mxu0
        %v1730 = vpop.f32.mrb[0].mxu0
        %v1731 = vpop.f32.mrb[0].mxu0
        %1732 = vdwg.mxu0
        %v1733 = vld [vmem:[%s676] sm:$0xff]
        %v1734 = vld [vmem:[%s676 + $0x8] sm:$0xff]
        %v1735 = vld [vmem:[%s676 + $0x10] sm:$0xff]
        %v1736 = vld [vmem:[%s676 + $0x18] sm:$0xff]
        %v1737 = vld [vmem:[%s676 + $0x20] sm:$0xff]
        %v1738 = vld [vmem:[%s676 + $0x28] sm:$0xff]
        %v1739 = vld [vmem:[%s676 + $0x30] sm:$0xff]
        %v1740 = vld [vmem:[%s676 + $0x38] sm:$0xff]
        %v1741 = vld [vmem:[%s676 + $0x40] sm:$0xff]
        %v1742 = vld [vmem:[%s676 + $0x48] sm:$0xff]
        %v1743 = vld [vmem:[%s676 + $0x50] sm:$0xff]
        %v1744 = vld [vmem:[%s676 + $0x58] sm:$0xff]
        %v1745 = vld [vmem:[%s676 + $0x60] sm:$0xff]
        %v1746 = vld [vmem:[%s676 + $0x68] sm:$0xff]
        %v1747 = vld [vmem:[%s676 + $0x70] sm:$0xff]
        %v1748 = vld [vmem:[%s676 + $0x78] sm:$0xff]
        %v1749 = vld [vmem:[%s676 + $0x80] sm:$0xff]
        %v1750 = vld [vmem:[%s676 + $0x88] sm:$0xff]
        %v1751 = vld [vmem:[%s676 + $0x90] sm:$0xff]
        %v1752 = vld [vmem:[%s676 + $0x98] sm:$0xff]
        %v1753 = vld [vmem:[%s676 + $0xa0] sm:$0xff]
        %v1754 = vld [vmem:[%s676 + $0xa8] sm:$0xff]
        %v1755 = vld [vmem:[%s676 + $0xb0] sm:$0xff]
        %v1756 = vld [vmem:[%s676 + $0xb8] sm:$0xff]
        %v1757 = vld [vmem:[%s676 + $0xc0] sm:$0xff]
        %v1758 = vld [vmem:[%s676 + $0xc8] sm:$0xff]
        %v1759 = vld [vmem:[%s676 + $0xd0] sm:$0xff]
        %v1760 = vld [vmem:[%s676 + $0xd8] sm:$0xff]
        %v1761 = vld [vmem:[%s676 + $0xe0] sm:$0xff]
        %v1762 = vld [vmem:[%s676 + $0xe8] sm:$0xff]
        %v1763 = vld [vmem:[%s676 + $0xf0] sm:$0xff]
        %v1764 = vld [vmem:[%s676 + $0xf8] sm:$0xff]
        %v1765 = vlaneseq
        %v1766 = vand.u32 %v1765, 127
        %1767 = vset.pattern.permute.xlu0 0
        %1768 = vperm.xlu0 %1767, %v1733
        %v1769 = vpop.permute.xlu0 %1768
        %1770 = vset.pattern.permute.xlu0 0
        %1771 = vperm.xlu0 %1770, %v1734
        %v1772 = vpop.permute.xlu0 %1771
        %1773 = vset.pattern.permute.xlu0 0
        %1774 = vperm.xlu0 %1773, %v1735
        %v1775 = vpop.permute.xlu0 %1774
        %1776 = vset.pattern.permute.xlu0 0
        %1777 = vperm.xlu0 %1776, %v1736
        %v1778 = vpop.permute.xlu0 %1777
        %1779 = vset.pattern.permute.xlu0 0
        %1780 = vperm.xlu0 %1779, %v1737
        %v1781 = vpop.permute.xlu0 %1780
        %1782 = vset.pattern.permute.xlu0 0
        %1783 = vperm.xlu0 %1782, %v1738
        %v1784 = vpop.permute.xlu0 %1783
        %1785 = vset.pattern.permute.xlu0 0
        %1786 = vperm.xlu0 %1785, %v1739
        %v1787 = vpop.permute.xlu0 %1786
        %1788 = vset.pattern.permute.xlu0 0
        %1789 = vperm.xlu0 %1788, %v1740
        %v1790 = vpop.permute.xlu0 %1789
        %1791 = vset.pattern.permute.xlu0 0
        %1792 = vperm.xlu0 %1791, %v1741
        %v1793 = vpop.permute.xlu0 %1792
        %1794 = vset.pattern.permute.xlu0 0
        %1795 = vperm.xlu0 %1794, %v1742
        %v1796 = vpop.permute.xlu0 %1795
        %1797 = vset.pattern.permute.xlu0 0
        %1798 = vperm.xlu0 %1797, %v1743
        %v1799 = vpop.permute.xlu0 %1798
        %1800 = vset.pattern.permute.xlu0 0
        %1801 = vperm.xlu0 %1800, %v1744
        %v1802 = vpop.permute.xlu0 %1801
        %1803 = vset.pattern.permute.xlu0 0
        %1804 = vperm.xlu0 %1803, %v1745
        %v1805 = vpop.permute.xlu0 %1804
        %1806 = vset.pattern.permute.xlu0 0
        %1807 = vperm.xlu0 %1806, %v1746
        %v1808 = vpop.permute.xlu0 %1807
        %1809 = vset.pattern.permute.xlu0 0
        %1810 = vperm.xlu0 %1809, %v1747
        %v1811 = vpop.permute.xlu0 %1810
        %1812 = vset.pattern.permute.xlu0 0
        %1813 = vperm.xlu0 %1812, %v1748
        %v1814 = vpop.permute.xlu0 %1813
        %1815 = vset.pattern.permute.xlu0 0
        %1816 = vperm.xlu0 %1815, %v1749
        %v1817 = vpop.permute.xlu0 %1816
        %1818 = vset.pattern.permute.xlu0 0
        %1819 = vperm.xlu0 %1818, %v1750
        %v1820 = vpop.permute.xlu0 %1819
        %1821 = vset.pattern.permute.xlu0 0
        %1822 = vperm.xlu0 %1821, %v1751
        %v1823 = vpop.permute.xlu0 %1822
        %1824 = vset.pattern.permute.xlu0 0
        %1825 = vperm.xlu0 %1824, %v1752
        %v1826 = vpop.permute.xlu0 %1825
        %1827 = vset.pattern.permute.xlu0 0
        %1828 = vperm.xlu0 %1827, %v1753
        %v1829 = vpop.permute.xlu0 %1828
        %1830 = vset.pattern.permute.xlu0 0
        %1831 = vperm.xlu0 %1830, %v1754
        %v1832 = vpop.permute.xlu0 %1831
        %1833 = vset.pattern.permute.xlu0 0
        %1834 = vperm.xlu0 %1833, %v1755
        %v1835 = vpop.permute.xlu0 %1834
        %1836 = vset.pattern.permute.xlu0 0
        %1837 = vperm.xlu0 %1836, %v1756
        %v1838 = vpop.permute.xlu0 %1837
        %1839 = vset.pattern.permute.xlu0 0
        %1840 = vperm.xlu0 %1839, %v1757
        %v1841 = vpop.permute.xlu0 %1840
        %1842 = vset.pattern.permute.xlu0 0
        %1843 = vperm.xlu0 %1842, %v1758
        %v1844 = vpop.permute.xlu0 %1843
        %1845 = vset.pattern.permute.xlu0 0
        %1846 = vperm.xlu0 %1845, %v1759
        %v1847 = vpop.permute.xlu0 %1846
        %1848 = vset.pattern.permute.xlu0 0
        %1849 = vperm.xlu0 %1848, %v1760
        %v1850 = vpop.permute.xlu0 %1849
        %1851 = vset.pattern.permute.xlu0 0
        %1852 = vperm.xlu0 %1851, %v1761
        %v1853 = vpop.permute.xlu0 %1852
        %1854 = vset.pattern.permute.xlu0 0
        %1855 = vperm.xlu0 %1854, %v1762
        %v1856 = vpop.permute.xlu0 %1855
        %1857 = vset.pattern.permute.xlu0 0
        %1858 = vperm.xlu0 %1857, %v1763
        %v1859 = vpop.permute.xlu0 %1858
        %1860 = vset.pattern.permute.xlu0 0
        %1861 = vperm.xlu0 %1860, %v1764
        %v1862 = vpop.permute.xlu0 %1861
        %vm1863 = vcmp.eq.s32.totalorder %v1769, %v1766
        %vm1864 = vcmp.eq.s32.totalorder %v1772, %v1766
        %vm1865 = vcmp.eq.s32.totalorder %v1775, %v1766
        %vm1866 = vcmp.eq.s32.totalorder %v1778, %v1766
        %vm1867 = vcmp.eq.s32.totalorder %v1781, %v1766
        %vm1868 = vcmp.eq.s32.totalorder %v1784, %v1766
        %vm1869 = vcmp.eq.s32.totalorder %v1787, %v1766
        %vm1870 = vcmp.eq.s32.totalorder %v1790, %v1766
        %vm1871 = vcmp.eq.s32.totalorder %v1793, %v1766
        %vm1872 = vcmp.eq.s32.totalorder %v1796, %v1766
        %vm1873 = vcmp.eq.s32.totalorder %v1799, %v1766
        %vm1874 = vcmp.eq.s32.totalorder %v1802, %v1766
        %vm1875 = vcmp.eq.s32.totalorder %v1805, %v1766
        %vm1876 = vcmp.eq.s32.totalorder %v1808, %v1766
        %vm1877 = vcmp.eq.s32.totalorder %v1811, %v1766
        %vm1878 = vcmp.eq.s32.totalorder %v1814, %v1766
        %vm1879 = vcmp.eq.s32.totalorder %v1817, %v1766
        %vm1880 = vcmp.eq.s32.totalorder %v1820, %v1766
        %vm1881 = vcmp.eq.s32.totalorder %v1823, %v1766
        %vm1882 = vcmp.eq.s32.totalorder %v1826, %v1766
        %vm1883 = vcmp.eq.s32.totalorder %v1829, %v1766
        %vm1884 = vcmp.eq.s32.totalorder %v1832, %v1766
        %vm1885 = vcmp.eq.s32.totalorder %v1835, %v1766
        %vm1886 = vcmp.eq.s32.totalorder %v1838, %v1766
        %vm1887 = vcmp.eq.s32.totalorder %v1841, %v1766
        %vm1888 = vcmp.eq.s32.totalorder %v1844, %v1766
        %vm1889 = vcmp.eq.s32.totalorder %v1847, %v1766
        %vm1890 = vcmp.eq.s32.totalorder %v1850, %v1766
        %vm1891 = vcmp.eq.s32.totalorder %v1853, %v1766
        %vm1892 = vcmp.eq.s32.totalorder %v1856, %v1766
        %vm1893 = vcmp.eq.s32.totalorder %v1859, %v1766
        %vm1894 = vcmp.eq.s32.totalorder %v1862, %v1766
        %v1895 = vsel %vm1863, 1, 0
        %v1896 = vsel %vm1864, 1, 0
        %v1897 = vsel %vm1865, 1, 0
        %v1898 = vsel %vm1866, 1, 0
        %v1899 = vsel %vm1867, 1, 0
        %v1900 = vsel %vm1868, 1, 0
        %v1901 = vsel %vm1869, 1, 0
        %v1902 = vsel %vm1870, 1, 0
        %v1903 = vsel %vm1871, 1, 0
        %v1904 = vsel %vm1872, 1, 0
        %v1905 = vsel %vm1873, 1, 0
        %v1906 = vsel %vm1874, 1, 0
        %v1907 = vsel %vm1875, 1, 0
        %v1908 = vsel %vm1876, 1, 0
        %v1909 = vsel %vm1877, 1, 0
        %v1910 = vsel %vm1878, 1, 0
        %v1911 = vsel %vm1879, 1, 0
        %v1912 = vsel %vm1880, 1, 0
        %v1913 = vsel %vm1881, 1, 0
        %v1914 = vsel %vm1882, 1, 0
        %v1915 = vsel %vm1883, 1, 0
        %v1916 = vsel %vm1884, 1, 0
        %v1917 = vsel %vm1885, 1, 0
        %v1918 = vsel %vm1886, 1, 0
        %v1919 = vsel %vm1887, 1, 0
        %v1920 = vsel %vm1888, 1, 0
        %v1921 = vsel %vm1889, 1, 0
        %v1922 = vsel %vm1890, 1, 0
        %v1923 = vsel %vm1891, 1, 0
        %v1924 = vsel %vm1892, 1, 0
        %v1925 = vsel %vm1893, 1, 0
        %v1926 = vsel %vm1894, 1, 0
        %v1927 = vcvt.s32.f32 %v1895
        %v1928 = vcvt.s32.f32 %v1896
        %v1929 = vcvt.s32.f32 %v1897
        %v1930 = vcvt.s32.f32 %v1898
        %v1931 = vcvt.s32.f32 %v1899
        %v1932 = vcvt.s32.f32 %v1900
        %v1933 = vcvt.s32.f32 %v1901
        %v1934 = vcvt.s32.f32 %v1902
        %v1935 = vcvt.s32.f32 %v1903
        %v1936 = vcvt.s32.f32 %v1904
        %v1937 = vcvt.s32.f32 %v1905
        %v1938 = vcvt.s32.f32 %v1906
        %v1939 = vcvt.s32.f32 %v1907
        %v1940 = vcvt.s32.f32 %v1908
        %v1941 = vcvt.s32.f32 %v1909
        %v1942 = vcvt.s32.f32 %v1910
        %v1943 = vcvt.s32.f32 %v1911
        %v1944 = vcvt.s32.f32 %v1912
        %v1945 = vcvt.s32.f32 %v1913
        %v1946 = vcvt.s32.f32 %v1914
        %v1947 = vcvt.s32.f32 %v1915
        %v1948 = vcvt.s32.f32 %v1916
        %v1949 = vcvt.s32.f32 %v1917
        %v1950 = vcvt.s32.f32 %v1918
        %v1951 = vcvt.s32.f32 %v1919
        %v1952 = vcvt.s32.f32 %v1920
        %v1953 = vcvt.s32.f32 %v1921
        %v1954 = vcvt.s32.f32 %v1922
        %v1955 = vcvt.s32.f32 %v1923
        %v1956 = vcvt.s32.f32 %v1924
        %v1957 = vcvt.s32.f32 %v1925
        %v1958 = vcvt.s32.f32 %v1926
        %v1959 = vpack.c.bf16 %v1928, %v1927
        %v1960 = vpack.c.bf16 %v1930, %v1929
        %v1961 = vpack.c.bf16 %v1932, %v1931
        %v1962 = vpack.c.bf16 %v1934, %v1933
        %v1963 = vpack.c.bf16 %v1936, %v1935
        %v1964 = vpack.c.bf16 %v1938, %v1937
        %v1965 = vpack.c.bf16 %v1940, %v1939
        %v1966 = vpack.c.bf16 %v1942, %v1941
        %v1967 = vpack.c.bf16 %v1944, %v1943
        %v1968 = vpack.c.bf16 %v1946, %v1945
        %v1969 = vpack.c.bf16 %v1948, %v1947
        %v1970 = vpack.c.bf16 %v1950, %v1949
        %v1971 = vpack.c.bf16 %v1952, %v1951
        %v1972 = vpack.c.bf16 %v1954, %v1953
        %v1973 = vpack.c.bf16 %v1956, %v1955
        %v1974 = vpack.c.bf16 %v1958, %v1957
        %1975 = vmatprep.subr.bf16.mxu0 0
        %1976 = vmatpush1.bf16.msra.mxu0 %v1959
        %1977 = vmatprep.subr.bf16.mxu0 0
        %1978 = vmatpush1.bf16.msra.mxu0 %v1960
        %1979 = vmatprep.subr.bf16.mxu0 0
        %1980 = vmatpush1.bf16.msra.mxu0 %v1961
        %1981 = vmatprep.subr.bf16.mxu0 0
        %1982 = vmatpush1.bf16.msra.mxu0 %v1962
        %1983 = vmatprep.subr.bf16.mxu0 0
        %1984 = vmatpush1.bf16.msra.mxu0 %v1963
        %1985 = vmatprep.subr.bf16.mxu0 0
        %1986 = vmatpush1.bf16.msra.mxu0 %v1964
        %1987 = vmatprep.subr.bf16.mxu0 0
        %1988 = vmatpush1.bf16.msra.mxu0 %v1965
        %1989 = vmatprep.subr.bf16.mxu0 0
        %1990 = vmatpush1.bf16.msra.mxu0 %v1966
        %1991 = vmatprep.subr.bf16.mxu0 0
        %1992 = vmatpush1.bf16.msra.mxu0 0
        %1993 = vmatprep.subr.bf16.mxu0 0
        %1994 = vmatpush1.bf16.msra.mxu0 0
        %1995 = vmatprep.subr.bf16.mxu0 0
        %1996 = vmatpush1.bf16.msra.mxu0 0
        %1997 = vmatprep.subr.bf16.mxu0 0
        %1998 = vmatpush1.bf16.msra.mxu0 0
        %1999 = vmatprep.subr.bf16.mxu0 0
        %2000 = vmatpush1.bf16.msra.mxu0 0
        %2001 = vmatprep.subr.bf16.mxu0 0
        %2002 = vmatpush1.bf16.msra.mxu0 0
        %2003 = vmatprep.subr.bf16.mxu0 0
        %2004 = vmatpush1.bf16.msra.mxu0 0
        %2005 = vmatprep.subr.bf16.mxu0 0
        %2006 = vmatpush1.bf16.msra.mxu0 0
        %2007 = vmatprep.mubr.bf16.mxu0 0
        %2008 = vmatmul.mubr.bf16.gmra.mrb[0].mxu0 %v1651
        %v2009 = vpop.f32.mrb[0].mxu0
        %v2010 = vadd.f32 0.0, %v2009
        %v2011 = vpop.f32.mrb[0].mxu0
        %v2012 = vpop.f32.mrb[0].mxu0
        %v2013 = vpop.f32.mrb[0].mxu0
        %2014 = vdwg.mxu0
        %2015 = vmatprep.subr.bf16.mxu0 0
        %2016 = vmatpush1.bf16.msra.mxu0 %v1967
        %2017 = vmatprep.subr.bf16.mxu0 0
        %2018 = vmatpush1.bf16.msra.mxu0 %v1968
        %2019 = vmatprep.subr.bf16.mxu0 0
        %2020 = vmatpush1.bf16.msra.mxu0 %v1969
        %2021 = vmatprep.subr.bf16.mxu0 0
        %2022 = vmatpush1.bf16.msra.mxu0 %v1970
        %2023 = vmatprep.subr.bf16.mxu0 0
        %2024 = vmatpush1.bf16.msra.mxu0 %v1971
        %2025 = vmatprep.subr.bf16.mxu0 0
        %2026 = vmatpush1.bf16.msra.mxu0 %v1972
        %2027 = vmatprep.subr.bf16.mxu0 0
        %2028 = vmatpush1.bf16.msra.mxu0 %v1973
        %2029 = vmatprep.subr.bf16.mxu0 0
        %2030 = vmatpush1.bf16.msra.mxu0 %v1974
        %2031 = vmatprep.subr.bf16.mxu0 0
        %2032 = vmatpush1.bf16.msra.mxu0 0
        %2033 = vmatprep.subr.bf16.mxu0 0
        %2034 = vmatpush1.bf16.msra.mxu0 0
        %2035 = vmatprep.subr.bf16.mxu0 0
        %2036 = vmatpush1.bf16.msra.mxu0 0
        %2037 = vmatprep.subr.bf16.mxu0 0
        %2038 = vmatpush1.bf16.msra.mxu0 0
        %2039 = vmatprep.subr.bf16.mxu0 0
        %2040 = vmatpush1.bf16.msra.mxu0 0
        %2041 = vmatprep.subr.bf16.mxu0 0
        %2042 = vmatpush1.bf16.msra.mxu0 0
        %2043 = vmatprep.subr.bf16.mxu0 0
        %2044 = vmatpush1.bf16.msra.mxu0 0
        %2045 = vmatprep.subr.bf16.mxu0 0
        %2046 = vmatpush1.bf16.msra.mxu0 0
        %2047 = vmatprep.mubr.bf16.mxu0 0
        %2048 = vmatmul.mubr.bf16.gmra.mrb[0].mxu0 %v1652
        %v2049 = vpop.f32.mrb[0].mxu0
        %v2050 = vadd.f32 0.0, %v2049
        %v2051 = vpop.f32.mrb[0].mxu0
        %v2052 = vpop.f32.mrb[0].mxu0
        %v2053 = vpop.f32.mrb[0].mxu0
        %2054 = vdwg.mxu0
        %v2055 = vld [vmem:[%s11] sm:$0xff]
        %v2056 = vlaneseq
        %v2057 = vshrl.u32 %v2056, 7
        %v2058 = vsub.s32 0, %v2057
        %v2059 = vrot.slane %v2055, %v2058
        %v2060 = vmul.f32 %v1267, %v2059
        %v2061 = vmul.f32 %v1268, %v2059
        %v2062 = vlaneseq
        %v2063 = vshrl.u32 %v2062, 7
        %v2064 = vsub.s32 1, %v2063
        %v2065 = vrot.slane %v2055, %v2064
        %v2066 = vmul.f32 %v1688, %v2065
        %v2067 = vmul.f32 %v1728, %v2065
        %v2068 = vadd.f32 %v2060, %v2066
        %v2069 = vadd.f32 %v2061, %v2067
        %v2070 = vunpack.c.l.bf16 %v701
        %v2071 = vunpack.c.h.bf16 %v701
        %v2072 = vlaneseq
        %v2073 = vshrl.u32 %v2072, 7
        %v2074 = vsub.s32 2, %v2073
        %v2075 = vrot.slane %v2055, %v2074
        %v2076 = vmul.f32 %v2070, %v2075
        %v2077 = vmul.f32 %v2071, %v2075
        %v2078 = vadd.f32 %v2068, %v2076
        %v2079 = vadd.f32 %v2069, %v2077
        %2080 = vadd.xlane.f32.xlu0 %v2078
        %v2081 = vpop.xlane.xlu0 %2080
        %2082 = vadd.xlane.f32.xlu0 %v2079
        %v2083 = vpop.xlane.xlu0 %2082
        %v2084 = vld [vmem:[#allocation5] sm:$0x1]
        %v2086 = vlaneseq
        %v2087 = vshrl.u32 %v2086, 7
        %v2088 = vsub.s32 0, %v2087
        %v2089 = vrot.slane %v2084, %v2088
        %v2091 = vadd.f32 %v2081, %v2089
        %v2092 = vadd.f32 %v2083, %v2089
        %v2093 = vxor.u32 %v2091, 2147483648
        %v2094 = vxor.u32 %v2092, 2147483648
        %v2095 = vmul.f32 %v2093, 1.442695
        %v2096 = vpow.pop %v2095
        %v2097 = vmul.f32 %v2094, 1.442695
        %v2098 = vpow.pop %v2097
        %v2099 = vadd.f32 %v2096, 1.0
        %v2100 = vadd.f32 %v2098, 1.0
        %v2101 = vrcp.pop %v2099
        %v2102 = vmul.f32 1.0, %v2101
        %v2103 = vrcp.pop %v2100
        %v2104 = vmul.f32 1.0, %v2103
        // Predicated region
        $region105: #{tpu_custom_call.1} parent=79 // pred_check
          %p2105 = pneg %p682
        $region106: #{tpu_custom_call.1} parent=79 // pred_check_branch
          %2107 = sbr.rel (%p2105) target = $region108
        $region107: #{tpu_custom_call.1} parent=79 // pred_region
          %v2108 = vpack.c.bf16 %v1728, %v1688
          %v2109 = vld [vmem:[#allocation14] sm:$0xf]
          %v2110 = vld [vmem:[#allocation14 + $0x4] sm:$0xf]
          %v2111 = vld [vmem:[#allocation14 + $0x8] sm:$0xf]
          %v2112 = vld [vmem:[#allocation14 + $0xc] sm:$0xf]
          %v2113 = vld [vmem:[#allocation14 + $0x10] sm:$0xf]
          %v2114 = vld [vmem:[#allocation14 + $0x14] sm:$0xf]
          %v2115 = vld [vmem:[#allocation14 + $0x18] sm:$0xf]
          %v2116 = vld [vmem:[#allocation14 + $0x1c] sm:$0xf]
          %v2117 = vld [vmem:[#allocation14 + $0x20] sm:$0xf]
          %v2118 = vld [vmem:[#allocation14 + $0x24] sm:$0xf]
          %v2119 = vld [vmem:[#allocation14 + $0x28] sm:$0xf]
          %v2120 = vld [vmem:[#allocation14 + $0x2c] sm:$0xf]
          %v2121 = vld [vmem:[#allocation14 + $0x30] sm:$0xf]
          %v2122 = vld [vmem:[#allocation14 + $0x34] sm:$0xf]
          %v2123 = vld [vmem:[#allocation14 + $0x38] sm:$0xf]
          %v2124 = vld [vmem:[#allocation14 + $0x3c] sm:$0xf]
          %v2125 = vld [vmem:[%s14] sm:$0x1]
          %v2127 = vlaneseq
          %v2128 = vshrl.u32 %v2127, 7
          %v2129 = vsub.s32 0, %v2128
          %v2130 = vrot.slane %v2125, %v2129
          %v2148 = vunpack.c.l.b16 %v2109
          %v2149 = vunpack.c.l.b16 %v2110
          %v2150 = vunpack.c.l.b16 %v2111
          %v2151 = vunpack.c.l.b16 %v2112
          %v2152 = vunpack.c.l.b16 %v2113
          %v2153 = vunpack.c.l.b16 %v2114
          %v2154 = vunpack.c.l.b16 %v2115
          %v2155 = vunpack.c.l.b16 %v2116
          %v2156 = vunpack.c.l.b16 %v2117
          %v2157 = vunpack.c.l.b16 %v2118
          %v2158 = vunpack.c.l.b16 %v2119
          %v2159 = vunpack.c.l.b16 %v2120
          %v2160 = vunpack.c.l.b16 %v2121
          %v2161 = vunpack.c.l.b16 %v2122
          %v2162 = vunpack.c.l.b16 %v2123
          %v2163 = vunpack.c.l.b16 %v2124
          %v2164 = vpack.c.b16 %v2149, %v2148
          %v2165 = vpack.c.b16 %v2151, %v2150
          %v2166 = vpack.c.b16 %v2153, %v2152
          %v2167 = vpack.c.b16 %v2155, %v2154
          %v2168 = vpack.c.b16 %v2157, %v2156
          %v2169 = vpack.c.b16 %v2159, %v2158
          %v2170 = vpack.c.b16 %v2161, %v2160
          %v2171 = vpack.c.b16 %v2163, %v2162
          %2180 = vmatprep.subr.bf16.mxu0 0
          %2181 = vmatpush1.bf16.msra.mxu0 %v2164
          %2182 = vmatprep.subr.bf16.mxu0 0
          %2183 = vmatpush1.bf16.msra.mxu0 %v2165
          %2184 = vmatprep.subr.bf16.mxu0 0
          %2185 = vmatpush1.bf16.msra.mxu0 %v2166
          %2186 = vmatprep.subr.bf16.mxu0 0
          %2187 = vmatpush1.bf16.msra.mxu0 %v2167
          %2188 = vmatprep.subr.bf16.mxu0 0
          %2189 = vmatpush1.bf16.msra.mxu0 %v2168
          %2190 = vmatprep.subr.bf16.mxu0 0
          %2191 = vmatpush1.bf16.msra.mxu0 %v2169
          %2192 = vmatprep.subr.bf16.mxu0 0
          %2193 = vmatpush1.bf16.msra.mxu0 %v2170
          %2194 = vmatprep.subr.bf16.mxu0 0
          %2195 = vmatpush1.bf16.msra.mxu0 %v2171
          %2196 = vmatprep.subr.bf16.mxu0 0
          %2197 = vmatpush1.bf16.msra.mxu0 0
          %2198 = vmatprep.subr.bf16.mxu0 0
          %2199 = vmatpush1.bf16.msra.mxu0 0
          %2200 = vmatprep.subr.bf16.mxu0 0
          %2201 = vmatpush1.bf16.msra.mxu0 0
          %2202 = vmatprep.subr.bf16.mxu0 0
          %2203 = vmatpush1.bf16.msra.mxu0 0
          %2204 = vmatprep.subr.bf16.mxu0 0
          %2205 = vmatpush1.bf16.msra.mxu0 0
          %2206 = vmatprep.subr.bf16.mxu0 0
          %2207 = vmatpush1.bf16.msra.mxu0 0
          %2208 = vmatprep.subr.bf16.mxu0 0
          %2209 = vmatpush1.bf16.msra.mxu0 0
          %2210 = vmatprep.subr.bf16.mxu0 0
          %2211 = vmatpush1.bf16.msra.mxu0 0
          %2212 = vmatprep.mubr.bf16.mxu0 0
          %2213 = vmatmul.mubr.bf16.gmra.mrb[0].mxu0 %v2108
          %v2214 = vpop.f32.mrb[0].mxu0
          %v2215 = vadd.f32 %v2130, %v2214
          %v2216 = vpop.f32.mrb[0].mxu0
          %v2217 = vpop.f32.mrb[0].mxu0
          %v2218 = vadd.f32 %v2130, %v2217
          %v2219 = vpop.f32.mrb[0].mxu0
          %2220 = vdwg.mxu0
          %2221 = vst [vmem:[#allocation16] sm:$0xff] %v2215
          %2222 = vst [vmem:[#allocation16 + $0x8] sm:$0xff] %v2218
        $region108: #{tpu_custom_call.1} parent=79 // pred_fallthru
          _
        %v2223 = vsub.f32 1.0, %v2102
        %v2224 = vsub.f32 1.0, %v2104
        %2226 = vset.pattern.permute.xlu0 0
        %2227 = vperm.xlu0 %2226, %v2223
        %v2228 = vpop.permute.xlu0 %2227
        %2231 = vset.pattern.permute.xlu0 0
        %2232 = vperm.xlu0 %2231, %v2224
        %v2233 = vpop.permute.xlu0 %2232
        %v2235 = vmul.f32 %v2228, %v2010
        %v2236 = vmul.f32 %v2233, %v2050
        %2238 = vset.pattern.permute.xlu0 0
        %2239 = vperm.xlu0 %2238, %v2102
        %v2240 = vpop.permute.xlu0 %2239
        %2243 = vset.pattern.permute.xlu0 0
        %2244 = vperm.xlu0 %2243, %v2104
        %v2245 = vpop.permute.xlu0 %2244
        %v2247 = vmul.f32 %v2240, %v1400
        %v2248 = vmul.f32 %v2245, %v1401
        %v2249 = vadd.f32 %v2235, %v2247
        %v2250 = vadd.f32 %v2236, %v2248
        %v2251 = vpack.c.bf16 %v2250, %v2249
        %v2253 = vunpack.c.l.b16 %v2251
        %v2254 = vunpack.c.h.b16 %v2251
        %v2255 = vpack.c.b16 %v2253, %v2253
        %v2256 = vpack.c.b16 %v2254, %v2254
        %2259 = vst [vmem:[%s655] sm:$0xf] %v2255
        %2260 = vst [vmem:[%s655 + $0x4] sm:$0xf] %v2256
        %2261 = vmax.xlane.f32.xlu0 %v2249
        %v2262 = vpop.xlane.xlu0 %2261
        %2263 = vmax.xlane.f32.xlu0 %v2250
        %v2264 = vpop.xlane.xlu0 %2263
        %vm2265 = vcmp.eq.f32.partialorder %v2249, %v2262
        %vm2266 = vcmp.eq.f32.partialorder %v2250, %v2264
        %v2267 = vsel %vm2265, %v1766, 128
        %v2268 = vsel %vm2266, %v1766, 128
        %v2269 = vand.u32 %v2267, 65535
        %v2270 = vshra.s32 %v2267, 16
        %v2271 = vcvt.s32.f32 %v2269
        %v2272 = vcvt.s32.f32 %v2270
        %2273 = vmin.xlane.f32.xlu0 %v2272
        %v2274 = vpop.xlane.xlu0 %2273
        %vm2275 = vcmp.eq.f32.partialorder %v2272, %v2274
        %v2276 = vsel %vm2275, %v2271, inf
        %2277 = vmin.xlane.f32.xlu0 %v2276
        %v2278 = vpop.xlane.xlu0 %2277
        %v2279 = vcvt.f32.s32 %v2278
        %v2280 = vcvt.f32.s32 %v2274
        %v2281 = vshll.u32 %v2280, 16
        %v2282 = vadd.s32 %v2281, %v2279
        %v2283 = vand.u32 %v2268, 65535
        %v2284 = vshra.s32 %v2268, 16
        %v2285 = vcvt.s32.f32 %v2283
        %v2286 = vcvt.s32.f32 %v2284
        %2287 = vmin.xlane.f32.xlu0 %v2286
        %v2288 = vpop.xlane.xlu0 %2287
        %vm2289 = vcmp.eq.f32.partialorder %v2286, %v2288
        %v2290 = vsel %vm2289, %v2285, inf
        %2291 = vmin.xlane.f32.xlu0 %v2290
        %v2292 = vpop.xlane.xlu0 %2291
        %v2293 = vcvt.f32.s32 %v2292
        %v2294 = vcvt.f32.s32 %v2288
        %v2295 = vshll.u32 %v2294, 16
        %v2296 = vadd.s32 %v2295, %v2293
        %vm2297 = vcmp.eq.s32.totalorder %v1766, %v2282
        %vm2298 = vcmp.eq.s32.totalorder %v1766, %v2296
        %v2299 = vsel %vm2297, 1, 0
        %v2300 = vsel %vm2298, 1, 0
        %v2301 = vcvt.s32.f32 %v2299
        %v2302 = vcvt.s32.f32 %v2300
        %v2303 = vpack.c.bf16 %v2302, %v2301
        %v2304 = vld [vmem:[%s6] sm:$0xf]
        %v2305 = vld [vmem:[%s6 + $0x4] sm:$0xf]
        %v2306 = vld [vmem:[%s6 + $0x8] sm:$0xf]
        %v2307 = vld [vmem:[%s6 + $0xc] sm:$0xf]
        %v2308 = vld [vmem:[%s6 + $0x10] sm:$0xf]
        %v2309 = vld [vmem:[%s6 + $0x14] sm:$0xf]
        %v2310 = vld [vmem:[%s6 + $0x18] sm:$0xf]
        %v2311 = vld [vmem:[%s6 + $0x1c] sm:$0xf]
        %v2312 = vld [vmem:[%s6 + $0x20] sm:$0xf]
        %v2313 = vld [vmem:[%s6 + $0x24] sm:$0xf]
        %v2314 = vld [vmem:[%s6 + $0x28] sm:$0xf]
        %v2315 = vld [vmem:[%s6 + $0x2c] sm:$0xf]
        %v2316 = vld [vmem:[%s6 + $0x30] sm:$0xf]
        %v2317 = vld [vmem:[%s6 + $0x34] sm:$0xf]
        %v2318 = vld [vmem:[%s6 + $0x38] sm:$0xf]
        %v2319 = vld [vmem:[%s6 + $0x3c] sm:$0xf]
        %v2336 = vunpack.c.l.b16 %v2304
        %v2337 = vunpack.c.l.b16 %v2305
        %v2338 = vunpack.c.l.b16 %v2306
        %v2339 = vunpack.c.l.b16 %v2307
        %v2340 = vunpack.c.l.b16 %v2308
        %v2341 = vunpack.c.l.b16 %v2309
        %v2342 = vunpack.c.l.b16 %v2310
        %v2343 = vunpack.c.l.b16 %v2311
        %v2344 = vunpack.c.l.b16 %v2312
        %v2345 = vunpack.c.l.b16 %v2313
        %v2346 = vunpack.c.l.b16 %v2314
        %v2347 = vunpack.c.l.b16 %v2315
        %v2348 = vunpack.c.l.b16 %v2316
        %v2349 = vunpack.c.l.b16 %v2317
        %v2350 = vunpack.c.l.b16 %v2318
        %v2351 = vunpack.c.l.b16 %v2319
        %v2352 = vpack.c.b16 %v2337, %v2336
        %v2353 = vpack.c.b16 %v2339, %v2338
        %v2354 = vpack.c.b16 %v2341, %v2340
        %v2355 = vpack.c.b16 %v2343, %v2342
        %v2356 = vpack.c.b16 %v2345, %v2344
        %v2357 = vpack.c.b16 %v2347, %v2346
        %v2358 = vpack.c.b16 %v2349, %v2348
        %v2359 = vpack.c.b16 %v2351, %v2350
        %2368 = vmatprep.subr.bf16.mxu0 0
        %2369 = vmatpush1.bf16.msra.mxu0 %v2352
        %2370 = vmatprep.subr.bf16.mxu0 0
        %2371 = vmatpush1.bf16.msra.mxu0 %v2353
        %2372 = vmatprep.subr.bf16.mxu0 0
        %2373 = vmatpush1.bf16.msra.mxu0 %v2354
        %2374 = vmatprep.subr.bf16.mxu0 0
        %2375 = vmatpush1.bf16.msra.mxu0 %v2355
        %2376 = vmatprep.subr.bf16.mxu0 0
        %2377 = vmatpush1.bf16.msra.mxu0 %v2356
        %2378 = vmatprep.subr.bf16.mxu0 0
        %2379 = vmatpush1.bf16.msra.mxu0 %v2357
        %2380 = vmatprep.subr.bf16.mxu0 0
        %2381 = vmatpush1.bf16.msra.mxu0 %v2358
        %2382 = vmatprep.subr.bf16.mxu0 0
        %2383 = vmatpush1.bf16.msra.mxu0 %v2359
        %2384 = vmatprep.subr.bf16.mxu0 0
        %2385 = vmatpush1.bf16.msra.mxu0 0
        %2386 = vmatprep.subr.bf16.mxu0 0
        %2387 = vmatpush1.bf16.msra.mxu0 0
        %2388 = vmatprep.subr.bf16.mxu0 0
        %2389 = vmatpush1.bf16.msra.mxu0 0
        %2390 = vmatprep.subr.bf16.mxu0 0
        %2391 = vmatpush1.bf16.msra.mxu0 0
        %2392 = vmatprep.subr.bf16.mxu0 0
        %2393 = vmatpush1.bf16.msra.mxu0 0
        %2394 = vmatprep.subr.bf16.mxu0 0
        %2395 = vmatpush1.bf16.msra.mxu0 0
        %2396 = vmatprep.subr.bf16.mxu0 0
        %2397 = vmatpush1.bf16.msra.mxu0 0
        %2398 = vmatprep.subr.bf16.mxu0 0
        %2399 = vmatpush1.bf16.msra.mxu0 0
        %2400 = vmatprep.mubr.bf16.mxu0 0
        %2401 = vmatmul.mubr.bf16.gmra.mrb[0].mxu0 %v2303
        %v2402 = vpop.f32.mrb[0].mxu0
        %v2403 = vadd.f32 0.0, %v2402
        %v2404 = vpop.f32.mrb[0].mxu0
        %v2405 = vpop.f32.mrb[0].mxu0
        %v2406 = vadd.f32 0.0, %v2405
        %v2407 = vpop.f32.mrb[0].mxu0
        %2408 = vdwg.mxu0
        %v2409 = vpack.c.bf16 %v2406, %v2403
        %2410 = vst [vmem:[#allocation4] sm:$0xff] %v2409
        %2411 = vst [vmem:[#allocation2] sm:$0xff] %v1267
        %2412 = vst [vmem:[#allocation2 + $0x8] sm:$0xff] %v1268
        %2413 = vst [vmem:[#allocation3] sm:$0xff] %v1269
        %s2414 = sand.u32 %s399, 1
        %s2415 = scalar_lea.sflag [#allocation8], %s2414
        %s2416 = sand.u32 %s399, 1
        %s2417 = smul.addr %s2416, 8
        %s2418 = scalar_lea.vmem [#allocation15], %s2417
        // Predicated region
        $region109: #{tpu_custom_call.1} parent=79 // pred_check
          %p2419 = pneg %p409
        $region110: #{tpu_custom_call.1} parent=79 // pred_check_branch
          %2421 = sbr.rel (%p2419) target = $region112
        $region111: #{tpu_custom_call.1} parent=79 // pred_region
          %s2422 = smul.u32 2, %s41
          %s2424 = ssub.s32 128, 128
          %2425 = vsyncadd %s2415, %s2424
          %s2426 = smul.addr %s42, 2
          %s2427 = sadd.s32 %s2422, %s2426
          %s2428 = smul.addr %s2427, 64
          %s2429 = scalar_lea.hbm %s15, %s2428
          %s2430 = sshll.u32 %s2418, 4
          %s2431 = int_to_ptr.vmem [resolvable:$true] %s2430
          %2436 = dma.vmem_to_hbm [thread:$0]  %s2431, 128, %s2429, %s2415, 64, 64, 4
        $region112: #{tpu_custom_call.1} parent=79 // pred_fallthru
          _
        // Predicated region
        $region113: #{tpu_custom_call.1} parent=79 // pred_check
          %p2437 = pneg %p435
        $region114: #{tpu_custom_call.1} parent=79 // pred_check_branch
          %2439 = sbr.rel (%p2437) target = $region116
        $region115: #{tpu_custom_call.1} parent=79 // pred_region
          %s2440 = smul.u32 2, %s41
          %s2442 = ssub.s32 256, 256
          %2443 = vsyncadd [#allocation17], %s2442
          %s2444 = smul.addr %s2440, 128
          %s2445 = scalar_lea.hbm %s16, %s2444
          %s2446 = sshll.u32 [#allocation16], 4
          %s2447 = int_to_ptr.vmem [resolvable:$true] %s2446
          %2452 = dma.vmem_to_hbm [thread:$0]  %s2447, 256, %s2445, [#allocation17], 128, 128, 8
        $region116: #{tpu_custom_call.1} parent=79 // pred_fallthru
          _
        // Predicated region
        $region117: #{tpu_custom_call.1} parent=79 // pred_check
          %p2453 = pneg %p435
        $region118: #{tpu_custom_call.1} parent=79 // pred_check_branch
          %2455 = sbr.rel (%p2453) target = $region120
        $region119: #{tpu_custom_call.1} parent=79 // pred_region
          %2456 = dma.done [#allocation17], 256
        $region120: #{tpu_custom_call.1} parent=79 // pred_fallthru
          _
      $region80: #{tpu_custom_call.1} parent=5 // pred_fallthru
        _
      %p2457 = scmp.le.s32.totalorder 2, %s32
      // Predicated region
      $region121: #{tpu_custom_call.1} parent=5 // pred_check
        %p2458 = pneg %p2457
      $region122: #{tpu_custom_call.1} parent=5 // pred_check_branch
        %2460 = sbr.rel (%p2458) target = $region124
      $region123: #{tpu_custom_call.1} parent=5 // pred_region
        %s2461 = ssub.s32 %s32, 2
        // Predicated region
        $region125: #{tpu_custom_call.1} parent=123 // pred_check
          %p2462 = pneg %p415
        $region126: #{tpu_custom_call.1} parent=123 // pred_check_branch
          %2464 = sbr.rel (%p2462) target = $region128
        $region127: #{tpu_custom_call.1} parent=123 // pred_region
          %s2465 = sand.u32 %s400, 1
          %s2466 = scalar_lea.sflag [#allocation8], %s2465
          %s2467 = sand.u32 %s400, 1
          %s2468 = smul.addr %s2467, 8
          %s2469 = scalar_lea.vmem [#allocation15], %s2468
          %2470 = dma.done %s2466, 128
        $region128: #{tpu_custom_call.1} parent=123 // pred_fallthru
          _
      $region124: #{tpu_custom_call.1} parent=5 // pred_fallthru
        _
    $region6: #{tpu_custom_call.1} parent=1 // loop_footer
      %s36 = sadd.s32 1, %s32
    $region7: #{tpu_custom_call.1} parent=1 // loop_footer_branch
      %31 = sbr.rel target = $region3
    $region8: #{tpu_custom_call.1} parent=1 // loop_exit
      _
    %2471 = vsyncpa [#allocation7], 1
    %s2472 = scalar_lea.sflag [#allocation7], 1
    %2473 = vsyncpa %s2472, 1
    %2474 = vsyncpa [#allocation10], 1
    %2475 = vsyncpa [#allocation13], 1
    %2476 = vsyncpa [#allocation8], 1
    %s2477 = scalar_lea.sflag [#allocation8], 1
    %2478 = vsyncpa %s2477, 1
    %2479 = vsyncpa [#allocation17], 1

</llo_original>
